<compile_context>
chip_gen: v7x
topology: tpu7x:2x2x1
jax: 0.10.0
libtpu: 0.0.40
codegen_flags: <defaults>
</compile_context>

<pallas_src>
import jax
import jax.numpy as jnp
from jax.experimental import pallas as pl
from jax.experimental.pallas import tpu as pltpu


def upsample_conv_kernel(wc_ref, b_ref, x_ref, o_ref):
    """Phase-collapsed 3x3 conv over the original-resolution input.

    wc_ref: (16, Cin, Cout) f32 VMEM  - collapsed weights, tap-major
            tap = ((py*2 + px)*2 + ky)*2 + kx
    b_ref : (1, Cout)        f32 VMEM  - bias
    x_ref : (1, H0+2, W0+2, Cin) VMEM  - zero-padded ORIGINAL input (NHWC)
    o_ref : (1, 2, 2, TR, W0, Cout)    - output row tile, phase-separated
    """
    tr = o_ref.shape[3]
    w0 = o_ref.shape[4]
    cin = x_ref.shape[3]
    cout = o_ref.shape[5]

    t = pl.program_id(1)
    row_start = pl.multiple_of(t * tr, tr)

    # One dynamic load of the halo'd row band; everything after is static.
    band = x_ref[0, pl.ds(row_start, tr + 2), :, :]          # (TR+2, W0+2, Cin)

    # 9 shifted slabs, built once and reused by all 4 output phases.
    slabs = [[band[oy:oy + tr, ox:ox + w0, :].reshape(tr * w0, cin)
              for ox in range(3)] for oy in range(3)]

    bias = b_ref[...]                                         # (1, Cout)

    for py in range(2):
        for px in range(2):
            acc = jnp.zeros((tr * w0, cout), jnp.float32)
            for ky in range(2):
                for kx in range(2):
                    tap = ((py * 2 + px) * 2 + ky) * 2 + kx
                    acc = acc + jnp.dot(
                        slabs[py + ky][px + kx], wc_ref[tap],
                        preferred_element_type=jnp.float32)
            o_ref[0, py, px] = (acc + bias).reshape(tr, w0, cout).astype(o_ref.dtype)


def _collapse_weights(weight_oihw):
    """(Cout, Cin, 3, 3) -> (16, Cin, Cout) phase-collapsed 2x2 tap sets."""
    w = weight_oihw.astype(jnp.float32)
    # Row collapse per output-row phase py: [py, co, ci, ky, dx]  (2, Cout, Cin, 2, 3)
    wr = jnp.stack([
        jnp.stack([w[:, :, 0, :], w[:, :, 1, :] + w[:, :, 2, :]], axis=2),   # py = 0
        jnp.stack([w[:, :, 0, :] + w[:, :, 1, :], w[:, :, 2, :]], axis=2),   # py = 1
    ], axis=0)
    # Column collapse per output-col phase px: [py, px, co, ci, ky, kx]
    wc = jnp.stack([
        jnp.stack([wr[..., 0], wr[..., 1] + wr[..., 2]], axis=-1),           # px = 0
        jnp.stack([wr[..., 0] + wr[..., 1], wr[..., 2]], axis=-1),           # px = 1
    ], axis=1)
    # -> [py, px, ky, kx, ci, co] -> (16, Cin, Cout)
    cout, cin = w.shape[0], w.shape[1]
    return jnp.transpose(wc, (0, 1, 4, 5, 3, 2)).reshape(16, cin, cout)


def upsample_forward(x_nchw, weight_oihw, bias, *, row_tile=8):
    """Equivalent of UpSample.forward: nearest 2x upsample then Conv2d(C, C, 3, pad=1)."""
    n, c, h0, w0 = x_nchw.shape
    cout, cin, kh, kw = weight_oihw.shape
    assert (cin, kh, kw) == (c, 3, 3)

    # Channel-last, pad the ORIGINAL-resolution input by 1 (not the upsampled one).
    x_nhwc = jnp.transpose(x_nchw, (0, 2, 3, 1))
    xp = jnp.pad(x_nhwc, ((0, 0), (1, 1), (1, 1), (0, 0)))

    wc = _collapse_weights(weight_oihw)                       # (16, Cin, Cout) VMEM
    bias2d = bias.reshape(1, cout).astype(jnp.float32)        # (1, Cout)     VMEM

    tr = row_tile if (h0 % row_tile == 0) else h0
    grid = (n, h0 // tr)

    # NOTE: the whole padded source image stays VMEM-resident per batch element
    # (fetched once per n, reused across row tiles).  For very large images on
    # v7x (64 MiB VMEM) switch the x input to memory_space=pl.ANY with a manual
    # halo DMA per row tile.
    out_ph = pl.pallas_call(
        upsample_conv_kernel,
        out_shape=jax.ShapeDtypeStruct((n, 2, 2, h0, w0, cout), x_nchw.dtype),
        grid=grid,
        in_specs=[
            pl.BlockSpec((16, cin, cout), lambda b, t: (0, 0, 0)),            # weights (VMEM, resident)
            pl.BlockSpec((1, cout), lambda b, t: (0, 0)),                     # bias    (VMEM, resident)
            pl.BlockSpec((1, h0 + 2, w0 + 2, cin), lambda b, t: (b, 0, 0, 0)),  # padded input (per batch)
        ],
        out_specs=pl.BlockSpec((1, 2, 2, tr, w0, cout),
                               lambda b, t: (b, 0, 0, t, 0, 0)),
        compiler_params=pltpu.CompilerParams(
            dimension_semantics=("parallel", "parallel")),
    )(wc, bias2d, xp)

    # (N, py, px, H0, W0, C) -> (N, C, H0, py, W0, px) -> (N, C, 2H0, 2W0)
    out = jnp.transpose(out_ph, (0, 5, 3, 1, 4, 2)).reshape(n, cout, 2 * h0, 2 * w0)
    return out


def _reference(x_nchw, weight_oihw, bias):
    """Pure-JAX reference (same math as torch: interpolate(nearest, 2x) -> conv2d)."""
    up = jnp.repeat(jnp.repeat(x_nchw, 2, axis=2), 2, axis=3)
    y = jax.lax.conv_general_dilated(
        up, weight_oihw, window_strides=(1, 1), padding=((1, 1), (1, 1)),
        dimension_numbers=("NCHW", "OIHW", "NCHW"))
    return y + bias[None, :, None, None]


if __name__ == "__main__":
    key = jax.random.PRNGKey(0)
    k_x, k_w, k_b = jax.random.split(key, 3)

    N, C, H0, W0 = 2, 4, 16, 16
    x = jax.random.normal(k_x, (N, C, H0, W0), dtype=jnp.float32)

    # Deterministic Conv2d(C, C, 3) parameters (uniform, like torch's default fan-in bound).
    bound = 1.0 / jnp.sqrt(C * 3 * 3)
    weight = jax.random.uniform(k_w, (C, C, 3, 3), jnp.float32, -bound, bound)
    bias = jax.random.uniform(k_b, (C,), jnp.float32, -bound, bound)

    out = jax.block_until_ready(upsample_forward(x, weight, bias))
    ref = jax.block_until_ready(_reference(x, weight, bias))

    assert out.shape == (N, C, 2 * H0, 2 * W0), out.shape
    err = float(jnp.max(jnp.abs(out - ref)))
    assert jnp.allclose(out, ref, atol=1e-4, rtol=1e-4), err

    print("KERNEL_OK")
</pallas_src>

<mosaic_0001>
module attributes {stable_mosaic.version = 11 : i64} {
  func.func @upsample_conv_kernel(%arg0: i32, %arg1: i32, %arg2: memref<16x4x4xf32, #tpu.memory_space<vmem>>, %arg3: memref<1x4xf32, #tpu.memory_space<vmem>>, %arg4: memref<1x18x18x4xf32, #tpu.memory_space<vmem>>, %arg5: memref<1x2x2x8x16x4xf32, #tpu.memory_space<vmem>>) attributes {dimension_semantics = [#tpu.dimension_semantics<parallel>, #tpu.dimension_semantics<parallel>], iteration_bounds = array<i64: 2, 2>, scalar_prefetch = 0 : i64, scratch_operands = 0 : i64, tpu.core_type = #tpu.core_type<tc>, window_params = [{pipeline_mode = #tpu.pipeline_mode<synchronous>, transform_indices = @transform_0, window_bounds = array<i64: 16, 4, 4>}, {pipeline_mode = #tpu.pipeline_mode<synchronous>, transform_indices = @transform_1, window_bounds = array<i64: 1, 4>}, {transform_indices = @transform_2, window_bounds = array<i64: 1, 18, 18, 4>}, {transform_indices = @transform_3, window_bounds = array<i64: 1, 2, 2, 8, 16, 4>}]} {
    %c8_i32 = arith.constant 8 : i32
    %0 = arith.muli %arg1, %c8_i32 : i32
    %1 = tpu.assume_multiple %0, 8 : i32
    %c0 = arith.constant 0 : index
    %2 = arith.index_cast %1 : i32 to index
    %c0_0 = arith.constant 0 : index
    %c0_1 = arith.constant 0 : index
    %3 = vector.load %arg4[%c0, %2, %c0_0, %c0_1] : memref<1x18x18x4xf32, #tpu.memory_space<vmem>>, vector<1x10x18x4xf32>
    %4 = vector.shape_cast %3 : vector<1x10x18x4xf32> to vector<10x18x4xf32>
    %5 = vector.extract_strided_slice %4 {offsets = [0, 0, 0], sizes = [8, 16, 4], strides = [1, 1, 1]} : vector<10x18x4xf32> to vector<8x16x4xf32>
    %6 = vector.shape_cast %5 : vector<8x16x4xf32> to vector<128x4xf32>
    %7 = vector.extract_strided_slice %4 {offsets = [0, 1, 0], sizes = [8, 16, 4], strides = [1, 1, 1]} : vector<10x18x4xf32> to vector<8x16x4xf32>
    %8 = vector.shape_cast %7 : vector<8x16x4xf32> to vector<128x4xf32>
    %9 = vector.extract_strided_slice %4 {offsets = [0, 2, 0], sizes = [8, 16, 4], strides = [1, 1, 1]} : vector<10x18x4xf32> to vector<8x16x4xf32>
    %10 = vector.shape_cast %9 : vector<8x16x4xf32> to vector<128x4xf32>
    %11 = vector.extract_strided_slice %4 {offsets = [1, 0, 0], sizes = [8, 16, 4], strides = [1, 1, 1]} : vector<10x18x4xf32> to vector<8x16x4xf32>
    %12 = vector.shape_cast %11 : vector<8x16x4xf32> to vector<128x4xf32>
    %13 = vector.extract_strided_slice %4 {offsets = [1, 1, 0], sizes = [8, 16, 4], strides = [1, 1, 1]} : vector<10x18x4xf32> to vector<8x16x4xf32>
    %14 = vector.shape_cast %13 : vector<8x16x4xf32> to vector<128x4xf32>
    %15 = vector.extract_strided_slice %4 {offsets = [1, 2, 0], sizes = [8, 16, 4], strides = [1, 1, 1]} : vector<10x18x4xf32> to vector<8x16x4xf32>
    %16 = vector.shape_cast %15 : vector<8x16x4xf32> to vector<128x4xf32>
    %17 = vector.extract_strided_slice %4 {offsets = [2, 0, 0], sizes = [8, 16, 4], strides = [1, 1, 1]} : vector<10x18x4xf32> to vector<8x16x4xf32>
    %18 = vector.shape_cast %17 : vector<8x16x4xf32> to vector<128x4xf32>
    %19 = vector.extract_strided_slice %4 {offsets = [2, 1, 0], sizes = [8, 16, 4], strides = [1, 1, 1]} : vector<10x18x4xf32> to vector<8x16x4xf32>
    %20 = vector.shape_cast %19 : vector<8x16x4xf32> to vector<128x4xf32>
    %21 = vector.extract_strided_slice %4 {offsets = [2, 2, 0], sizes = [8, 16, 4], strides = [1, 1, 1]} : vector<10x18x4xf32> to vector<8x16x4xf32>
    %22 = vector.shape_cast %21 : vector<8x16x4xf32> to vector<128x4xf32>
    %c0_2 = arith.constant 0 : index
    %c0_3 = arith.constant 0 : index
    %23 = vector.load %arg3[%c0_2, %c0_3] : memref<1x4xf32, #tpu.memory_space<vmem>>, vector<1x4xf32>
    %cst = arith.constant 0.000000e+00 : f32
    %24 = vector.broadcast %cst : f32 to vector<128x4xf32>
    %c0_4 = arith.constant 0 : index
    %c0_5 = arith.constant 0 : index
    %c0_6 = arith.constant 0 : index
    %25 = vector.load %arg2[%c0_4, %c0_5, %c0_6] : memref<16x4x4xf32, #tpu.memory_space<vmem>>, vector<1x4x4xf32>
    %26 = vector.shape_cast %25 : vector<1x4x4xf32> to vector<4x4xf32>
    %cst_7 = arith.constant dense<0.000000e+00> : vector<128x4xf32>
    %27 = tpu.matmul %6, %26, %cst_7 {dimension_numbers = #tpu.dot_dimension_numbers<[1], [0], [0], [1], [0, 0, 1, 1], [], []>} : vector<128x4xf32>, vector<4x4xf32>, vector<128x4xf32> -> vector<128x4xf32>
    %28 = arith.addf %24, %27 : vector<128x4xf32>
    %c1 = arith.constant 1 : index
    %c0_8 = arith.constant 0 : index
    %c0_9 = arith.constant 0 : index
    %29 = vector.load %arg2[%c1, %c0_8, %c0_9] : memref<16x4x4xf32, #tpu.memory_space<vmem>>, vector<1x4x4xf32>
    %30 = vector.shape_cast %29 : vector<1x4x4xf32> to vector<4x4xf32>
    %cst_10 = arith.constant dense<0.000000e+00> : vector<128x4xf32>
    %31 = tpu.matmul %8, %30, %cst_10 {dimension_numbers = #tpu.dot_dimension_numbers<[1], [0], [0], [1], [0, 0, 1, 1], [], []>} : vector<128x4xf32>, vector<4x4xf32>, vector<128x4xf32> -> vector<128x4xf32>
    %32 = arith.addf %28, %31 : vector<128x4xf32>
    %c2 = arith.constant 2 : index
    %c0_11 = arith.constant 0 : index
    %c0_12 = arith.constant 0 : index
    %33 = vector.load %arg2[%c2, %c0_11, %c0_12] : memref<16x4x4xf32, #tpu.memory_space<vmem>>, vector<1x4x4xf32>
    %34 = vector.shape_cast %33 : vector<1x4x4xf32> to vector<4x4xf32>
    %cst_13 = arith.constant dense<0.000000e+00> : vector<128x4xf32>
    %35 = tpu.matmul %12, %34, %cst_13 {dimension_numbers = #tpu.dot_dimension_numbers<[1], [0], [0], [1], [0, 0, 1, 1], [], []>} : vector<128x4xf32>, vector<4x4xf32>, vector<128x4xf32> -> vector<128x4xf32>
    %36 = arith.addf %32, %35 : vector<128x4xf32>
    %c3 = arith.constant 3 : index
    %c0_14 = arith.constant 0 : index
    %c0_15 = arith.constant 0 : index
    %37 = vector.load %arg2[%c3, %c0_14, %c0_15] : memref<16x4x4xf32, #tpu.memory_space<vmem>>, vector<1x4x4xf32>
    %38 = vector.shape_cast %37 : vector<1x4x4xf32> to vector<4x4xf32>
    %cst_16 = arith.constant dense<0.000000e+00> : vector<128x4xf32>
    %39 = tpu.matmul %14, %38, %cst_16 {dimension_numbers = #tpu.dot_dimension_numbers<[1], [0], [0], [1], [0, 0, 1, 1], [], []>} : vector<128x4xf32>, vector<4x4xf32>, vector<128x4xf32> -> vector<128x4xf32>
    %40 = arith.addf %36, %39 : vector<128x4xf32>
    %41 = vector.broadcast %23 : vector<1x4xf32> to vector<128x4xf32>
    %42 = arith.addf %40, %41 : vector<128x4xf32>
    %43 = vector.shape_cast %42 : vector<128x4xf32> to vector<8x16x4xf32>
    %c0_17 = arith.constant 0 : index
    %c0_18 = arith.constant 0 : index
    %c0_19 = arith.constant 0 : index
    %c0_20 = arith.constant 0 : index
    %c0_21 = arith.constant 0 : index
    %c0_22 = arith.constant 0 : index
    %44 = vector.load %arg5[%c0_17, %c0_18, %c0_19, %c0_20, %c0_21, %c0_22] : memref<1x2x2x8x16x4xf32, #tpu.memory_space<vmem>>, vector<1x1x1x8x16x4xf32>
    %45 = vector.shape_cast %44 : vector<1x1x1x8x16x4xf32> to vector<8x16x4xf32>
    %46 = vector.shape_cast %43 : vector<8x16x4xf32> to vector<1x1x1x8x16x4xf32>
    tpu.vector_store %arg5[%c0_17, %c0_18, %c0_19, %c0_20, %c0_21, %c0_22], %46 {strides = array<i32>} : memref<1x2x2x8x16x4xf32, #tpu.memory_space<vmem>>, vector<1x1x1x8x16x4xf32>,
    %cst_23 = arith.constant 0.000000e+00 : f32
    %47 = vector.broadcast %cst_23 : f32 to vector<128x4xf32>
    %c4 = arith.constant 4 : index
    %c0_24 = arith.constant 0 : index
    %c0_25 = arith.constant 0 : index
    %48 = vector.load %arg2[%c4, %c0_24, %c0_25] : memref<16x4x4xf32, #tpu.memory_space<vmem>>, vector<1x4x4xf32>
    %49 = vector.shape_cast %48 : vector<1x4x4xf32> to vector<4x4xf32>
    %cst_26 = arith.constant dense<0.000000e+00> : vector<128x4xf32>
    %50 = tpu.matmul %8, %49, %cst_26 {dimension_numbers = #tpu.dot_dimension_numbers<[1], [0], [0], [1], [0, 0, 1, 1], [], []>} : vector<128x4xf32>, vector<4x4xf32>, vector<128x4xf32> -> vector<128x4xf32>
    %51 = arith.addf %47, %50 : vector<128x4xf32>
    %c5 = arith.constant 5 : index
    %c0_27 = arith.constant 0 : index
    %c0_28 = arith.constant 0 : index
    %52 = vector.load %arg2[%c5, %c0_27, %c0_28] : memref<16x4x4xf32, #tpu.memory_space<vmem>>, vector<1x4x4xf32>
    %53 = vector.shape_cast %52 : vector<1x4x4xf32> to vector<4x4xf32>
    %cst_29 = arith.constant dense<0.000000e+00> : vector<128x4xf32>
    %54 = tpu.matmul %10, %53, %cst_29 {dimension_numbers = #tpu.dot_dimension_numbers<[1], [0], [0], [1], [0, 0, 1, 1], [], []>} : vector<128x4xf32>, vector<4x4xf32>, vector<128x4xf32> -> vector<128x4xf32>
    %55 = arith.addf %51, %54 : vector<128x4xf32>
    %c6 = arith.constant 6 : index
    %c0_30 = arith.constant 0 : index
    %c0_31 = arith.constant 0 : index
    %56 = vector.load %arg2[%c6, %c0_30, %c0_31] : memref<16x4x4xf32, #tpu.memory_space<vmem>>, vector<1x4x4xf32>
    %57 = vector.shape_cast %56 : vector<1x4x4xf32> to vector<4x4xf32>
    %cst_32 = arith.constant dense<0.000000e+00> : vector<128x4xf32>
    %58 = tpu.matmul %14, %57, %cst_32 {dimension_numbers = #tpu.dot_dimension_numbers<[1], [0], [0], [1], [0, 0, 1, 1], [], []>} : vector<128x4xf32>, vector<4x4xf32>, vector<128x4xf32> -> vector<128x4xf32>
    %59 = arith.addf %55, %58 : vector<128x4xf32>
    %c7 = arith.constant 7 : index
    %c0_33 = arith.constant 0 : index
    %c0_34 = arith.constant 0 : index
    %60 = vector.load %arg2[%c7, %c0_33, %c0_34] : memref<16x4x4xf32, #tpu.memory_space<vmem>>, vector<1x4x4xf32>
    %61 = vector.shape_cast %60 : vector<1x4x4xf32> to vector<4x4xf32>
    %cst_35 = arith.constant dense<0.000000e+00> : vector<128x4xf32>
    %62 = tpu.matmul %16, %61, %cst_35 {dimension_numbers = #tpu.dot_dimension_numbers<[1], [0], [0], [1], [0, 0, 1, 1], [], []>} : vector<128x4xf32>, vector<4x4xf32>, vector<128x4xf32> -> vector<128x4xf32>
    %63 = arith.addf %59, %62 : vector<128x4xf32>
    %64 = vector.broadcast %23 : vector<1x4xf32> to vector<128x4xf32>
    %65 = arith.addf %63, %64 : vector<128x4xf32>
    %66 = vector.shape_cast %65 : vector<128x4xf32> to vector<8x16x4xf32>
    %c0_36 = arith.constant 0 : index
    %c0_37 = arith.constant 0 : index
    %c1_38 = arith.constant 1 : index
    %c0_39 = arith.constant 0 : index
    %c0_40 = arith.constant 0 : index
    %c0_41 = arith.constant 0 : index
    %67 = vector.load %arg5[%c0_36, %c0_37, %c1_38, %c0_39, %c0_40, %c0_41] : memref<1x2x2x8x16x4xf32, #tpu.memory_space<vmem>>, vector<1x1x1x8x16x4xf32>
    %68 = vector.shape_cast %67 : vector<1x1x1x8x16x4xf32> to vector<8x16x4xf32>
    %69 = vector.shape_cast %66 : vector<8x16x4xf32> to vector<1x1x1x8x16x4xf32>
    tpu.vector_store %arg5[%c0_36, %c0_37, %c1_38, %c0_39, %c0_40, %c0_41], %69 {strides = array<i32>} : memref<1x2x2x8x16x4xf32, #tpu.memory_space<vmem>>, vector<1x1x1x8x16x4xf32>,
    %cst_42 = arith.constant 0.000000e+00 : f32
    %70 = vector.broadcast %cst_42 : f32 to vector<128x4xf32>
    %c8 = arith.constant 8 : index
    %c0_43 = arith.constant 0 : index
    %c0_44 = arith.constant 0 : index
    %71 = vector.load %arg2[%c8, %c0_43, %c0_44] : memref<16x4x4xf32, #tpu.memory_space<vmem>>, vector<1x4x4xf32>
    %72 = vector.shape_cast %71 : vector<1x4x4xf32> to vector<4x4xf32>
    %cst_45 = arith.constant dense<0.000000e+00> : vector<128x4xf32>
    %73 = tpu.matmul %12, %72, %cst_45 {dimension_numbers = #tpu.dot_dimension_numbers<[1], [0], [0], [1], [0, 0, 1, 1], [], []>} : vector<128x4xf32>, vector<4x4xf32>, vector<128x4xf32> -> vector<128x4xf32>
    %74 = arith.addf %70, %73 : vector<128x4xf32>
    %c9 = arith.constant 9 : index
    %c0_46 = arith.constant 0 : index
    %c0_47 = arith.constant 0 : index
    %75 = vector.load %arg2[%c9, %c0_46, %c0_47] : memref<16x4x4xf32, #tpu.memory_space<vmem>>, vector<1x4x4xf32>
    %76 = vector.shape_cast %75 : vector<1x4x4xf32> to vector<4x4xf32>
    %cst_48 = arith.constant dense<0.000000e+00> : vector<128x4xf32>
    %77 = tpu.matmul %14, %76, %cst_48 {dimension_numbers = #tpu.dot_dimension_numbers<[1], [0], [0], [1], [0, 0, 1, 1], [], []>} : vector<128x4xf32>, vector<4x4xf32>, vector<128x4xf32> -> vector<128x4xf32>
    %78 = arith.addf %74, %77 : vector<128x4xf32>
    %c10 = arith.constant 10 : index
    %c0_49 = arith.constant 0 : index
    %c0_50 = arith.constant 0 : index
    %79 = vector.load %arg2[%c10, %c0_49, %c0_50] : memref<16x4x4xf32, #tpu.memory_space<vmem>>, vector<1x4x4xf32>
    %80 = vector.shape_cast %79 : vector<1x4x4xf32> to vector<4x4xf32>
    %cst_51 = arith.constant dense<0.000000e+00> : vector<128x4xf32>
    %81 = tpu.matmul %18, %80, %cst_51 {dimension_numbers = #tpu.dot_dimension_numbers<[1], [0], [0], [1], [0, 0, 1, 1], [], []>} : vector<128x4xf32>, vector<4x4xf32>, vector<128x4xf32> -> vector<128x4xf32>
    %82 = arith.addf %78, %81 : vector<128x4xf32>
    %c11 = arith.constant 11 : index
    %c0_52 = arith.constant 0 : index
    %c0_53 = arith.constant 0 : index
    %83 = vector.load %arg2[%c11, %c0_52, %c0_53] : memref<16x4x4xf32, #tpu.memory_space<vmem>>, vector<1x4x4xf32>
    %84 = vector.shape_cast %83 : vector<1x4x4xf32> to vector<4x4xf32>
    %cst_54 = arith.constant dense<0.000000e+00> : vector<128x4xf32>
    %85 = tpu.matmul %20, %84, %cst_54 {dimension_numbers = #tpu.dot_dimension_numbers<[1], [0], [0], [1], [0, 0, 1, 1], [], []>} : vector<128x4xf32>, vector<4x4xf32>, vector<128x4xf32> -> vector<128x4xf32>
    %86 = arith.addf %82, %85 : vector<128x4xf32>
    %87 = vector.broadcast %23 : vector<1x4xf32> to vector<128x4xf32>
    %88 = arith.addf %86, %87 : vector<128x4xf32>
    %89 = vector.shape_cast %88 : vector<128x4xf32> to vector<8x16x4xf32>
    %c0_55 = arith.constant 0 : index
    %c1_56 = arith.constant 1 : index
    %c0_57 = arith.constant 0 : index
    %c0_58 = arith.constant 0 : index
    %c0_59 = arith.constant 0 : index
    %c0_60 = arith.constant 0 : index
    %90 = vector.load %arg5[%c0_55, %c1_56, %c0_57, %c0_58, %c0_59, %c0_60] : memref<1x2x2x8x16x4xf32, #tpu.memory_space<vmem>>, vector<1x1x1x8x16x4xf32>
    %91 = vector.shape_cast %90 : vector<1x1x1x8x16x4xf32> to vector<8x16x4xf32>
    %92 = vector.shape_cast %89 : vector<8x16x4xf32> to vector<1x1x1x8x16x4xf32>
    tpu.vector_store %arg5[%c0_55, %c1_56, %c0_57, %c0_58, %c0_59, %c0_60], %92 {strides = array<i32>} : memref<1x2x2x8x16x4xf32, #tpu.memory_space<vmem>>, vector<1x1x1x8x16x4xf32>,
    %cst_61 = arith.constant 0.000000e+00 : f32
    %93 = vector.broadcast %cst_61 : f32 to vector<128x4xf32>
    %c12 = arith.constant 12 : index
    %c0_62 = arith.constant 0 : index
    %c0_63 = arith.constant 0 : index
    %94 = vector.load %arg2[%c12, %c0_62, %c0_63] : memref<16x4x4xf32, #tpu.memory_space<vmem>>, vector<1x4x4xf32>
    %95 = vector.shape_cast %94 : vector<1x4x4xf32> to vector<4x4xf32>
    %cst_64 = arith.constant dense<0.000000e+00> : vector<128x4xf32>
    %96 = tpu.matmul %14, %95, %cst_64 {dimension_numbers = #tpu.dot_dimension_numbers<[1], [0], [0], [1], [0, 0, 1, 1], [], []>} : vector<128x4xf32>, vector<4x4xf32>, vector<128x4xf32> -> vector<128x4xf32>
    %97 = arith.addf %93, %96 : vector<128x4xf32>
    %c13 = arith.constant 13 : index
    %c0_65 = arith.constant 0 : index
    %c0_66 = arith.constant 0 : index
    %98 = vector.load %arg2[%c13, %c0_65, %c0_66] : memref<16x4x4xf32, #tpu.memory_space<vmem>>, vector<1x4x4xf32>
    %99 = vector.shape_cast %98 : vector<1x4x4xf32> to vector<4x4xf32>
    %cst_67 = arith.constant dense<0.000000e+00> : vector<128x4xf32>
    %100 = tpu.matmul %16, %99, %cst_67 {dimension_numbers = #tpu.dot_dimension_numbers<[1], [0], [0], [1], [0, 0, 1, 1], [], []>} : vector<128x4xf32>, vector<4x4xf32>, vector<128x4xf32> -> vector<128x4xf32>
    %101 = arith.addf %97, %100 : vector<128x4xf32>
    %c14 = arith.constant 14 : index
    %c0_68 = arith.constant 0 : index
    %c0_69 = arith.constant 0 : index
    %102 = vector.load %arg2[%c14, %c0_68, %c0_69] : memref<16x4x4xf32, #tpu.memory_space<vmem>>, vector<1x4x4xf32>
    %103 = vector.shape_cast %102 : vector<1x4x4xf32> to vector<4x4xf32>
    %cst_70 = arith.constant dense<0.000000e+00> : vector<128x4xf32>
    %104 = tpu.matmul %20, %103, %cst_70 {dimension_numbers = #tpu.dot_dimension_numbers<[1], [0], [0], [1], [0, 0, 1, 1], [], []>} : vector<128x4xf32>, vector<4x4xf32>, vector<128x4xf32> -> vector<128x4xf32>
    %105 = arith.addf %101, %104 : vector<128x4xf32>
    %c15 = arith.constant 15 : index
    %c0_71 = arith.constant 0 : index
    %c0_72 = arith.constant 0 : index
    %106 = vector.load %arg2[%c15, %c0_71, %c0_72] : memref<16x4x4xf32, #tpu.memory_space<vmem>>, vector<1x4x4xf32>
    %107 = vector.shape_cast %106 : vector<1x4x4xf32> to vector<4x4xf32>
    %cst_73 = arith.constant dense<0.000000e+00> : vector<128x4xf32>
    %108 = tpu.matmul %22, %107, %cst_73 {dimension_numbers = #tpu.dot_dimension_numbers<[1], [0], [0], [1], [0, 0, 1, 1], [], []>} : vector<128x4xf32>, vector<4x4xf32>, vector<128x4xf32> -> vector<128x4xf32>
    %109 = arith.addf %105, %108 : vector<128x4xf32>
    %110 = vector.broadcast %23 : vector<1x4xf32> to vector<128x4xf32>
    %111 = arith.addf %109, %110 : vector<128x4xf32>
    %112 = vector.shape_cast %111 : vector<128x4xf32> to vector<8x16x4xf32>
    %c0_74 = arith.constant 0 : index
    %c1_75 = arith.constant 1 : index
    %c1_76 = arith.constant 1 : index
    %c0_77 = arith.constant 0 : index
    %c0_78 = arith.constant 0 : index
    %c0_79 = arith.constant 0 : index
    %113 = vector.load %arg5[%c0_74, %c1_75, %c1_76, %c0_77, %c0_78, %c0_79] : memref<1x2x2x8x16x4xf32, #tpu.memory_space<vmem>>, vector<1x1x1x8x16x4xf32>
    %114 = vector.shape_cast %113 : vector<1x1x1x8x16x4xf32> to vector<8x16x4xf32>
    %115 = vector.shape_cast %112 : vector<8x16x4xf32> to vector<1x1x1x8x16x4xf32>
    tpu.vector_store %arg5[%c0_74, %c1_75, %c1_76, %c0_77, %c0_78, %c0_79], %115 {strides = array<i32>} : memref<1x2x2x8x16x4xf32, #tpu.memory_space<vmem>>, vector<1x1x1x8x16x4xf32>,
    return
  }
  func.func @transform_0(%arg0: i32, %arg1: i32) -> (i32, i32, i32) {
    %c0_i32 = arith.constant 0 : i32
    %c0_i32_0 = arith.constant 0 : i32
    %c0_i32_1 = arith.constant 0 : i32
    %c0_i32_2 = arith.constant 0 : i32
    return %c0_i32, %c0_i32_0, %c0_i32_1 : i32, i32, i32
  }
  func.func @transform_1(%arg0: i32, %arg1: i32) -> (i32, i32) {
    %c0_i32 = arith.constant 0 : i32
    %c0_i32_0 = arith.constant 0 : i32
    %c0_i32_1 = arith.constant 0 : i32
    return %c0_i32, %c0_i32_0 : i32, i32
  }
  func.func @transform_2(%arg0: i32, %arg1: i32) -> (i32, i32, i32, i32) {
    %c0_i32 = arith.constant 0 : i32
    %c0_i32_0 = arith.constant 0 : i32
    %c0_i32_1 = arith.constant 0 : i32
    %c0_i32_2 = arith.constant 0 : i32
    return %arg0, %c0_i32, %c0_i32_0, %c0_i32_1 : i32, i32, i32, i32
  }
  func.func @transform_3(%arg0: i32, %arg1: i32) -> (i32, i32, i32, i32, i32, i32) {
    %c0_i32 = arith.constant 0 : i32
    %c0_i32_0 = arith.constant 0 : i32
    %c0_i32_1 = arith.constant 0 : i32
    %c0_i32_2 = arith.constant 0 : i32
    %c0_i32_3 = arith.constant 0 : i32
    return %arg0, %c0_i32, %c0_i32_0, %arg1, %c0_i32_1, %c0_i32_2 : i32, i32, i32, i32, i32, i32
  }
}

</mosaic_0001>

<llo_original>
// kernel: tpu_custom_call.1
$region0: #{tpu_custom_call.1}
  #allocation0 [shape = 'u32[]', space=smem, size = 0x4, offset = 0x4, fixed_abs, tag = 'smem constant byte address 0x4 - core index']
  #allocation1 [shape = 'u32[144,128]{1,0:T(1,128)}', space=vmem, size = 0x12000, scoped, tag = 'internal scratch']
  %s0 = inlined_call_operand.vmem [shape: f32[16,4,4], index: 0, kind: input, shape index: {}]
  %s1 = inlined_call_operand.vmem [shape: f32[1,4], index: 1, kind: input, shape index: {}]
  %s2 = inlined_call_operand.vmem [shape: f32[2,18,18,4], index: 2, kind: input, shape index: {}]
  %s3 = inlined_call_operand.vmem [shape: f32[2,2,2,16,16,4], index: 3, kind: output, shape index: {}]
  %s4 = sld [smem:[#allocation0]]
  $region79: #{tpu_custom_call.1} parent=0
    _
  %s6 = ssub.s32 1, %s4
  %s7 = scalar_select 0, %s6, %s4
  $region1: #{tpu_custom_call.1} parent=0
    #allocation2 [shape = 'u8[524288]{0}', space=vmem, size = 0x80000, scoped, tag = 'output window, operand 0']
    loop: start=0, step=1, limit=6
    $region2: #{tpu_custom_call.1} parent=1 // loop_pre_header
      _
    $region3: #{tpu_custom_call.1} parent=1 // loop_header
      %s9 = sphi 0, %s13
      %p10 = scmp.ge.s32.totalorder %s9, 6
      %s16 = sphi 0, %s28
      %s17 = sphi 0, %s24
      %s18 = sphi 0, %s16
      %s19 = sphi 0, %s17
      %s20 = sphi 0, %s18
      %s21 = sphi 0, %s19
      %s29 = sphi 0, %s29
      %s31 = sphi 0, %s29
      %s32 = sphi 0, %s31
      %s46 = sphi 0, %s32
      %s50 = sphi 0, %s50
      %s52 = sphi 0, %s50
      %s53 = sphi 0, %s52
      %s67 = sphi 0, %s53
      %s73 = sphi 0, %s75
      %s76 = sphi 0, %s73
      %s77 = sphi 0, %s76
      %s93 = sphi 0, %s77
      %s101 = sphi 0, %s103
      %s104 = sphi 0, %s101
      %s105 = sphi 0, %s104
      %s121 = sphi 0, %s105
    $region4: #{tpu_custom_call.1} parent=1 // loop_header_branch
      %12 = sbr.rel (%p10) target = $region8
    $region5: #{tpu_custom_call.1} parent=1 // loop_body
      %s14 = ssub.s32 %s9, 1
      %s15 = ssub.s32 %s9, 2
      %s22 = sadd.s32 1, %s17
      %p23 = scmp.ge.s32.totalorder %s22, 2
      %s24 = scalar_select %p23, 0, %s22
      %s25 = sadd.s32 1, %s16
      %s26 = scalar_select %p23, %s25, %s16
      %p27 = scmp.ge.s32.totalorder %s26, 2
      %s28 = scalar_select %p27, 0, %s26
      %s30 = sadd.s32 %s29, 1
      %p33 = scmp.eq.s32.totalorder %s9, 3
      %p34 = scmp.ne.s32.totalorder %s29, %s31
      %p35 = scmp.eq.s32.totalorder %s9, 0
      %p36 = por %p34, %p35
      %p37 = scmp.ne.s32.totalorder %s29, %s31
      %p38 = scmp.eq.s32.totalorder %s14, 3
      %p39 = por %p37, %p38
      %p40 = scmp.ne.s32.totalorder %s31, %s32
      %p41 = scmp.eq.s32.totalorder %s14, 0
      %p42 = por %p40, %p41
      %p43 = scmp.ne.s32.totalorder %s31, %s32
      %p44 = scmp.eq.s32.totalorder %s15, 3
      %p45 = por %p43, %p44
      %p47 = scmp.ne.s32.totalorder %s32, %s46
      %p48 = scmp.eq.s32.totalorder %s15, 0
      %p49 = por %p47, %p48
      %s51 = sadd.s32 %s50, 1
      %p54 = scmp.eq.s32.totalorder %s9, 3
      %p55 = scmp.ne.s32.totalorder %s50, %s52
      %p56 = scmp.eq.s32.totalorder %s9, 0
      %p57 = por %p55, %p56
      %p58 = scmp.ne.s32.totalorder %s50, %s52
      %p59 = scmp.eq.s32.totalorder %s14, 3
      %p60 = por %p58, %p59
      %p61 = scmp.ne.s32.totalorder %s52, %s53
      %p62 = scmp.eq.s32.totalorder %s14, 0
      %p63 = por %p61, %p62
      %p64 = scmp.ne.s32.totalorder %s52, %s53
      %p65 = scmp.eq.s32.totalorder %s15, 3
      %p66 = por %p64, %p65
      %p68 = scmp.ne.s32.totalorder %s53, %s67
      %p69 = scmp.eq.s32.totalorder %s15, 0
      %p70 = por %p68, %p69
      %s71 = ssub.s32 %s16, %s28
      %p72 = scmp.eq.s32.totalorder %s71, 0
      %s74 = sadd.s32 %s73, 1
      %s75 = scalar_select %p72, %s73, %s74
      %p78 = pneg %p72
      %p79 = scmp.eq.s32.totalorder %s9, 3
      %p80 = por %p78, %p79
      %p81 = scmp.ne.s32.totalorder %s73, %s76
      %p82 = scmp.eq.s32.totalorder %s9, 0
      %p83 = por %p81, %p82
      %p84 = scmp.ne.s32.totalorder %s73, %s76
      %p85 = scmp.eq.s32.totalorder %s14, 3
      %p86 = por %p84, %p85
      %p87 = scmp.ne.s32.totalorder %s76, %s77
      %p88 = scmp.eq.s32.totalorder %s14, 0
      %p89 = por %p87, %p88
      %p90 = scmp.ne.s32.totalorder %s76, %s77
      %p91 = scmp.eq.s32.totalorder %s15, 3
      %p92 = por %p90, %p91
      %p94 = scmp.ne.s32.totalorder %s77, %s93
      %p95 = scmp.eq.s32.totalorder %s15, 0
      %p96 = por %p94, %p95
      %s97 = ssub.s32 %s16, %s28
      %s98 = ssub.s32 %s17, %s24
      %s99 = sor.u32 %s97, %s98
      %p100 = scmp.eq.s32.totalorder %s99, 0
      %s102 = sadd.s32 %s101, 1
      %s103 = scalar_select %p100, %s101, %s102
      %p106 = pneg %p100
      %p107 = scmp.eq.s32.totalorder %s9, 3
      %p108 = por %p106, %p107
      %p109 = scmp.ne.s32.totalorder %s101, %s104
      %p110 = scmp.eq.s32.totalorder %s9, 0
      %p111 = por %p109, %p110
      %p112 = scmp.ne.s32.totalorder %s101, %s104
      %p113 = scmp.eq.s32.totalorder %s14, 3
      %p114 = por %p112, %p113
      %p115 = scmp.ne.s32.totalorder %s104, %s105
      %p116 = scmp.eq.s32.totalorder %s14, 0
      %p117 = por %p115, %p116
      %p118 = scmp.ne.s32.totalorder %s104, %s105
      %p119 = scmp.eq.s32.totalorder %s15, 3
      %p120 = por %p118, %p119
      %p122 = scmp.ne.s32.totalorder %s105, %s121
      %p123 = scmp.eq.s32.totalorder %s15, 0
      %p124 = por %p122, %p123
      %p125 = scmp.le.s32.totalorder 1, %s9
      %p126 = scmp.lt.s32.totalorder %s9, 5
      %p127 = pnand %p125, %p126
      %p128 = pneg %p127
      // Predicated region
      $region9: #{tpu_custom_call.1} parent=5 // pred_check
        _
      $region10: #{tpu_custom_call.1} parent=5 // pred_check_branch
        %130 = sbr.rel (%p127) target = $region12
      $region11: #{tpu_custom_call.1} parent=5 // pred_region
        %s131 = ssub.s32 %s9, 1
        // Predicated region
        $region13: #{tpu_custom_call.1} parent=11 // pred_check
          %p132 = pneg %p42
        $region14: #{tpu_custom_call.1} parent=11 // pred_check_branch
          %134 = sbr.rel (%p132) target = $region16
        $region15: #{tpu_custom_call.1} parent=11 // pred_region
          _
        $region16: #{tpu_custom_call.1} parent=11 // pred_fallthru
          _
        // Predicated region
        $region17: #{tpu_custom_call.1} parent=11 // pred_check
          %p135 = pneg %p63
        $region18: #{tpu_custom_call.1} parent=11 // pred_check_branch
          %137 = sbr.rel (%p135) target = $region20
        $region19: #{tpu_custom_call.1} parent=11 // pred_region
          _
        $region20: #{tpu_custom_call.1} parent=11 // pred_fallthru
          _
      $region12: #{tpu_custom_call.1} parent=5 // pred_fallthru
        _
      %p138 = scmp.lt.s32.totalorder %s9, 4
      // Predicated region
      $region21: #{tpu_custom_call.1} parent=5 // pred_check
        %p139 = pneg %p138
      $region22: #{tpu_custom_call.1} parent=5 // pred_check_branch
        %141 = sbr.rel (%p139) target = $region24
      $region23: #{tpu_custom_call.1} parent=5 // pred_region
        // Predicated region
        $region25: #{tpu_custom_call.1} parent=23 // pred_check
          %p142 = pneg %p83
        $region26: #{tpu_custom_call.1} parent=23 // pred_check_branch
          %144 = sbr.rel (%p142) target = $region28
        $region27: #{tpu_custom_call.1} parent=23 // pred_region
          %p145 = scmp.lt.s32.totalorder %s16, 1
          %s146 = scalar_select %p145, %s16, 1
          %s147 = smul.addr %s146, 54
          %s148 = smul.addr %s147, 8
          %s149 = scalar_lea.vmem %s2, %s148
        $region28: #{tpu_custom_call.1} parent=23 // pred_fallthru
          _
      $region24: #{tpu_custom_call.1} parent=5 // pred_fallthru
        _
      %p150 = scmp.le.s32.totalorder 1, %s9
      %p151 = scmp.lt.s32.totalorder %s9, 5
      %p152 = pnand %p150, %p151
      %p153 = pneg %p152
      // Predicated region
      $region29: #{tpu_custom_call.1} parent=5 // pred_check
        _
      $region30: #{tpu_custom_call.1} parent=5 // pred_check_branch
        %155 = sbr.rel (%p152) target = $region32
      $region31: #{tpu_custom_call.1} parent=5 // pred_region
        %s156 = ssub.s32 %s9, 1
        %p157 = pneg %p42
        %p158 = pneg %p39
        %p159 = pneg %p63
        %p160 = pneg %p60
        %p161 = scmp.lt.s32.totalorder %s18, 1
        %s162 = scalar_select %p161, %s18, 1
        %s163 = smul.addr %s162, 54
        %s164 = smul.addr %s163, 8
        %s165 = scalar_lea.vmem %s2, %s164
        %p166 = pneg %p89
        %p167 = pneg %p86
        %p168 = pneg %p117
        %p169 = pneg %p114
        %s170 = sand.u32 %s104, 1
        %s171 = sand.u32 %s104, 1
        %s172 = smul.addr %s171, 512
        %s173 = scalar_lea.vmem [#allocation2], %s172
        %p174 = scmp.lt.s32.totalorder %s18, 1
        %s175 = scalar_select %p174, %s18, 1
        %s176 = smul.addr %s175, 54
        %s177 = smul.addr %s176, 8
        %s178 = scalar_lea.vmem %s2, %s177
        %s179 = smul.u32 8, %s19
        %s180 = smul.u32 %s19, 8
        %s181 = smul.u32 %s180, 24
        %s182 = scalar_lea.vmem %s178, %s181
        %v183 = vld [vmem:[%s182] sm:$0xff]
        %v184 = vld [vmem:[%s182 + $0x8] sm:$0xff]
        %v185 = vld [vmem:[%s182 + $0x10] sm:$0x3]
        %v186 = vld [vmem:[%s182 + $0x18] sm:$0xff]
        %v187 = vld [vmem:[%s182 + $0x20] sm:$0xff]
        %v188 = vld [vmem:[%s182 + $0x28] sm:$0x3]
        %v189 = vld [vmem:[%s182 + $0x30] sm:$0xff]
        %v190 = vld [vmem:[%s182 + $0x38] sm:$0xff]
        %v191 = vld [vmem:[%s182 + $0x40] sm:$0x3]
        %v192 = vld [vmem:[%s182 + $0x48] sm:$0xff]
        %v193 = vld [vmem:[%s182 + $0x50] sm:$0xff]
        %v194 = vld [vmem:[%s182 + $0x58] sm:$0x3]
        %v195 = vld [vmem:[%s182 + $0x60] sm:$0xff]
        %v196 = vld [vmem:[%s182 + $0x68] sm:$0xff]
        %v197 = vld [vmem:[%s182 + $0x70] sm:$0x3]
        %v198 = vld [vmem:[%s182 + $0x78] sm:$0xff]
        %v199 = vld [vmem:[%s182 + $0x80] sm:$0xff]
        %v200 = vld [vmem:[%s182 + $0x88] sm:$0x3]
        %v201 = vld [vmem:[%s182 + $0x90] sm:$0xff]
        %v202 = vld [vmem:[%s182 + $0x98] sm:$0xff]
        %v203 = vld [vmem:[%s182 + $0xa0] sm:$0x3]
        %v204 = vld [vmem:[%s182 + $0xa8] sm:$0xff]
        %v205 = vld [vmem:[%s182 + $0xb0] sm:$0xff]
        %v206 = vld [vmem:[%s182 + $0xb8] sm:$0x3]
        %v207 = vld [vmem:[%s182 + $0xc0] sm:$0xff]
        %v208 = vld [vmem:[%s182 + $0xc8] sm:$0xff]
        %v209 = vld [vmem:[%s182 + $0xd0] sm:$0x3]
        %v210 = vld [vmem:[%s182 + $0xd8] sm:$0xff]
        %v211 = vld [vmem:[%s182 + $0xe0] sm:$0xff]
        %v212 = vld [vmem:[%s182 + $0xe8] sm:$0x3]
        %vm237 = vcmask 1046528
        %v238 = vrot.slane %v183, 1
        %v239 = vrot.slane %v184, 1
        %v240 = vsel %vm237, %v238, %v239
        %v241 = vrot.slane %v185, 1
        %v242 = vsel %vm237, %v239, %v241
        %v243 = vrot.slane %v186, 1
        %v244 = vrot.slane %v187, 1
        %v245 = vsel %vm237, %v243, %v244
        %v246 = vrot.slane %v188, 1
        %v247 = vsel %vm237, %v244, %v246
        %v248 = vrot.slane %v189, 1
        %v249 = vrot.slane %v190, 1
        %v250 = vsel %vm237, %v248, %v249
        %v251 = vrot.slane %v191, 1
        %v252 = vsel %vm237, %v249, %v251
        %v253 = vrot.slane %v192, 1
        %v254 = vrot.slane %v193, 1
        %v255 = vsel %vm237, %v253, %v254
        %v256 = vrot.slane %v194, 1
        %v257 = vsel %vm237, %v254, %v256
        %v258 = vrot.slane %v195, 1
        %v259 = vrot.slane %v196, 1
        %v260 = vsel %vm237, %v258, %v259
        %v261 = vrot.slane %v197, 1
        %v262 = vsel %vm237, %v259, %v261
        %v263 = vrot.slane %v198, 1
        %v264 = vrot.slane %v199, 1
        %v265 = vsel %vm237, %v263, %v264
        %v266 = vrot.slane %v200, 1
        %v267 = vsel %vm237, %v264, %v266
        %v268 = vrot.slane %v201, 1
        %v269 = vrot.slane %v202, 1
        %v270 = vsel %vm237, %v268, %v269
        %v271 = vrot.slane %v203, 1
        %v272 = vsel %vm237, %v269, %v271
        %v273 = vrot.slane %v204, 1
        %v274 = vrot.slane %v205, 1
        %v275 = vsel %vm237, %v273, %v274
        %v276 = vrot.slane %v206, 1
        %v277 = vsel %vm237, %v274, %v276
        %vm278 = vcmask 1045504
        %v279 = vrot.slane %v183, 2
        %v280 = vrot.slane %v184, 2
        %v281 = vsel %vm278, %v279, %v280
        %v282 = vrot.slane %v185, 2
        %v283 = vsel %vm278, %v280, %v282
        %v284 = vrot.slane %v186, 2
        %v285 = vrot.slane %v187, 2
        %v286 = vsel %vm278, %v284, %v285
        %v287 = vrot.slane %v188, 2
        %v288 = vsel %vm278, %v285, %v287
        %v289 = vrot.slane %v189, 2
        %v290 = vrot.slane %v190, 2
        %v291 = vsel %vm278, %v289, %v290
        %v292 = vrot.slane %v191, 2
        %v293 = vsel %vm278, %v290, %v292
        %v294 = vrot.slane %v192, 2
        %v295 = vrot.slane %v193, 2
        %v296 = vsel %vm278, %v294, %v295
        %v297 = vrot.slane %v194, 2
        %v298 = vsel %vm278, %v295, %v297
        %v299 = vrot.slane %v195, 2
        %v300 = vrot.slane %v196, 2
        %v301 = vsel %vm278, %v299, %v300
        %v302 = vrot.slane %v197, 2
        %v303 = vsel %vm278, %v300, %v302
        %v304 = vrot.slane %v198, 2
        %v305 = vrot.slane %v199, 2
        %v306 = vsel %vm278, %v304, %v305
        %v307 = vrot.slane %v200, 2
        %v308 = vsel %vm278, %v305, %v307
        %v309 = vrot.slane %v201, 2
        %v310 = vrot.slane %v202, 2
        %v311 = vsel %vm278, %v309, %v310
        %v312 = vrot.slane %v203, 2
        %v313 = vsel %vm278, %v310, %v312
        %v314 = vrot.slane %v204, 2
        %v315 = vrot.slane %v205, 2
        %v316 = vsel %vm278, %v314, %v315
        %v317 = vrot.slane %v206, 2
        %v318 = vsel %vm278, %v315, %v317
        %v322 = vrot.slane %v207, 1
        %v323 = vrot.slane %v208, 1
        %v324 = vsel %vm237, %v322, %v323
        %v325 = vrot.slane %v209, 1
        %v326 = vsel %vm237, %v323, %v325
        %v327 = vrot.slane %v207, 2
        %v328 = vrot.slane %v208, 2
        %v329 = vsel %vm278, %v327, %v328
        %v330 = vrot.slane %v209, 2
        %v331 = vsel %vm278, %v328, %v330
        %v335 = vrot.slane %v210, 1
        %v336 = vrot.slane %v211, 1
        %v337 = vsel %vm237, %v335, %v336
        %v338 = vrot.slane %v212, 1
        %v339 = vsel %vm237, %v336, %v338
        %v340 = vrot.slane %v210, 2
        %v341 = vrot.slane %v211, 2
        %v342 = vsel %vm278, %v340, %v341
        %v343 = vrot.slane %v212, 2
        %v344 = vsel %vm278, %v341, %v343
        %v345 = vld [vmem:[%s1] sm:$0x1]
        %v346 = vld [vmem:[%s0] sm:$0xf]
        %s347 = scalar_lea.vmem %s0, 4
        %v348 = vld [vmem:[%s347] sm:$0xf]
        %vm349 = vcmask 31744
        %v350 = vsel %vm349, %v240, 0
        %v352 = vsel %vm349, %v242, 0
        %v354 = vsel %vm349, %v245, 0
        %v356 = vsel %vm349, %v247, 0
        %v358 = vsel %vm349, %v250, 0
        %v360 = vsel %vm349, %v252, 0
        %v362 = vsel %vm349, %v255, 0
        %v364 = vsel %vm349, %v257, 0
        %v366 = vsel %vm349, %v260, 0
        %v368 = vsel %vm349, %v262, 0
        %v370 = vsel %vm349, %v265, 0
        %v372 = vsel %vm349, %v267, 0
        %v374 = vsel %vm349, %v270, 0
        %v376 = vsel %vm349, %v272, 0
        %v378 = vsel %vm349, %v275, 0
        %v380 = vsel %vm349, %v277, 0
        %vm382 = vcmask 1043456
        %v384 = vsel %vm382, %v348, 0
        %386 = vmatprep.subr.mxu0 0.0
        %387 = vmatpush1.msra.mxu0 %v384
        %388 = vmatprep.subr.mxu0 0.0
        %389 = vmatpush1.msra.mxu0 0.0
        %390 = vmatprep.subr.mxu0 0.0
        %391 = vmatpush1.msra.mxu0 0.0
        %392 = vmatprep.subr.mxu0 0.0
        %393 = vmatpush1.msra.mxu0 0.0
        %394 = vmatprep.subr.mxu0 0.0
        %395 = vmatpush1.msra.mxu0 0.0
        %396 = vmatprep.subr.mxu0 0.0
        %397 = vmatpush1.msra.mxu0 0.0
        %398 = vmatprep.subr.mxu0 0.0
        %399 = vmatpush1.msra.mxu0 0.0
        %400 = vmatprep.subr.mxu0 0.0
        %401 = vmatpush1.msra.mxu0 0.0
        %402 = vmatprep.subr.mxu0 0.0
        %403 = vmatpush1.msra.mxu0 0.0
        %404 = vmatprep.subr.mxu0 0.0
        %405 = vmatpush1.msra.mxu0 0.0
        %406 = vmatprep.subr.mxu0 0.0
        %407 = vmatpush1.msra.mxu0 0.0
        %408 = vmatprep.subr.mxu0 0.0
        %409 = vmatpush1.msra.mxu0 0.0
        %410 = vmatprep.subr.mxu0 0.0
        %411 = vmatpush1.msra.mxu0 0.0
        %412 = vmatprep.subr.mxu0 0.0
        %413 = vmatpush1.msra.mxu0 0.0
        %414 = vmatprep.subr.mxu0 0.0
        %415 = vmatpush1.msra.mxu0 0.0
        %416 = vmatprep.subr.mxu0 0.0
        %417 = vmatpush1.msra.mxu0 0.0
        %418 = vmatprep.subr.mxu0 0.0
        %419 = vmatpush1.msra.mxu0 0.0
        %420 = vmatprep.subr.mxu0 0.0
        %421 = vmatpush1.msra.mxu0 0.0
        %422 = vmatprep.subr.mxu0 0.0
        %423 = vmatpush1.msra.mxu0 0.0
        %424 = vmatprep.subr.mxu0 0.0
        %425 = vmatpush1.msra.mxu0 0.0
        %426 = vmatprep.subr.mxu0 0.0
        %427 = vmatpush1.msra.mxu0 0.0
        %428 = vmatprep.subr.mxu0 0.0
        %429 = vmatpush1.msra.mxu0 0.0
        %430 = vmatprep.subr.mxu0 0.0
        %431 = vmatpush1.msra.mxu0 0.0
        %432 = vmatprep.subr.mxu0 0.0
        %433 = vmatpush1.msra.mxu0 0.0
        %434 = vmatprep.subr.mxu0 0.0
        %435 = vmatpush1.msra.mxu0 0.0
        %436 = vmatprep.subr.mxu0 0.0
        %437 = vmatpush1.msra.mxu0 0.0
        %438 = vmatprep.subr.mxu0 0.0
        %439 = vmatpush1.msra.mxu0 0.0
        %440 = vmatprep.subr.mxu0 0.0
        %441 = vmatpush1.msra.mxu0 0.0
        %442 = vmatprep.subr.mxu0 0.0
        %443 = vmatpush1.msra.mxu0 0.0
        %444 = vmatprep.subr.mxu0 0.0
        %445 = vmatpush1.msra.mxu0 0.0
        %446 = vmatprep.subr.mxu0 0.0
        %447 = vmatpush1.msra.mxu0 0.0
        %448 = vmatprep.subr.mxu0 0.0
        %449 = vmatpush1.msra.mxu0 0.0
        %450 = vmatprep.mubr.f32.mxu0 0.0
        %451 = vmatmul.mubr.f32.gmra.mrb[0].mxu0 %v350
        %v452 = vpop.f32.mrb[0].mxu0
        %v453 = vadd.f32 0.0, %v452
        %v454 = vpop.f32.mrb[0].mxu0
        %455 = vmatprep.mubr.f32.mxu0 0.0
        %456 = vmatmul.mubr.f32.gmra.mrb[0].mxu0 %v352
        %v457 = vpop.f32.mrb[0].mxu0
        %v458 = vadd.f32 0.0, %v457
        %v459 = vpop.f32.mrb[0].mxu0
        %460 = vmatprep.mubr.f32.mxu0 0.0
        %461 = vmatmul.mubr.f32.gmra.mrb[0].mxu0 %v354
        %v462 = vpop.f32.mrb[0].mxu0
        %v463 = vadd.f32 0.0, %v462
        %v464 = vpop.f32.mrb[0].mxu0
        %465 = vmatprep.mubr.f32.mxu0 0.0
        %466 = vmatmul.mubr.f32.gmra.mrb[0].mxu0 %v356
        %v467 = vpop.f32.mrb[0].mxu0
        %v468 = vadd.f32 0.0, %v467
        %v469 = vpop.f32.mrb[0].mxu0
        %470 = vmatprep.mubr.f32.mxu0 0.0
        %471 = vmatmul.mubr.f32.gmra.mrb[0].mxu0 %v358
        %v472 = vpop.f32.mrb[0].mxu0
        %v473 = vadd.f32 0.0, %v472
        %v474 = vpop.f32.mrb[0].mxu0
        %475 = vmatprep.mubr.f32.mxu0 0.0
        %476 = vmatmul.mubr.f32.gmra.mrb[0].mxu0 %v360
        %v477 = vpop.f32.mrb[0].mxu0
        %v478 = vadd.f32 0.0, %v477
        %v479 = vpop.f32.mrb[0].mxu0
        %480 = vmatprep.mubr.f32.mxu0 0.0
        %481 = vmatmul.mubr.f32.gmra.mrb[0].mxu0 %v362
        %v482 = vpop.f32.mrb[0].mxu0
        %v483 = vadd.f32 0.0, %v482
        %v484 = vpop.f32.mrb[0].mxu0
        %485 = vmatprep.mubr.f32.mxu0 0.0
        %486 = vmatmul.mubr.f32.gmra.mrb[0].mxu0 %v364
        %v487 = vpop.f32.mrb[0].mxu0
        %v488 = vadd.f32 0.0, %v487
        %v489 = vpop.f32.mrb[0].mxu0
        %490 = vmatprep.mubr.f32.mxu0 0.0
        %491 = vmatmul.mubr.f32.gmra.mrb[0].mxu0 %v366
        %v492 = vpop.f32.mrb[0].mxu0
        %v493 = vadd.f32 0.0, %v492
        %v494 = vpop.f32.mrb[0].mxu0
        %495 = vmatprep.mubr.f32.mxu0 0.0
        %496 = vmatmul.mubr.f32.gmra.mrb[0].mxu0 %v368
        %v497 = vpop.f32.mrb[0].mxu0
        %v498 = vadd.f32 0.0, %v497
        %v499 = vpop.f32.mrb[0].mxu0
        %500 = vmatprep.mubr.f32.mxu0 0.0
        %501 = vmatmul.mubr.f32.gmra.mrb[0].mxu0 %v370
        %v502 = vpop.f32.mrb[0].mxu0
        %v503 = vadd.f32 0.0, %v502
        %v504 = vpop.f32.mrb[0].mxu0
        %505 = vmatprep.mubr.f32.mxu0 0.0
        %506 = vmatmul.mubr.f32.gmra.mrb[0].mxu0 %v372
        %v507 = vpop.f32.mrb[0].mxu0
        %v508 = vadd.f32 0.0, %v507
        %v509 = vpop.f32.mrb[0].mxu0
        %510 = vmatprep.mubr.f32.mxu0 0.0
        %511 = vmatmul.mubr.f32.gmra.mrb[0].mxu0 %v374
        %v512 = vpop.f32.mrb[0].mxu0
        %v513 = vadd.f32 0.0, %v512
        %v514 = vpop.f32.mrb[0].mxu0
        %515 = vmatprep.mubr.f32.mxu0 0.0
        %516 = vmatmul.mubr.f32.gmra.mrb[0].mxu0 %v376
        %v517 = vpop.f32.mrb[0].mxu0
        %v518 = vadd.f32 0.0, %v517
        %v519 = vpop.f32.mrb[0].mxu0
        %520 = vmatprep.mubr.f32.mxu0 0.0
        %521 = vmatmul.mubr.f32.gmra.mrb[0].mxu0 %v378
        %v522 = vpop.f32.mrb[0].mxu0
        %v523 = vadd.f32 0.0, %v522
        %v524 = vpop.f32.mrb[0].mxu0
        %525 = vmatprep.mubr.f32.mxu0 0.0
        %526 = vmatmul.mubr.f32.gmra.mrb[0].mxu0 %v380
        %v527 = vpop.f32.mrb[0].mxu0
        %v528 = vadd.f32 0.0, %v527
        %v529 = vpop.f32.mrb[0].mxu0
        %530 = vdwg.mxu0
        %v531 = vsel %vm349, %v183, 0
        %v533 = vsel %vm349, %v184, 0
        %v535 = vsel %vm349, %v186, 0
        %v537 = vsel %vm349, %v187, 0
        %v539 = vsel %vm349, %v189, 0
        %v541 = vsel %vm349, %v190, 0
        %v543 = vsel %vm349, %v192, 0
        %v545 = vsel %vm349, %v193, 0
        %v547 = vsel %vm349, %v195, 0
        %v549 = vsel %vm349, %v196, 0
        %v551 = vsel %vm349, %v198, 0
        %v553 = vsel %vm349, %v199, 0
        %v555 = vsel %vm349, %v201, 0
        %v557 = vsel %vm349, %v202, 0
        %v559 = vsel %vm349, %v204, 0
        %v561 = vsel %vm349, %v205, 0
        %v564 = vsel %vm382, %v346, 0
        %566 = vmatprep.subr.mxu0 0.0
        %567 = vmatpush1.msra.mxu0 %v564
        %568 = vmatprep.subr.mxu0 0.0
        %569 = vmatpush1.msra.mxu0 0.0
        %570 = vmatprep.subr.mxu0 0.0
        %571 = vmatpush1.msra.mxu0 0.0
        %572 = vmatprep.subr.mxu0 0.0
        %573 = vmatpush1.msra.mxu0 0.0
        %574 = vmatprep.subr.mxu0 0.0
        %575 = vmatpush1.msra.mxu0 0.0
        %576 = vmatprep.subr.mxu0 0.0
        %577 = vmatpush1.msra.mxu0 0.0
        %578 = vmatprep.subr.mxu0 0.0
        %579 = vmatpush1.msra.mxu0 0.0
        %580 = vmatprep.subr.mxu0 0.0
        %581 = vmatpush1.msra.mxu0 0.0
        %582 = vmatprep.subr.mxu0 0.0
        %583 = vmatpush1.msra.mxu0 0.0
        %584 = vmatprep.subr.mxu0 0.0
        %585 = vmatpush1.msra.mxu0 0.0
        %586 = vmatprep.subr.mxu0 0.0
        %587 = vmatpush1.msra.mxu0 0.0
        %588 = vmatprep.subr.mxu0 0.0
        %589 = vmatpush1.msra.mxu0 0.0
        %590 = vmatprep.subr.mxu0 0.0
        %591 = vmatpush1.msra.mxu0 0.0
        %592 = vmatprep.subr.mxu0 0.0
        %593 = vmatpush1.msra.mxu0 0.0
        %594 = vmatprep.subr.mxu0 0.0
        %595 = vmatpush1.msra.mxu0 0.0
        %596 = vmatprep.subr.mxu0 0.0
        %597 = vmatpush1.msra.mxu0 0.0
        %598 = vmatprep.subr.mxu0 0.0
        %599 = vmatpush1.msra.mxu0 0.0
        %600 = vmatprep.subr.mxu0 0.0
        %601 = vmatpush1.msra.mxu0 0.0
        %602 = vmatprep.subr.mxu0 0.0
        %603 = vmatpush1.msra.mxu0 0.0
        %604 = vmatprep.subr.mxu0 0.0
        %605 = vmatpush1.msra.mxu0 0.0
        %606 = vmatprep.subr.mxu0 0.0
        %607 = vmatpush1.msra.mxu0 0.0
        %608 = vmatprep.subr.mxu0 0.0
        %609 = vmatpush1.msra.mxu0 0.0
        %610 = vmatprep.subr.mxu0 0.0
        %611 = vmatpush1.msra.mxu0 0.0
        %612 = vmatprep.subr.mxu0 0.0
        %613 = vmatpush1.msra.mxu0 0.0
        %614 = vmatprep.subr.mxu0 0.0
        %615 = vmatpush1.msra.mxu0 0.0
        %616 = vmatprep.subr.mxu0 0.0
        %617 = vmatpush1.msra.mxu0 0.0
        %618 = vmatprep.subr.mxu0 0.0
        %619 = vmatpush1.msra.mxu0 0.0
        %620 = vmatprep.subr.mxu0 0.0
        %621 = vmatpush1.msra.mxu0 0.0
        %622 = vmatprep.subr.mxu0 0.0
        %623 = vmatpush1.msra.mxu0 0.0
        %624 = vmatprep.subr.mxu0 0.0
        %625 = vmatpush1.msra.mxu0 0.0
        %626 = vmatprep.subr.mxu0 0.0
        %627 = vmatpush1.msra.mxu0 0.0
        %628 = vmatprep.subr.mxu0 0.0
        %629 = vmatpush1.msra.mxu0 0.0
        %630 = vmatprep.mubr.f32.mxu0 0.0
        %631 = vmatmul.mubr.f32.gmra.mrb[0].mxu0 %v531
        %v632 = vpop.f32.mrb[0].mxu0
        %v633 = vadd.f32 %v453, %v632
        %v634 = vpop.f32.mrb[0].mxu0
        %635 = vmatprep.mubr.f32.mxu0 0.0
        %636 = vmatmul.mubr.f32.gmra.mrb[0].mxu0 %v533
        %v637 = vpop.f32.mrb[0].mxu0
        %v638 = vadd.f32 %v458, %v637
        %v639 = vpop.f32.mrb[0].mxu0
        %640 = vmatprep.mubr.f32.mxu0 0.0
        %641 = vmatmul.mubr.f32.gmra.mrb[0].mxu0 %v535
        %v642 = vpop.f32.mrb[0].mxu0
        %v643 = vadd.f32 %v463, %v642
        %v644 = vpop.f32.mrb[0].mxu0
        %645 = vmatprep.mubr.f32.mxu0 0.0
        %646 = vmatmul.mubr.f32.gmra.mrb[0].mxu0 %v537
        %v647 = vpop.f32.mrb[0].mxu0
        %v648 = vadd.f32 %v468, %v647
        %v649 = vpop.f32.mrb[0].mxu0
        %650 = vmatprep.mubr.f32.mxu0 0.0
        %651 = vmatmul.mubr.f32.gmra.mrb[0].mxu0 %v539
        %v652 = vpop.f32.mrb[0].mxu0
        %v653 = vadd.f32 %v473, %v652
        %v654 = vpop.f32.mrb[0].mxu0
        %655 = vmatprep.mubr.f32.mxu0 0.0
        %656 = vmatmul.mubr.f32.gmra.mrb[0].mxu0 %v541
        %v657 = vpop.f32.mrb[0].mxu0
        %v658 = vadd.f32 %v478, %v657
        %v659 = vpop.f32.mrb[0].mxu0
        %660 = vmatprep.mubr.f32.mxu0 0.0
        %661 = vmatmul.mubr.f32.gmra.mrb[0].mxu0 %v543
        %v662 = vpop.f32.mrb[0].mxu0
        %v663 = vadd.f32 %v483, %v662
        %v664 = vpop.f32.mrb[0].mxu0
        %665 = vmatprep.mubr.f32.mxu0 0.0
        %666 = vmatmul.mubr.f32.gmra.mrb[0].mxu0 %v545
        %v667 = vpop.f32.mrb[0].mxu0
        %v668 = vadd.f32 %v488, %v667
        %v669 = vpop.f32.mrb[0].mxu0
        %670 = vmatprep.mubr.f32.mxu0 0.0
        %671 = vmatmul.mubr.f32.gmra.mrb[0].mxu0 %v547
        %v672 = vpop.f32.mrb[0].mxu0
        %v673 = vadd.f32 %v493, %v672
        %v674 = vpop.f32.mrb[0].mxu0
        %675 = vmatprep.mubr.f32.mxu0 0.0
        %676 = vmatmul.mubr.f32.gmra.mrb[0].mxu0 %v549
        %v677 = vpop.f32.mrb[0].mxu0
        %v678 = vadd.f32 %v498, %v677
        %v679 = vpop.f32.mrb[0].mxu0
        %680 = vmatprep.mubr.f32.mxu0 0.0
        %681 = vmatmul.mubr.f32.gmra.mrb[0].mxu0 %v551
        %v682 = vpop.f32.mrb[0].mxu0
        %v683 = vadd.f32 %v503, %v682
        %v684 = vpop.f32.mrb[0].mxu0
        %685 = vmatprep.mubr.f32.mxu0 0.0
        %686 = vmatmul.mubr.f32.gmra.mrb[0].mxu0 %v553
        %v687 = vpop.f32.mrb[0].mxu0
        %v688 = vadd.f32 %v508, %v687
        %v689 = vpop.f32.mrb[0].mxu0
        %690 = vmatprep.mubr.f32.mxu0 0.0
        %691 = vmatmul.mubr.f32.gmra.mrb[0].mxu0 %v555
        %v692 = vpop.f32.mrb[0].mxu0
        %v693 = vadd.f32 %v513, %v692
        %v694 = vpop.f32.mrb[0].mxu0
        %695 = vmatprep.mubr.f32.mxu0 0.0
        %696 = vmatmul.mubr.f32.gmra.mrb[0].mxu0 %v557
        %v697 = vpop.f32.mrb[0].mxu0
        %v698 = vadd.f32 %v518, %v697
        %v699 = vpop.f32.mrb[0].mxu0
        %700 = vmatprep.mubr.f32.mxu0 0.0
        %701 = vmatmul.mubr.f32.gmra.mrb[0].mxu0 %v559
        %v702 = vpop.f32.mrb[0].mxu0
        %v703 = vadd.f32 %v523, %v702
        %v704 = vpop.f32.mrb[0].mxu0
        %705 = vmatprep.mubr.f32.mxu0 0.0
        %706 = vmatmul.mubr.f32.gmra.mrb[0].mxu0 %v561
        %v707 = vpop.f32.mrb[0].mxu0
        %v708 = vadd.f32 %v528, %v707
        %v709 = vpop.f32.mrb[0].mxu0
        %710 = vdwg.mxu0
        %s711 = scalar_lea.vmem %s0, 8
        %v712 = vld [vmem:[%s711] sm:$0xf]
        %v713 = vsel %vm349, %v207, 0
        %v715 = vsel %vm349, %v208, 0
        %v718 = vsel %vm382, %v712, 0
        %720 = vmatprep.subr.mxu0 0.0
        %721 = vmatpush1.msra.mxu0 %v718
        %722 = vmatprep.subr.mxu0 0.0
        %723 = vmatpush1.msra.mxu0 0.0
        %724 = vmatprep.subr.mxu0 0.0
        %725 = vmatpush1.msra.mxu0 0.0
        %726 = vmatprep.subr.mxu0 0.0
        %727 = vmatpush1.msra.mxu0 0.0
        %728 = vmatprep.subr.mxu0 0.0
        %729 = vmatpush1.msra.mxu0 0.0
        %730 = vmatprep.subr.mxu0 0.0
        %731 = vmatpush1.msra.mxu0 0.0
        %732 = vmatprep.subr.mxu0 0.0
        %733 = vmatpush1.msra.mxu0 0.0
        %734 = vmatprep.subr.mxu0 0.0
        %735 = vmatpush1.msra.mxu0 0.0
        %736 = vmatprep.subr.mxu0 0.0
        %737 = vmatpush1.msra.mxu0 0.0
        %738 = vmatprep.subr.mxu0 0.0
        %739 = vmatpush1.msra.mxu0 0.0
        %740 = vmatprep.subr.mxu0 0.0
        %741 = vmatpush1.msra.mxu0 0.0
        %742 = vmatprep.subr.mxu0 0.0
        %743 = vmatpush1.msra.mxu0 0.0
        %744 = vmatprep.subr.mxu0 0.0
        %745 = vmatpush1.msra.mxu0 0.0
        %746 = vmatprep.subr.mxu0 0.0
        %747 = vmatpush1.msra.mxu0 0.0
        %748 = vmatprep.subr.mxu0 0.0
        %749 = vmatpush1.msra.mxu0 0.0
        %750 = vmatprep.subr.mxu0 0.0
        %751 = vmatpush1.msra.mxu0 0.0
        %752 = vmatprep.subr.mxu0 0.0
        %753 = vmatpush1.msra.mxu0 0.0
        %754 = vmatprep.subr.mxu0 0.0
        %755 = vmatpush1.msra.mxu0 0.0
        %756 = vmatprep.subr.mxu0 0.0
        %757 = vmatpush1.msra.mxu0 0.0
        %758 = vmatprep.subr.mxu0 0.0
        %759 = vmatpush1.msra.mxu0 0.0
        %760 = vmatprep.subr.mxu0 0.0
        %761 = vmatpush1.msra.mxu0 0.0
        %762 = vmatprep.subr.mxu0 0.0
        %763 = vmatpush1.msra.mxu0 0.0
        %764 = vmatprep.subr.mxu0 0.0
        %765 = vmatpush1.msra.mxu0 0.0
        %766 = vmatprep.subr.mxu0 0.0
        %767 = vmatpush1.msra.mxu0 0.0
        %768 = vmatprep.subr.mxu0 0.0
        %769 = vmatpush1.msra.mxu0 0.0
        %770 = vmatprep.subr.mxu0 0.0
        %771 = vmatpush1.msra.mxu0 0.0
        %772 = vmatprep.subr.mxu0 0.0
        %773 = vmatpush1.msra.mxu0 0.0
        %774 = vmatprep.subr.mxu0 0.0
        %775 = vmatpush1.msra.mxu0 0.0
        %776 = vmatprep.subr.mxu0 0.0
        %777 = vmatpush1.msra.mxu0 0.0
        %778 = vmatprep.subr.mxu0 0.0
        %779 = vmatpush1.msra.mxu0 0.0
        %780 = vmatprep.subr.mxu0 0.0
        %781 = vmatpush1.msra.mxu0 0.0
        %782 = vmatprep.subr.mxu0 0.0
        %783 = vmatpush1.msra.mxu0 0.0
        %784 = vmatprep.mubr.f32.mxu0 0.0
        %785 = vmatmul.mubr.f32.gmra.mrb[0].mxu0 %v535
        %v786 = vpop.f32.mrb[0].mxu0
        %v787 = vadd.f32 0.0, %v786
        %v788 = vpop.f32.mrb[0].mxu0
        %789 = vmatprep.mubr.f32.mxu0 0.0
        %790 = vmatmul.mubr.f32.gmra.mrb[0].mxu0 %v537
        %v791 = vpop.f32.mrb[0].mxu0
        %v792 = vadd.f32 0.0, %v791
        %v793 = vpop.f32.mrb[0].mxu0
        %794 = vmatprep.mubr.f32.mxu0 0.0
        %795 = vmatmul.mubr.f32.gmra.mrb[0].mxu0 %v539
        %v796 = vpop.f32.mrb[0].mxu0
        %v797 = vadd.f32 0.0, %v796
        %v798 = vpop.f32.mrb[0].mxu0
        %799 = vmatprep.mubr.f32.mxu0 0.0
        %800 = vmatmul.mubr.f32.gmra.mrb[0].mxu0 %v541
        %v801 = vpop.f32.mrb[0].mxu0
        %v802 = vadd.f32 0.0, %v801
        %v803 = vpop.f32.mrb[0].mxu0
        %804 = vmatprep.mubr.f32.mxu0 0.0
        %805 = vmatmul.mubr.f32.gmra.mrb[0].mxu0 %v543
        %v806 = vpop.f32.mrb[0].mxu0
        %v807 = vadd.f32 0.0, %v806
        %v808 = vpop.f32.mrb[0].mxu0
        %809 = vmatprep.mubr.f32.mxu0 0.0
        %810 = vmatmul.mubr.f32.gmra.mrb[0].mxu0 %v545
        %v811 = vpop.f32.mrb[0].mxu0
        %v812 = vadd.f32 0.0, %v811
        %v813 = vpop.f32.mrb[0].mxu0
        %814 = vmatprep.mubr.f32.mxu0 0.0
        %815 = vmatmul.mubr.f32.gmra.mrb[0].mxu0 %v547
        %v816 = vpop.f32.mrb[0].mxu0
        %v817 = vadd.f32 0.0, %v816
        %v818 = vpop.f32.mrb[0].mxu0
        %819 = vmatprep.mubr.f32.mxu0 0.0
        %820 = vmatmul.mubr.f32.gmra.mrb[0].mxu0 %v549
        %v821 = vpop.f32.mrb[0].mxu0
        %v822 = vadd.f32 0.0, %v821
        %v823 = vpop.f32.mrb[0].mxu0
        %824 = vmatprep.mubr.f32.mxu0 0.0
        %825 = vmatmul.mubr.f32.gmra.mrb[0].mxu0 %v551
        %v826 = vpop.f32.mrb[0].mxu0
        %v827 = vadd.f32 0.0, %v826
        %v828 = vpop.f32.mrb[0].mxu0
        %829 = vmatprep.mubr.f32.mxu0 0.0
        %830 = vmatmul.mubr.f32.gmra.mrb[0].mxu0 %v553
        %v831 = vpop.f32.mrb[0].mxu0
        %v832 = vadd.f32 0.0, %v831
        %v833 = vpop.f32.mrb[0].mxu0
        %834 = vmatprep.mubr.f32.mxu0 0.0
        %835 = vmatmul.mubr.f32.gmra.mrb[0].mxu0 %v555
        %v836 = vpop.f32.mrb[0].mxu0
        %v837 = vadd.f32 0.0, %v836
        %v838 = vpop.f32.mrb[0].mxu0
        %839 = vmatprep.mubr.f32.mxu0 0.0
        %840 = vmatmul.mubr.f32.gmra.mrb[0].mxu0 %v557
        %v841 = vpop.f32.mrb[0].mxu0
        %v842 = vadd.f32 0.0, %v841
        %v843 = vpop.f32.mrb[0].mxu0
        %844 = vmatprep.mubr.f32.mxu0 0.0
        %845 = vmatmul.mubr.f32.gmra.mrb[0].mxu0 %v559
        %v846 = vpop.f32.mrb[0].mxu0
        %v847 = vadd.f32 0.0, %v846
        %v848 = vpop.f32.mrb[0].mxu0
        %849 = vmatprep.mubr.f32.mxu0 0.0
        %850 = vmatmul.mubr.f32.gmra.mrb[0].mxu0 %v561
        %v851 = vpop.f32.mrb[0].mxu0
        %v852 = vadd.f32 0.0, %v851
        %v853 = vpop.f32.mrb[0].mxu0
        %854 = vmatprep.mubr.f32.mxu0 0.0
        %855 = vmatmul.mubr.f32.gmra.mrb[0].mxu0 %v713
        %v856 = vpop.f32.mrb[0].mxu0
        %v857 = vadd.f32 0.0, %v856
        %v858 = vpop.f32.mrb[0].mxu0
        %859 = vmatprep.mubr.f32.mxu0 0.0
        %860 = vmatmul.mubr.f32.gmra.mrb[0].mxu0 %v715
        %v861 = vpop.f32.mrb[0].mxu0
        %v862 = vadd.f32 0.0, %v861
        %v863 = vpop.f32.mrb[0].mxu0
        %864 = vdwg.mxu0
        %v865 = vadd.f32 %v633, %v787
        %v866 = vadd.f32 %v638, %v792
        %v867 = vadd.f32 %v643, %v797
        %v868 = vadd.f32 %v648, %v802
        %v869 = vadd.f32 %v653, %v807
        %v870 = vadd.f32 %v658, %v812
        %v871 = vadd.f32 %v663, %v817
        %v872 = vadd.f32 %v668, %v822
        %v873 = vadd.f32 %v673, %v827
        %v874 = vadd.f32 %v678, %v832
        %v875 = vadd.f32 %v683, %v837
        %v876 = vadd.f32 %v688, %v842
        %v877 = vadd.f32 %v693, %v847
        %v878 = vadd.f32 %v698, %v852
        %v879 = vadd.f32 %v703, %v857
        %v880 = vadd.f32 %v708, %v862
        %s881 = scalar_lea.vmem %s0, 12
        %v882 = vld [vmem:[%s881] sm:$0xf]
        %v883 = vsel %vm349, %v324, 0
        %v885 = vsel %vm349, %v326, 0
        %v888 = vsel %vm382, %v882, 0
        %890 = vmatprep.subr.mxu0 0.0
        %891 = vmatpush1.msra.mxu0 %v888
        %892 = vmatprep.subr.mxu0 0.0
        %893 = vmatpush1.msra.mxu0 0.0
        %894 = vmatprep.subr.mxu0 0.0
        %895 = vmatpush1.msra.mxu0 0.0
        %896 = vmatprep.subr.mxu0 0.0
        %897 = vmatpush1.msra.mxu0 0.0
        %898 = vmatprep.subr.mxu0 0.0
        %899 = vmatpush1.msra.mxu0 0.0
        %900 = vmatprep.subr.mxu0 0.0
        %901 = vmatpush1.msra.mxu0 0.0
        %902 = vmatprep.subr.mxu0 0.0
        %903 = vmatpush1.msra.mxu0 0.0
        %904 = vmatprep.subr.mxu0 0.0
        %905 = vmatpush1.msra.mxu0 0.0
        %906 = vmatprep.subr.mxu0 0.0
        %907 = vmatpush1.msra.mxu0 0.0
        %908 = vmatprep.subr.mxu0 0.0
        %909 = vmatpush1.msra.mxu0 0.0
        %910 = vmatprep.subr.mxu0 0.0
        %911 = vmatpush1.msra.mxu0 0.0
        %912 = vmatprep.subr.mxu0 0.0
        %913 = vmatpush1.msra.mxu0 0.0
        %914 = vmatprep.subr.mxu0 0.0
        %915 = vmatpush1.msra.mxu0 0.0
        %916 = vmatprep.subr.mxu0 0.0
        %917 = vmatpush1.msra.mxu0 0.0
        %918 = vmatprep.subr.mxu0 0.0
        %919 = vmatpush1.msra.mxu0 0.0
        %920 = vmatprep.subr.mxu0 0.0
        %921 = vmatpush1.msra.mxu0 0.0
        %922 = vmatprep.subr.mxu0 0.0
        %923 = vmatpush1.msra.mxu0 0.0
        %924 = vmatprep.subr.mxu0 0.0
        %925 = vmatpush1.msra.mxu0 0.0
        %926 = vmatprep.subr.mxu0 0.0
        %927 = vmatpush1.msra.mxu0 0.0
        %928 = vmatprep.subr.mxu0 0.0
        %929 = vmatpush1.msra.mxu0 0.0
        %930 = vmatprep.subr.mxu0 0.0
        %931 = vmatpush1.msra.mxu0 0.0
        %932 = vmatprep.subr.mxu0 0.0
        %933 = vmatpush1.msra.mxu0 0.0
        %934 = vmatprep.subr.mxu0 0.0
        %935 = vmatpush1.msra.mxu0 0.0
        %936 = vmatprep.subr.mxu0 0.0
        %937 = vmatpush1.msra.mxu0 0.0
        %938 = vmatprep.subr.mxu0 0.0
        %939 = vmatpush1.msra.mxu0 0.0
        %940 = vmatprep.subr.mxu0 0.0
        %941 = vmatpush1.msra.mxu0 0.0
        %942 = vmatprep.subr.mxu0 0.0
        %943 = vmatpush1.msra.mxu0 0.0
        %944 = vmatprep.subr.mxu0 0.0
        %945 = vmatpush1.msra.mxu0 0.0
        %946 = vmatprep.subr.mxu0 0.0
        %947 = vmatpush1.msra.mxu0 0.0
        %948 = vmatprep.subr.mxu0 0.0
        %949 = vmatpush1.msra.mxu0 0.0
        %950 = vmatprep.subr.mxu0 0.0
        %951 = vmatpush1.msra.mxu0 0.0
        %952 = vmatprep.subr.mxu0 0.0
        %953 = vmatpush1.msra.mxu0 0.0
        %954 = vmatprep.mubr.f32.mxu0 0.0
        %955 = vmatmul.mubr.f32.gmra.mrb[0].mxu0 %v354
        %v956 = vpop.f32.mrb[0].mxu0
        %v957 = vadd.f32 0.0, %v956
        %v958 = vpop.f32.mrb[0].mxu0
        %959 = vmatprep.mubr.f32.mxu0 0.0
        %960 = vmatmul.mubr.f32.gmra.mrb[0].mxu0 %v356
        %v961 = vpop.f32.mrb[0].mxu0
        %v962 = vadd.f32 0.0, %v961
        %v963 = vpop.f32.mrb[0].mxu0
        %964 = vmatprep.mubr.f32.mxu0 0.0
        %965 = vmatmul.mubr.f32.gmra.mrb[0].mxu0 %v358
        %v966 = vpop.f32.mrb[0].mxu0
        %v967 = vadd.f32 0.0, %v966
        %v968 = vpop.f32.mrb[0].mxu0
        %969 = vmatprep.mubr.f32.mxu0 0.0
        %970 = vmatmul.mubr.f32.gmra.mrb[0].mxu0 %v360
        %v971 = vpop.f32.mrb[0].mxu0
        %v972 = vadd.f32 0.0, %v971
        %v973 = vpop.f32.mrb[0].mxu0
        %974 = vmatprep.mubr.f32.mxu0 0.0
        %975 = vmatmul.mubr.f32.gmra.mrb[0].mxu0 %v362
        %v976 = vpop.f32.mrb[0].mxu0
        %v977 = vadd.f32 0.0, %v976
        %v978 = vpop.f32.mrb[0].mxu0
        %979 = vmatprep.mubr.f32.mxu0 0.0
        %980 = vmatmul.mubr.f32.gmra.mrb[0].mxu0 %v364
        %v981 = vpop.f32.mrb[0].mxu0
        %v982 = vadd.f32 0.0, %v981
        %v983 = vpop.f32.mrb[0].mxu0
        %984 = vmatprep.mubr.f32.mxu0 0.0
        %985 = vmatmul.mubr.f32.gmra.mrb[0].mxu0 %v366
        %v986 = vpop.f32.mrb[0].mxu0
        %v987 = vadd.f32 0.0, %v986
        %v988 = vpop.f32.mrb[0].mxu0
        %989 = vmatprep.mubr.f32.mxu0 0.0
        %990 = vmatmul.mubr.f32.gmra.mrb[0].mxu0 %v368
        %v991 = vpop.f32.mrb[0].mxu0
        %v992 = vadd.f32 0.0, %v991
        %v993 = vpop.f32.mrb[0].mxu0
        %994 = vmatprep.mubr.f32.mxu0 0.0
        %995 = vmatmul.mubr.f32.gmra.mrb[0].mxu0 %v370
        %v996 = vpop.f32.mrb[0].mxu0
        %v997 = vadd.f32 0.0, %v996
        %v998 = vpop.f32.mrb[0].mxu0
        %999 = vmatprep.mubr.f32.mxu0 0.0
        %1000 = vmatmul.mubr.f32.gmra.mrb[0].mxu0 %v372
        %v1001 = vpop.f32.mrb[0].mxu0
        %v1002 = vadd.f32 0.0, %v1001
        %v1003 = vpop.f32.mrb[0].mxu0
        %1004 = vmatprep.mubr.f32.mxu0 0.0
        %1005 = vmatmul.mubr.f32.gmra.mrb[0].mxu0 %v374
        %v1006 = vpop.f32.mrb[0].mxu0
        %v1007 = vadd.f32 0.0, %v1006
        %v1008 = vpop.f32.mrb[0].mxu0
        %1009 = vmatprep.mubr.f32.mxu0 0.0
        %1010 = vmatmul.mubr.f32.gmra.mrb[0].mxu0 %v376
        %v1011 = vpop.f32.mrb[0].mxu0
        %v1012 = vadd.f32 0.0, %v1011
        %v1013 = vpop.f32.mrb[0].mxu0
        %1014 = vmatprep.mubr.f32.mxu0 0.0
        %1015 = vmatmul.mubr.f32.gmra.mrb[0].mxu0 %v378
        %v1016 = vpop.f32.mrb[0].mxu0
        %v1017 = vadd.f32 0.0, %v1016
        %v1018 = vpop.f32.mrb[0].mxu0
        %1019 = vmatprep.mubr.f32.mxu0 0.0
        %1020 = vmatmul.mubr.f32.gmra.mrb[0].mxu0 %v380
        %v1021 = vpop.f32.mrb[0].mxu0
        %v1022 = vadd.f32 0.0, %v1021
        %v1023 = vpop.f32.mrb[0].mxu0
        %1024 = vmatprep.mubr.f32.mxu0 0.0
        %1025 = vmatmul.mubr.f32.gmra.mrb[0].mxu0 %v883
        %v1026 = vpop.f32.mrb[0].mxu0
        %v1027 = vadd.f32 0.0, %v1026
        %v1028 = vpop.f32.mrb[0].mxu0
        %1029 = vmatprep.mubr.f32.mxu0 0.0
        %1030 = vmatmul.mubr.f32.gmra.mrb[0].mxu0 %v885
        %v1031 = vpop.f32.mrb[0].mxu0
        %v1032 = vadd.f32 0.0, %v1031
        %v1033 = vpop.f32.mrb[0].mxu0
        %1034 = vdwg.mxu0
        %v1035 = vadd.f32 %v865, %v957
        %v1036 = vadd.f32 %v866, %v962
        %v1037 = vadd.f32 %v867, %v967
        %v1038 = vadd.f32 %v868, %v972
        %v1039 = vadd.f32 %v869, %v977
        %v1040 = vadd.f32 %v870, %v982
        %v1041 = vadd.f32 %v871, %v987
        %v1042 = vadd.f32 %v872, %v992
        %v1043 = vadd.f32 %v873, %v997
        %v1044 = vadd.f32 %v874, %v1002
        %v1045 = vadd.f32 %v875, %v1007
        %v1046 = vadd.f32 %v876, %v1012
        %v1047 = vadd.f32 %v877, %v1017
        %v1048 = vadd.f32 %v878, %v1022
        %v1049 = vadd.f32 %v879, %v1027
        %v1050 = vadd.f32 %v880, %v1032
        %v1052 = vlaneseq
        %v1053 = vshrl.u32 %v1052, 7
        %v1054 = vsub.s32 0, %v1053
        %v1055 = vrot.slane %v345, %v1054
        %v1057 = vadd.f32 %v1035, %v1055
        %v1058 = vadd.f32 %v1036, %v1055
        %v1059 = vadd.f32 %v1037, %v1055
        %v1060 = vadd.f32 %v1038, %v1055
        %v1061 = vadd.f32 %v1039, %v1055
        %v1062 = vadd.f32 %v1040, %v1055
        %v1063 = vadd.f32 %v1041, %v1055
        %v1064 = vadd.f32 %v1042, %v1055
        %v1065 = vadd.f32 %v1043, %v1055
        %v1066 = vadd.f32 %v1044, %v1055
        %v1067 = vadd.f32 %v1045, %v1055
        %v1068 = vadd.f32 %v1046, %v1055
        %v1069 = vadd.f32 %v1047, %v1055
        %v1070 = vadd.f32 %v1048, %v1055
        %v1071 = vadd.f32 %v1049, %v1055
        %v1072 = vadd.f32 %v1050, %v1055
        %1073 = vst.msk [vmem:[%s173] sm:$0xff] %vm349, %v1057
        %1074 = vst.msk [vmem:[%s173 + $0x8] sm:$0xff] %vm349, %v1058
        %1075 = vst.msk [vmem:[%s173 + $0x10] sm:$0xff] %vm349, %v1059
        %1076 = vst.msk [vmem:[%s173 + $0x18] sm:$0xff] %vm349, %v1060
        %1077 = vst.msk [vmem:[%s173 + $0x20] sm:$0xff] %vm349, %v1061
        %1078 = vst.msk [vmem:[%s173 + $0x28] sm:$0xff] %vm349, %v1062
        %1079 = vst.msk [vmem:[%s173 + $0x30] sm:$0xff] %vm349, %v1063
        %1080 = vst.msk [vmem:[%s173 + $0x38] sm:$0xff] %vm349, %v1064
        %1081 = vst.msk [vmem:[%s173 + $0x40] sm:$0xff] %vm349, %v1065
        %1082 = vst.msk [vmem:[%s173 + $0x48] sm:$0xff] %vm349, %v1066
        %1083 = vst.msk [vmem:[%s173 + $0x50] sm:$0xff] %vm349, %v1067
        %1084 = vst.msk [vmem:[%s173 + $0x58] sm:$0xff] %vm349, %v1068
        %1085 = vst.msk [vmem:[%s173 + $0x60] sm:$0xff] %vm349, %v1069
        %1086 = vst.msk [vmem:[%s173 + $0x68] sm:$0xff] %vm349, %v1070
        %1087 = vst.msk [vmem:[%s173 + $0x70] sm:$0xff] %vm349, %v1071
        %1088 = vst.msk [vmem:[%s173 + $0x78] sm:$0xff] %vm349, %v1072
        %s1089 = scalar_lea.vmem %s0, 16
        %v1090 = vld [vmem:[%s1089] sm:$0xf]
        %s1091 = scalar_lea.vmem %s0, 20
        %v1092 = vld [vmem:[%s1091] sm:$0xf]
        %v1093 = vsel %vm349, %v281, 0
        %v1095 = vsel %vm349, %v283, 0
        %v1097 = vsel %vm349, %v286, 0
        %v1099 = vsel %vm349, %v288, 0
        %v1101 = vsel %vm349, %v291, 0
        %v1103 = vsel %vm349, %v293, 0
        %v1105 = vsel %vm349, %v296, 0
        %v1107 = vsel %vm349, %v298, 0
        %v1109 = vsel %vm349, %v301, 0
        %v1111 = vsel %vm349, %v303, 0
        %v1113 = vsel %vm349, %v306, 0
        %v1115 = vsel %vm349, %v308, 0
        %v1117 = vsel %vm349, %v311, 0
        %v1119 = vsel %vm349, %v313, 0
        %v1121 = vsel %vm349, %v316, 0
        %v1123 = vsel %vm349, %v318, 0
        %v1126 = vsel %vm382, %v1092, 0
        %1128 = vmatprep.subr.mxu0 0.0
        %1129 = vmatpush1.msra.mxu0 %v1126
        %1130 = vmatprep.subr.mxu0 0.0
        %1131 = vmatpush1.msra.mxu0 0.0
        %1132 = vmatprep.subr.mxu0 0.0
        %1133 = vmatpush1.msra.mxu0 0.0
        %1134 = vmatprep.subr.mxu0 0.0
        %1135 = vmatpush1.msra.mxu0 0.0
        %1136 = vmatprep.subr.mxu0 0.0
        %1137 = vmatpush1.msra.mxu0 0.0
        %1138 = vmatprep.subr.mxu0 0.0
        %1139 = vmatpush1.msra.mxu0 0.0
        %1140 = vmatprep.subr.mxu0 0.0
        %1141 = vmatpush1.msra.mxu0 0.0
        %1142 = vmatprep.subr.mxu0 0.0
        %1143 = vmatpush1.msra.mxu0 0.0
        %1144 = vmatprep.subr.mxu0 0.0
        %1145 = vmatpush1.msra.mxu0 0.0
        %1146 = vmatprep.subr.mxu0 0.0
        %1147 = vmatpush1.msra.mxu0 0.0
        %1148 = vmatprep.subr.mxu0 0.0
        %1149 = vmatpush1.msra.mxu0 0.0
        %1150 = vmatprep.subr.mxu0 0.0
        %1151 = vmatpush1.msra.mxu0 0.0
        %1152 = vmatprep.subr.mxu0 0.0
        %1153 = vmatpush1.msra.mxu0 0.0
        %1154 = vmatprep.subr.mxu0 0.0
        %1155 = vmatpush1.msra.mxu0 0.0
        %1156 = vmatprep.subr.mxu0 0.0
        %1157 = vmatpush1.msra.mxu0 0.0
        %1158 = vmatprep.subr.mxu0 0.0
        %1159 = vmatpush1.msra.mxu0 0.0
        %1160 = vmatprep.subr.mxu0 0.0
        %1161 = vmatpush1.msra.mxu0 0.0
        %1162 = vmatprep.subr.mxu0 0.0
        %1163 = vmatpush1.msra.mxu0 0.0
        %1164 = vmatprep.subr.mxu0 0.0
        %1165 = vmatpush1.msra.mxu0 0.0
        %1166 = vmatprep.subr.mxu0 0.0
        %1167 = vmatpush1.msra.mxu0 0.0
        %1168 = vmatprep.subr.mxu0 0.0
        %1169 = vmatpush1.msra.mxu0 0.0
        %1170 = vmatprep.subr.mxu0 0.0
        %1171 = vmatpush1.msra.mxu0 0.0
        %1172 = vmatprep.subr.mxu0 0.0
        %1173 = vmatpush1.msra.mxu0 0.0
        %1174 = vmatprep.subr.mxu0 0.0
        %1175 = vmatpush1.msra.mxu0 0.0
        %1176 = vmatprep.subr.mxu0 0.0
        %1177 = vmatpush1.msra.mxu0 0.0
        %1178 = vmatprep.subr.mxu0 0.0
        %1179 = vmatpush1.msra.mxu0 0.0
        %1180 = vmatprep.subr.mxu0 0.0
        %1181 = vmatpush1.msra.mxu0 0.0
        %1182 = vmatprep.subr.mxu0 0.0
        %1183 = vmatpush1.msra.mxu0 0.0
        %1184 = vmatprep.subr.mxu0 0.0
        %1185 = vmatpush1.msra.mxu0 0.0
        %1186 = vmatprep.subr.mxu0 0.0
        %1187 = vmatpush1.msra.mxu0 0.0
        %1188 = vmatprep.subr.mxu0 0.0
        %1189 = vmatpush1.msra.mxu0 0.0
        %1190 = vmatprep.subr.mxu0 0.0
        %1191 = vmatpush1.msra.mxu0 0.0
        %1192 = vmatprep.mubr.f32.mxu0 0.0
        %1193 = vmatmul.mubr.f32.gmra.mrb[0].mxu0 %v1093
        %v1194 = vpop.f32.mrb[0].mxu0
        %v1195 = vadd.f32 0.0, %v1194
        %v1196 = vpop.f32.mrb[0].mxu0
        %1197 = vmatprep.mubr.f32.mxu0 0.0
        %1198 = vmatmul.mubr.f32.gmra.mrb[0].mxu0 %v1095
        %v1199 = vpop.f32.mrb[0].mxu0
        %v1200 = vadd.f32 0.0, %v1199
        %v1201 = vpop.f32.mrb[0].mxu0
        %1202 = vmatprep.mubr.f32.mxu0 0.0
        %1203 = vmatmul.mubr.f32.gmra.mrb[0].mxu0 %v1097
        %v1204 = vpop.f32.mrb[0].mxu0
        %v1205 = vadd.f32 0.0, %v1204
        %v1206 = vpop.f32.mrb[0].mxu0
        %1207 = vmatprep.mubr.f32.mxu0 0.0
        %1208 = vmatmul.mubr.f32.gmra.mrb[0].mxu0 %v1099
        %v1209 = vpop.f32.mrb[0].mxu0
        %v1210 = vadd.f32 0.0, %v1209
        %v1211 = vpop.f32.mrb[0].mxu0
        %1212 = vmatprep.mubr.f32.mxu0 0.0
        %1213 = vmatmul.mubr.f32.gmra.mrb[0].mxu0 %v1101
        %v1214 = vpop.f32.mrb[0].mxu0
        %v1215 = vadd.f32 0.0, %v1214
        %v1216 = vpop.f32.mrb[0].mxu0
        %1217 = vmatprep.mubr.f32.mxu0 0.0
        %1218 = vmatmul.mubr.f32.gmra.mrb[0].mxu0 %v1103
        %v1219 = vpop.f32.mrb[0].mxu0
        %v1220 = vadd.f32 0.0, %v1219
        %v1221 = vpop.f32.mrb[0].mxu0
        %1222 = vmatprep.mubr.f32.mxu0 0.0
        %1223 = vmatmul.mubr.f32.gmra.mrb[0].mxu0 %v1105
        %v1224 = vpop.f32.mrb[0].mxu0
        %v1225 = vadd.f32 0.0, %v1224
        %v1226 = vpop.f32.mrb[0].mxu0
        %1227 = vmatprep.mubr.f32.mxu0 0.0
        %1228 = vmatmul.mubr.f32.gmra.mrb[0].mxu0 %v1107
        %v1229 = vpop.f32.mrb[0].mxu0
        %v1230 = vadd.f32 0.0, %v1229
        %v1231 = vpop.f32.mrb[0].mxu0
        %1232 = vmatprep.mubr.f32.mxu0 0.0
        %1233 = vmatmul.mubr.f32.gmra.mrb[0].mxu0 %v1109
        %v1234 = vpop.f32.mrb[0].mxu0
        %v1235 = vadd.f32 0.0, %v1234
        %v1236 = vpop.f32.mrb[0].mxu0
        %1237 = vmatprep.mubr.f32.mxu0 0.0
        %1238 = vmatmul.mubr.f32.gmra.mrb[0].mxu0 %v1111
        %v1239 = vpop.f32.mrb[0].mxu0
        %v1240 = vadd.f32 0.0, %v1239
        %v1241 = vpop.f32.mrb[0].mxu0
        %1242 = vmatprep.mubr.f32.mxu0 0.0
        %1243 = vmatmul.mubr.f32.gmra.mrb[0].mxu0 %v1113
        %v1244 = vpop.f32.mrb[0].mxu0
        %v1245 = vadd.f32 0.0, %v1244
        %v1246 = vpop.f32.mrb[0].mxu0
        %1247 = vmatprep.mubr.f32.mxu0 0.0
        %1248 = vmatmul.mubr.f32.gmra.mrb[0].mxu0 %v1115
        %v1249 = vpop.f32.mrb[0].mxu0
        %v1250 = vadd.f32 0.0, %v1249
        %v1251 = vpop.f32.mrb[0].mxu0
        %1252 = vmatprep.mubr.f32.mxu0 0.0
        %1253 = vmatmul.mubr.f32.gmra.mrb[0].mxu0 %v1117
        %v1254 = vpop.f32.mrb[0].mxu0
        %v1255 = vadd.f32 0.0, %v1254
        %v1256 = vpop.f32.mrb[0].mxu0
        %1257 = vmatprep.mubr.f32.mxu0 0.0
        %1258 = vmatmul.mubr.f32.gmra.mrb[0].mxu0 %v1119
        %v1259 = vpop.f32.mrb[0].mxu0
        %v1260 = vadd.f32 0.0, %v1259
        %v1261 = vpop.f32.mrb[0].mxu0
        %1262 = vmatprep.mubr.f32.mxu0 0.0
        %1263 = vmatmul.mubr.f32.gmra.mrb[0].mxu0 %v1121
        %v1264 = vpop.f32.mrb[0].mxu0
        %v1265 = vadd.f32 0.0, %v1264
        %v1266 = vpop.f32.mrb[0].mxu0
        %1267 = vmatprep.mubr.f32.mxu0 0.0
        %1268 = vmatmul.mubr.f32.gmra.mrb[0].mxu0 %v1123
        %v1269 = vpop.f32.mrb[0].mxu0
        %v1270 = vadd.f32 0.0, %v1269
        %v1271 = vpop.f32.mrb[0].mxu0
        %1272 = vdwg.mxu0
        %v1274 = vsel %vm382, %v1090, 0
        %1276 = vmatprep.subr.mxu0 0.0
        %1277 = vmatpush1.msra.mxu0 %v1274
        %1278 = vmatprep.subr.mxu0 0.0
        %1279 = vmatpush1.msra.mxu0 0.0
        %1280 = vmatprep.subr.mxu0 0.0
        %1281 = vmatpush1.msra.mxu0 0.0
        %1282 = vmatprep.subr.mxu0 0.0
        %1283 = vmatpush1.msra.mxu0 0.0
        %1284 = vmatprep.subr.mxu0 0.0
        %1285 = vmatpush1.msra.mxu0 0.0
        %1286 = vmatprep.subr.mxu0 0.0
        %1287 = vmatpush1.msra.mxu0 0.0
        %1288 = vmatprep.subr.mxu0 0.0
        %1289 = vmatpush1.msra.mxu0 0.0
        %1290 = vmatprep.subr.mxu0 0.0
        %1291 = vmatpush1.msra.mxu0 0.0
        %1292 = vmatprep.subr.mxu0 0.0
        %1293 = vmatpush1.msra.mxu0 0.0
        %1294 = vmatprep.subr.mxu0 0.0
        %1295 = vmatpush1.msra.mxu0 0.0
        %1296 = vmatprep.subr.mxu0 0.0
        %1297 = vmatpush1.msra.mxu0 0.0
        %1298 = vmatprep.subr.mxu0 0.0
        %1299 = vmatpush1.msra.mxu0 0.0
        %1300 = vmatprep.subr.mxu0 0.0
        %1301 = vmatpush1.msra.mxu0 0.0
        %1302 = vmatprep.subr.mxu0 0.0
        %1303 = vmatpush1.msra.mxu0 0.0
        %1304 = vmatprep.subr.mxu0 0.0
        %1305 = vmatpush1.msra.mxu0 0.0
        %1306 = vmatprep.subr.mxu0 0.0
        %1307 = vmatpush1.msra.mxu0 0.0
        %1308 = vmatprep.subr.mxu0 0.0
        %1309 = vmatpush1.msra.mxu0 0.0
        %1310 = vmatprep.subr.mxu0 0.0
        %1311 = vmatpush1.msra.mxu0 0.0
        %1312 = vmatprep.subr.mxu0 0.0
        %1313 = vmatpush1.msra.mxu0 0.0
        %1314 = vmatprep.subr.mxu0 0.0
        %1315 = vmatpush1.msra.mxu0 0.0
        %1316 = vmatprep.subr.mxu0 0.0
        %1317 = vmatpush1.msra.mxu0 0.0
        %1318 = vmatprep.subr.mxu0 0.0
        %1319 = vmatpush1.msra.mxu0 0.0
        %1320 = vmatprep.subr.mxu0 0.0
        %1321 = vmatpush1.msra.mxu0 0.0
        %1322 = vmatprep.subr.mxu0 0.0
        %1323 = vmatpush1.msra.mxu0 0.0
        %1324 = vmatprep.subr.mxu0 0.0
        %1325 = vmatpush1.msra.mxu0 0.0
        %1326 = vmatprep.subr.mxu0 0.0
        %1327 = vmatpush1.msra.mxu0 0.0
        %1328 = vmatprep.subr.mxu0 0.0
        %1329 = vmatpush1.msra.mxu0 0.0
        %1330 = vmatprep.subr.mxu0 0.0
        %1331 = vmatpush1.msra.mxu0 0.0
        %1332 = vmatprep.subr.mxu0 0.0
        %1333 = vmatpush1.msra.mxu0 0.0
        %1334 = vmatprep.subr.mxu0 0.0
        %1335 = vmatpush1.msra.mxu0 0.0
        %1336 = vmatprep.subr.mxu0 0.0
        %1337 = vmatpush1.msra.mxu0 0.0
        %1338 = vmatprep.subr.mxu0 0.0
        %1339 = vmatpush1.msra.mxu0 0.0
        %1340 = vmatprep.mubr.f32.mxu0 0.0
        %1341 = vmatmul.mubr.f32.gmra.mrb[0].mxu0 %v350
        %v1342 = vpop.f32.mrb[0].mxu0
        %v1343 = vadd.f32 %v1195, %v1342
        %v1344 = vpop.f32.mrb[0].mxu0
        %1345 = vmatprep.mubr.f32.mxu0 0.0
        %1346 = vmatmul.mubr.f32.gmra.mrb[0].mxu0 %v352
        %v1347 = vpop.f32.mrb[0].mxu0
        %v1348 = vadd.f32 %v1200, %v1347
        %v1349 = vpop.f32.mrb[0].mxu0
        %1350 = vmatprep.mubr.f32.mxu0 0.0
        %1351 = vmatmul.mubr.f32.gmra.mrb[0].mxu0 %v354
        %v1352 = vpop.f32.mrb[0].mxu0
        %v1353 = vadd.f32 %v1205, %v1352
        %v1354 = vpop.f32.mrb[0].mxu0
        %1355 = vmatprep.mubr.f32.mxu0 0.0
        %1356 = vmatmul.mubr.f32.gmra.mrb[0].mxu0 %v356
        %v1357 = vpop.f32.mrb[0].mxu0
        %v1358 = vadd.f32 %v1210, %v1357
        %v1359 = vpop.f32.mrb[0].mxu0
        %1360 = vmatprep.mubr.f32.mxu0 0.0
        %1361 = vmatmul.mubr.f32.gmra.mrb[0].mxu0 %v358
        %v1362 = vpop.f32.mrb[0].mxu0
        %v1363 = vadd.f32 %v1215, %v1362
        %v1364 = vpop.f32.mrb[0].mxu0
        %1365 = vmatprep.mubr.f32.mxu0 0.0
        %1366 = vmatmul.mubr.f32.gmra.mrb[0].mxu0 %v360
        %v1367 = vpop.f32.mrb[0].mxu0
        %v1368 = vadd.f32 %v1220, %v1367
        %v1369 = vpop.f32.mrb[0].mxu0
        %1370 = vmatprep.mubr.f32.mxu0 0.0
        %1371 = vmatmul.mubr.f32.gmra.mrb[0].mxu0 %v362
        %v1372 = vpop.f32.mrb[0].mxu0
        %v1373 = vadd.f32 %v1225, %v1372
        %v1374 = vpop.f32.mrb[0].mxu0
        %1375 = vmatprep.mubr.f32.mxu0 0.0
        %1376 = vmatmul.mubr.f32.gmra.mrb[0].mxu0 %v364
        %v1377 = vpop.f32.mrb[0].mxu0
        %v1378 = vadd.f32 %v1230, %v1377
        %v1379 = vpop.f32.mrb[0].mxu0
        %1380 = vmatprep.mubr.f32.mxu0 0.0
        %1381 = vmatmul.mubr.f32.gmra.mrb[0].mxu0 %v366
        %v1382 = vpop.f32.mrb[0].mxu0
        %v1383 = vadd.f32 %v1235, %v1382
        %v1384 = vpop.f32.mrb[0].mxu0
        %1385 = vmatprep.mubr.f32.mxu0 0.0
        %1386 = vmatmul.mubr.f32.gmra.mrb[0].mxu0 %v368
        %v1387 = vpop.f32.mrb[0].mxu0
        %v1388 = vadd.f32 %v1240, %v1387
        %v1389 = vpop.f32.mrb[0].mxu0
        %1390 = vmatprep.mubr.f32.mxu0 0.0
        %1391 = vmatmul.mubr.f32.gmra.mrb[0].mxu0 %v370
        %v1392 = vpop.f32.mrb[0].mxu0
        %v1393 = vadd.f32 %v1245, %v1392
        %v1394 = vpop.f32.mrb[0].mxu0
        %1395 = vmatprep.mubr.f32.mxu0 0.0
        %1396 = vmatmul.mubr.f32.gmra.mrb[0].mxu0 %v372
        %v1397 = vpop.f32.mrb[0].mxu0
        %v1398 = vadd.f32 %v1250, %v1397
        %v1399 = vpop.f32.mrb[0].mxu0
        %1400 = vmatprep.mubr.f32.mxu0 0.0
        %1401 = vmatmul.mubr.f32.gmra.mrb[0].mxu0 %v374
        %v1402 = vpop.f32.mrb[0].mxu0
        %v1403 = vadd.f32 %v1255, %v1402
        %v1404 = vpop.f32.mrb[0].mxu0
        %1405 = vmatprep.mubr.f32.mxu0 0.0
        %1406 = vmatmul.mubr.f32.gmra.mrb[0].mxu0 %v376
        %v1407 = vpop.f32.mrb[0].mxu0
        %v1408 = vadd.f32 %v1260, %v1407
        %v1409 = vpop.f32.mrb[0].mxu0
        %1410 = vmatprep.mubr.f32.mxu0 0.0
        %1411 = vmatmul.mubr.f32.gmra.mrb[0].mxu0 %v378
        %v1412 = vpop.f32.mrb[0].mxu0
        %v1413 = vadd.f32 %v1265, %v1412
        %v1414 = vpop.f32.mrb[0].mxu0
        %1415 = vmatprep.mubr.f32.mxu0 0.0
        %1416 = vmatmul.mubr.f32.gmra.mrb[0].mxu0 %v380
        %v1417 = vpop.f32.mrb[0].mxu0
        %v1418 = vadd.f32 %v1270, %v1417
        %v1419 = vpop.f32.mrb[0].mxu0
        %1420 = vdwg.mxu0
        %s1421 = scalar_lea.vmem %s0, 24
        %v1422 = vld [vmem:[%s1421] sm:$0xf]
        %v1424 = vsel %vm382, %v1422, 0
        %1426 = vmatprep.subr.mxu0 0.0
        %1427 = vmatpush1.msra.mxu0 %v1424
        %1428 = vmatprep.subr.mxu0 0.0
        %1429 = vmatpush1.msra.mxu0 0.0
        %1430 = vmatprep.subr.mxu0 0.0
        %1431 = vmatpush1.msra.mxu0 0.0
        %1432 = vmatprep.subr.mxu0 0.0
        %1433 = vmatpush1.msra.mxu0 0.0
        %1434 = vmatprep.subr.mxu0 0.0
        %1435 = vmatpush1.msra.mxu0 0.0
        %1436 = vmatprep.subr.mxu0 0.0
        %1437 = vmatpush1.msra.mxu0 0.0
        %1438 = vmatprep.subr.mxu0 0.0
        %1439 = vmatpush1.msra.mxu0 0.0
        %1440 = vmatprep.subr.mxu0 0.0
        %1441 = vmatpush1.msra.mxu0 0.0
        %1442 = vmatprep.subr.mxu0 0.0
        %1443 = vmatpush1.msra.mxu0 0.0
        %1444 = vmatprep.subr.mxu0 0.0
        %1445 = vmatpush1.msra.mxu0 0.0
        %1446 = vmatprep.subr.mxu0 0.0
        %1447 = vmatpush1.msra.mxu0 0.0
        %1448 = vmatprep.subr.mxu0 0.0
        %1449 = vmatpush1.msra.mxu0 0.0
        %1450 = vmatprep.subr.mxu0 0.0
        %1451 = vmatpush1.msra.mxu0 0.0
        %1452 = vmatprep.subr.mxu0 0.0
        %1453 = vmatpush1.msra.mxu0 0.0
        %1454 = vmatprep.subr.mxu0 0.0
        %1455 = vmatpush1.msra.mxu0 0.0
        %1456 = vmatprep.subr.mxu0 0.0
        %1457 = vmatpush1.msra.mxu0 0.0
        %1458 = vmatprep.subr.mxu0 0.0
        %1459 = vmatpush1.msra.mxu0 0.0
        %1460 = vmatprep.subr.mxu0 0.0
        %1461 = vmatpush1.msra.mxu0 0.0
        %1462 = vmatprep.subr.mxu0 0.0
        %1463 = vmatpush1.msra.mxu0 0.0
        %1464 = vmatprep.subr.mxu0 0.0
        %1465 = vmatpush1.msra.mxu0 0.0
        %1466 = vmatprep.subr.mxu0 0.0
        %1467 = vmatpush1.msra.mxu0 0.0
        %1468 = vmatprep.subr.mxu0 0.0
        %1469 = vmatpush1.msra.mxu0 0.0
        %1470 = vmatprep.subr.mxu0 0.0
        %1471 = vmatpush1.msra.mxu0 0.0
        %1472 = vmatprep.subr.mxu0 0.0
        %1473 = vmatpush1.msra.mxu0 0.0
        %1474 = vmatprep.subr.mxu0 0.0
        %1475 = vmatpush1.msra.mxu0 0.0
        %1476 = vmatprep.subr.mxu0 0.0
        %1477 = vmatpush1.msra.mxu0 0.0
        %1478 = vmatprep.subr.mxu0 0.0
        %1479 = vmatpush1.msra.mxu0 0.0
        %1480 = vmatprep.subr.mxu0 0.0
        %1481 = vmatpush1.msra.mxu0 0.0
        %1482 = vmatprep.subr.mxu0 0.0
        %1483 = vmatpush1.msra.mxu0 0.0
        %1484 = vmatprep.subr.mxu0 0.0
        %1485 = vmatpush1.msra.mxu0 0.0
        %1486 = vmatprep.subr.mxu0 0.0
        %1487 = vmatpush1.msra.mxu0 0.0
        %1488 = vmatprep.subr.mxu0 0.0
        %1489 = vmatpush1.msra.mxu0 0.0
        %1490 = vmatprep.mubr.f32.mxu0 0.0
        %1491 = vmatmul.mubr.f32.gmra.mrb[0].mxu0 %v354
        %v1492 = vpop.f32.mrb[0].mxu0
        %v1493 = vadd.f32 0.0, %v1492
        %v1494 = vpop.f32.mrb[0].mxu0
        %1495 = vmatprep.mubr.f32.mxu0 0.0
        %1496 = vmatmul.mubr.f32.gmra.mrb[0].mxu0 %v356
        %v1497 = vpop.f32.mrb[0].mxu0
        %v1498 = vadd.f32 0.0, %v1497
        %v1499 = vpop.f32.mrb[0].mxu0
        %1500 = vmatprep.mubr.f32.mxu0 0.0
        %1501 = vmatmul.mubr.f32.gmra.mrb[0].mxu0 %v358
        %v1502 = vpop.f32.mrb[0].mxu0
        %v1503 = vadd.f32 0.0, %v1502
        %v1504 = vpop.f32.mrb[0].mxu0
        %1505 = vmatprep.mubr.f32.mxu0 0.0
        %1506 = vmatmul.mubr.f32.gmra.mrb[0].mxu0 %v360
        %v1507 = vpop.f32.mrb[0].mxu0
        %v1508 = vadd.f32 0.0, %v1507
        %v1509 = vpop.f32.mrb[0].mxu0
        %1510 = vmatprep.mubr.f32.mxu0 0.0
        %1511 = vmatmul.mubr.f32.gmra.mrb[0].mxu0 %v362
        %v1512 = vpop.f32.mrb[0].mxu0
        %v1513 = vadd.f32 0.0, %v1512
        %v1514 = vpop.f32.mrb[0].mxu0
        %1515 = vmatprep.mubr.f32.mxu0 0.0
        %1516 = vmatmul.mubr.f32.gmra.mrb[0].mxu0 %v364
        %v1517 = vpop.f32.mrb[0].mxu0
        %v1518 = vadd.f32 0.0, %v1517
        %v1519 = vpop.f32.mrb[0].mxu0
        %1520 = vmatprep.mubr.f32.mxu0 0.0
        %1521 = vmatmul.mubr.f32.gmra.mrb[0].mxu0 %v366
        %v1522 = vpop.f32.mrb[0].mxu0
        %v1523 = vadd.f32 0.0, %v1522
        %v1524 = vpop.f32.mrb[0].mxu0
        %1525 = vmatprep.mubr.f32.mxu0 0.0
        %1526 = vmatmul.mubr.f32.gmra.mrb[0].mxu0 %v368
        %v1527 = vpop.f32.mrb[0].mxu0
        %v1528 = vadd.f32 0.0, %v1527
        %v1529 = vpop.f32.mrb[0].mxu0
        %1530 = vmatprep.mubr.f32.mxu0 0.0
        %1531 = vmatmul.mubr.f32.gmra.mrb[0].mxu0 %v370
        %v1532 = vpop.f32.mrb[0].mxu0
        %v1533 = vadd.f32 0.0, %v1532
        %v1534 = vpop.f32.mrb[0].mxu0
        %1535 = vmatprep.mubr.f32.mxu0 0.0
        %1536 = vmatmul.mubr.f32.gmra.mrb[0].mxu0 %v372
        %v1537 = vpop.f32.mrb[0].mxu0
        %v1538 = vadd.f32 0.0, %v1537
        %v1539 = vpop.f32.mrb[0].mxu0
        %1540 = vmatprep.mubr.f32.mxu0 0.0
        %1541 = vmatmul.mubr.f32.gmra.mrb[0].mxu0 %v374
        %v1542 = vpop.f32.mrb[0].mxu0
        %v1543 = vadd.f32 0.0, %v1542
        %v1544 = vpop.f32.mrb[0].mxu0
        %1545 = vmatprep.mubr.f32.mxu0 0.0
        %1546 = vmatmul.mubr.f32.gmra.mrb[0].mxu0 %v376
        %v1547 = vpop.f32.mrb[0].mxu0
        %v1548 = vadd.f32 0.0, %v1547
        %v1549 = vpop.f32.mrb[0].mxu0
        %1550 = vmatprep.mubr.f32.mxu0 0.0
        %1551 = vmatmul.mubr.f32.gmra.mrb[0].mxu0 %v378
        %v1552 = vpop.f32.mrb[0].mxu0
        %v1553 = vadd.f32 0.0, %v1552
        %v1554 = vpop.f32.mrb[0].mxu0
        %1555 = vmatprep.mubr.f32.mxu0 0.0
        %1556 = vmatmul.mubr.f32.gmra.mrb[0].mxu0 %v380
        %v1557 = vpop.f32.mrb[0].mxu0
        %v1558 = vadd.f32 0.0, %v1557
        %v1559 = vpop.f32.mrb[0].mxu0
        %1560 = vmatprep.mubr.f32.mxu0 0.0
        %1561 = vmatmul.mubr.f32.gmra.mrb[0].mxu0 %v883
        %v1562 = vpop.f32.mrb[0].mxu0
        %v1563 = vadd.f32 0.0, %v1562
        %v1564 = vpop.f32.mrb[0].mxu0
        %1565 = vmatprep.mubr.f32.mxu0 0.0
        %1566 = vmatmul.mubr.f32.gmra.mrb[0].mxu0 %v885
        %v1567 = vpop.f32.mrb[0].mxu0
        %v1568 = vadd.f32 0.0, %v1567
        %v1569 = vpop.f32.mrb[0].mxu0
        %1570 = vdwg.mxu0
        %v1571 = vadd.f32 %v1343, %v1493
        %v1572 = vadd.f32 %v1348, %v1498
        %v1573 = vadd.f32 %v1353, %v1503
        %v1574 = vadd.f32 %v1358, %v1508
        %v1575 = vadd.f32 %v1363, %v1513
        %v1576 = vadd.f32 %v1368, %v1518
        %v1577 = vadd.f32 %v1373, %v1523
        %v1578 = vadd.f32 %v1378, %v1528
        %v1579 = vadd.f32 %v1383, %v1533
        %v1580 = vadd.f32 %v1388, %v1538
        %v1581 = vadd.f32 %v1393, %v1543
        %v1582 = vadd.f32 %v1398, %v1548
        %v1583 = vadd.f32 %v1403, %v1553
        %v1584 = vadd.f32 %v1408, %v1558
        %v1585 = vadd.f32 %v1413, %v1563
        %v1586 = vadd.f32 %v1418, %v1568
        %s1587 = scalar_lea.vmem %s0, 28
        %v1588 = vld [vmem:[%s1587] sm:$0xf]
        %v1589 = vsel %vm349, %v329, 0
        %v1591 = vsel %vm349, %v331, 0
        %v1594 = vsel %vm382, %v1588, 0
        %1596 = vmatprep.subr.mxu0 0.0
        %1597 = vmatpush1.msra.mxu0 %v1594
        %1598 = vmatprep.subr.mxu0 0.0
        %1599 = vmatpush1.msra.mxu0 0.0
        %1600 = vmatprep.subr.mxu0 0.0
        %1601 = vmatpush1.msra.mxu0 0.0
        %1602 = vmatprep.subr.mxu0 0.0
        %1603 = vmatpush1.msra.mxu0 0.0
        %1604 = vmatprep.subr.mxu0 0.0
        %1605 = vmatpush1.msra.mxu0 0.0
        %1606 = vmatprep.subr.mxu0 0.0
        %1607 = vmatpush1.msra.mxu0 0.0
        %1608 = vmatprep.subr.mxu0 0.0
        %1609 = vmatpush1.msra.mxu0 0.0
        %1610 = vmatprep.subr.mxu0 0.0
        %1611 = vmatpush1.msra.mxu0 0.0
        %1612 = vmatprep.subr.mxu0 0.0
        %1613 = vmatpush1.msra.mxu0 0.0
        %1614 = vmatprep.subr.mxu0 0.0
        %1615 = vmatpush1.msra.mxu0 0.0
        %1616 = vmatprep.subr.mxu0 0.0
        %1617 = vmatpush1.msra.mxu0 0.0
        %1618 = vmatprep.subr.mxu0 0.0
        %1619 = vmatpush1.msra.mxu0 0.0
        %1620 = vmatprep.subr.mxu0 0.0
        %1621 = vmatpush1.msra.mxu0 0.0
        %1622 = vmatprep.subr.mxu0 0.0
        %1623 = vmatpush1.msra.mxu0 0.0
        %1624 = vmatprep.subr.mxu0 0.0
        %1625 = vmatpush1.msra.mxu0 0.0
        %1626 = vmatprep.subr.mxu0 0.0
        %1627 = vmatpush1.msra.mxu0 0.0
        %1628 = vmatprep.subr.mxu0 0.0
        %1629 = vmatpush1.msra.mxu0 0.0
        %1630 = vmatprep.subr.mxu0 0.0
        %1631 = vmatpush1.msra.mxu0 0.0
        %1632 = vmatprep.subr.mxu0 0.0
        %1633 = vmatpush1.msra.mxu0 0.0
        %1634 = vmatprep.subr.mxu0 0.0
        %1635 = vmatpush1.msra.mxu0 0.0
        %1636 = vmatprep.subr.mxu0 0.0
        %1637 = vmatpush1.msra.mxu0 0.0
        %1638 = vmatprep.subr.mxu0 0.0
        %1639 = vmatpush1.msra.mxu0 0.0
        %1640 = vmatprep.subr.mxu0 0.0
        %1641 = vmatpush1.msra.mxu0 0.0
        %1642 = vmatprep.subr.mxu0 0.0
        %1643 = vmatpush1.msra.mxu0 0.0
        %1644 = vmatprep.subr.mxu0 0.0
        %1645 = vmatpush1.msra.mxu0 0.0
        %1646 = vmatprep.subr.mxu0 0.0
        %1647 = vmatpush1.msra.mxu0 0.0
        %1648 = vmatprep.subr.mxu0 0.0
        %1649 = vmatpush1.msra.mxu0 0.0
        %1650 = vmatprep.subr.mxu0 0.0
        %1651 = vmatpush1.msra.mxu0 0.0
        %1652 = vmatprep.subr.mxu0 0.0
        %1653 = vmatpush1.msra.mxu0 0.0
        %1654 = vmatprep.subr.mxu0 0.0
        %1655 = vmatpush1.msra.mxu0 0.0
        %1656 = vmatprep.subr.mxu0 0.0
        %1657 = vmatpush1.msra.mxu0 0.0
        %1658 = vmatprep.subr.mxu0 0.0
        %1659 = vmatpush1.msra.mxu0 0.0
        %1660 = vmatprep.mubr.f32.mxu0 0.0
        %1661 = vmatmul.mubr.f32.gmra.mrb[0].mxu0 %v1097
        %v1662 = vpop.f32.mrb[0].mxu0
        %v1663 = vadd.f32 0.0, %v1662
        %v1664 = vpop.f32.mrb[0].mxu0
        %1665 = vmatprep.mubr.f32.mxu0 0.0
        %1666 = vmatmul.mubr.f32.gmra.mrb[0].mxu0 %v1099
        %v1667 = vpop.f32.mrb[0].mxu0
        %v1668 = vadd.f32 0.0, %v1667
        %v1669 = vpop.f32.mrb[0].mxu0
        %1670 = vmatprep.mubr.f32.mxu0 0.0
        %1671 = vmatmul.mubr.f32.gmra.mrb[0].mxu0 %v1101
        %v1672 = vpop.f32.mrb[0].mxu0
        %v1673 = vadd.f32 0.0, %v1672
        %v1674 = vpop.f32.mrb[0].mxu0
        %1675 = vmatprep.mubr.f32.mxu0 0.0
        %1676 = vmatmul.mubr.f32.gmra.mrb[0].mxu0 %v1103
        %v1677 = vpop.f32.mrb[0].mxu0
        %v1678 = vadd.f32 0.0, %v1677
        %v1679 = vpop.f32.mrb[0].mxu0
        %1680 = vmatprep.mubr.f32.mxu0 0.0
        %1681 = vmatmul.mubr.f32.gmra.mrb[0].mxu0 %v1105
        %v1682 = vpop.f32.mrb[0].mxu0
        %v1683 = vadd.f32 0.0, %v1682
        %v1684 = vpop.f32.mrb[0].mxu0
        %1685 = vmatprep.mubr.f32.mxu0 0.0
        %1686 = vmatmul.mubr.f32.gmra.mrb[0].mxu0 %v1107
        %v1687 = vpop.f32.mrb[0].mxu0
        %v1688 = vadd.f32 0.0, %v1687
        %v1689 = vpop.f32.mrb[0].mxu0
        %1690 = vmatprep.mubr.f32.mxu0 0.0
        %1691 = vmatmul.mubr.f32.gmra.mrb[0].mxu0 %v1109
        %v1692 = vpop.f32.mrb[0].mxu0
        %v1693 = vadd.f32 0.0, %v1692
        %v1694 = vpop.f32.mrb[0].mxu0
        %1695 = vmatprep.mubr.f32.mxu0 0.0
        %1696 = vmatmul.mubr.f32.gmra.mrb[0].mxu0 %v1111
        %v1697 = vpop.f32.mrb[0].mxu0
        %v1698 = vadd.f32 0.0, %v1697
        %v1699 = vpop.f32.mrb[0].mxu0
        %1700 = vmatprep.mubr.f32.mxu0 0.0
        %1701 = vmatmul.mubr.f32.gmra.mrb[0].mxu0 %v1113
        %v1702 = vpop.f32.mrb[0].mxu0
        %v1703 = vadd.f32 0.0, %v1702
        %v1704 = vpop.f32.mrb[0].mxu0
        %1705 = vmatprep.mubr.f32.mxu0 0.0
        %1706 = vmatmul.mubr.f32.gmra.mrb[0].mxu0 %v1115
        %v1707 = vpop.f32.mrb[0].mxu0
        %v1708 = vadd.f32 0.0, %v1707
        %v1709 = vpop.f32.mrb[0].mxu0
        %1710 = vmatprep.mubr.f32.mxu0 0.0
        %1711 = vmatmul.mubr.f32.gmra.mrb[0].mxu0 %v1117
        %v1712 = vpop.f32.mrb[0].mxu0
        %v1713 = vadd.f32 0.0, %v1712
        %v1714 = vpop.f32.mrb[0].mxu0
        %1715 = vmatprep.mubr.f32.mxu0 0.0
        %1716 = vmatmul.mubr.f32.gmra.mrb[0].mxu0 %v1119
        %v1717 = vpop.f32.mrb[0].mxu0
        %v1718 = vadd.f32 0.0, %v1717
        %v1719 = vpop.f32.mrb[0].mxu0
        %1720 = vmatprep.mubr.f32.mxu0 0.0
        %1721 = vmatmul.mubr.f32.gmra.mrb[0].mxu0 %v1121
        %v1722 = vpop.f32.mrb[0].mxu0
        %v1723 = vadd.f32 0.0, %v1722
        %v1724 = vpop.f32.mrb[0].mxu0
        %1725 = vmatprep.mubr.f32.mxu0 0.0
        %1726 = vmatmul.mubr.f32.gmra.mrb[0].mxu0 %v1123
        %v1727 = vpop.f32.mrb[0].mxu0
        %v1728 = vadd.f32 0.0, %v1727
        %v1729 = vpop.f32.mrb[0].mxu0
        %1730 = vmatprep.mubr.f32.mxu0 0.0
        %1731 = vmatmul.mubr.f32.gmra.mrb[0].mxu0 %v1589
        %v1732 = vpop.f32.mrb[0].mxu0
        %v1733 = vadd.f32 0.0, %v1732
        %v1734 = vpop.f32.mrb[0].mxu0
        %1735 = vmatprep.mubr.f32.mxu0 0.0
        %1736 = vmatmul.mubr.f32.gmra.mrb[0].mxu0 %v1591
        %v1737 = vpop.f32.mrb[0].mxu0
        %v1738 = vadd.f32 0.0, %v1737
        %v1739 = vpop.f32.mrb[0].mxu0
        %1740 = vdwg.mxu0
        %v1741 = vadd.f32 %v1571, %v1663
        %v1742 = vadd.f32 %v1572, %v1668
        %v1743 = vadd.f32 %v1573, %v1673
        %v1744 = vadd.f32 %v1574, %v1678
        %v1745 = vadd.f32 %v1575, %v1683
        %v1746 = vadd.f32 %v1576, %v1688
        %v1747 = vadd.f32 %v1577, %v1693
        %v1748 = vadd.f32 %v1578, %v1698
        %v1749 = vadd.f32 %v1579, %v1703
        %v1750 = vadd.f32 %v1580, %v1708
        %v1751 = vadd.f32 %v1581, %v1713
        %v1752 = vadd.f32 %v1582, %v1718
        %v1753 = vadd.f32 %v1583, %v1723
        %v1754 = vadd.f32 %v1584, %v1728
        %v1755 = vadd.f32 %v1585, %v1733
        %v1756 = vadd.f32 %v1586, %v1738
        %v1757 = vadd.f32 %v1741, %v1055
        %v1758 = vadd.f32 %v1742, %v1055
        %v1759 = vadd.f32 %v1743, %v1055
        %v1760 = vadd.f32 %v1744, %v1055
        %v1761 = vadd.f32 %v1745, %v1055
        %v1762 = vadd.f32 %v1746, %v1055
        %v1763 = vadd.f32 %v1747, %v1055
        %v1764 = vadd.f32 %v1748, %v1055
        %v1765 = vadd.f32 %v1749, %v1055
        %v1766 = vadd.f32 %v1750, %v1055
        %v1767 = vadd.f32 %v1751, %v1055
        %v1768 = vadd.f32 %v1752, %v1055
        %v1769 = vadd.f32 %v1753, %v1055
        %v1770 = vadd.f32 %v1754, %v1055
        %v1771 = vadd.f32 %v1755, %v1055
        %v1772 = vadd.f32 %v1756, %v1055
        %s1773 = scalar_lea.vmem %s173, 128 [#allocation2]
        %1774 = vst.msk [vmem:[%s1773] sm:$0xff] %vm349, %v1757
        %1775 = vst.msk [vmem:[%s1773 + $0x8] sm:$0xff] %vm349, %v1758
        %1776 = vst.msk [vmem:[%s1773 + $0x10] sm:$0xff] %vm349, %v1759
        %1777 = vst.msk [vmem:[%s1773 + $0x18] sm:$0xff] %vm349, %v1760
        %1778 = vst.msk [vmem:[%s1773 + $0x20] sm:$0xff] %vm349, %v1761
        %1779 = vst.msk [vmem:[%s1773 + $0x28] sm:$0xff] %vm349, %v1762
        %1780 = vst.msk [vmem:[%s1773 + $0x30] sm:$0xff] %vm349, %v1763
        %1781 = vst.msk [vmem:[%s1773 + $0x38] sm:$0xff] %vm349, %v1764
        %1782 = vst.msk [vmem:[%s1773 + $0x40] sm:$0xff] %vm349, %v1765
        %1783 = vst.msk [vmem:[%s1773 + $0x48] sm:$0xff] %vm349, %v1766
        %1784 = vst.msk [vmem:[%s1773 + $0x50] sm:$0xff] %vm349, %v1767
        %1785 = vst.msk [vmem:[%s1773 + $0x58] sm:$0xff] %vm349, %v1768
        %1786 = vst.msk [vmem:[%s1773 + $0x60] sm:$0xff] %vm349, %v1769
        %1787 = vst.msk [vmem:[%s1773 + $0x68] sm:$0xff] %vm349, %v1770
        %1788 = vst.msk [vmem:[%s1773 + $0x70] sm:$0xff] %vm349, %v1771
        %1789 = vst.msk [vmem:[%s1773 + $0x78] sm:$0xff] %vm349, %v1772
        %s1790 = scalar_lea.vmem %s0, 32
        %v1791 = vld [vmem:[%s1790] sm:$0xf]
        %s1792 = scalar_lea.vmem %s0, 36
        %v1793 = vld [vmem:[%s1792] sm:$0xf]
        %v1795 = vsel %vm382, %v1793, 0
        %1797 = vmatprep.subr.mxu0 0.0
        %1798 = vmatpush1.msra.mxu0 %v1795
        %1799 = vmatprep.subr.mxu0 0.0
        %1800 = vmatpush1.msra.mxu0 0.0
        %1801 = vmatprep.subr.mxu0 0.0
        %1802 = vmatpush1.msra.mxu0 0.0
        %1803 = vmatprep.subr.mxu0 0.0
        %1804 = vmatpush1.msra.mxu0 0.0
        %1805 = vmatprep.subr.mxu0 0.0
        %1806 = vmatpush1.msra.mxu0 0.0
        %1807 = vmatprep.subr.mxu0 0.0
        %1808 = vmatpush1.msra.mxu0 0.0
        %1809 = vmatprep.subr.mxu0 0.0
        %1810 = vmatpush1.msra.mxu0 0.0
        %1811 = vmatprep.subr.mxu0 0.0
        %1812 = vmatpush1.msra.mxu0 0.0
        %1813 = vmatprep.subr.mxu0 0.0
        %1814 = vmatpush1.msra.mxu0 0.0
        %1815 = vmatprep.subr.mxu0 0.0
        %1816 = vmatpush1.msra.mxu0 0.0
        %1817 = vmatprep.subr.mxu0 0.0
        %1818 = vmatpush1.msra.mxu0 0.0
        %1819 = vmatprep.subr.mxu0 0.0
        %1820 = vmatpush1.msra.mxu0 0.0
        %1821 = vmatprep.subr.mxu0 0.0
        %1822 = vmatpush1.msra.mxu0 0.0
        %1823 = vmatprep.subr.mxu0 0.0
        %1824 = vmatpush1.msra.mxu0 0.0
        %1825 = vmatprep.subr.mxu0 0.0
        %1826 = vmatpush1.msra.mxu0 0.0
        %1827 = vmatprep.subr.mxu0 0.0
        %1828 = vmatpush1.msra.mxu0 0.0
        %1829 = vmatprep.subr.mxu0 0.0
        %1830 = vmatpush1.msra.mxu0 0.0
        %1831 = vmatprep.subr.mxu0 0.0
        %1832 = vmatpush1.msra.mxu0 0.0
        %1833 = vmatprep.subr.mxu0 0.0
        %1834 = vmatpush1.msra.mxu0 0.0
        %1835 = vmatprep.subr.mxu0 0.0
        %1836 = vmatpush1.msra.mxu0 0.0
        %1837 = vmatprep.subr.mxu0 0.0
        %1838 = vmatpush1.msra.mxu0 0.0
        %1839 = vmatprep.subr.mxu0 0.0
        %1840 = vmatpush1.msra.mxu0 0.0
        %1841 = vmatprep.subr.mxu0 0.0
        %1842 = vmatpush1.msra.mxu0 0.0
        %1843 = vmatprep.subr.mxu0 0.0
        %1844 = vmatpush1.msra.mxu0 0.0
        %1845 = vmatprep.subr.mxu0 0.0
        %1846 = vmatpush1.msra.mxu0 0.0
        %1847 = vmatprep.subr.mxu0 0.0
        %1848 = vmatpush1.msra.mxu0 0.0
        %1849 = vmatprep.subr.mxu0 0.0
        %1850 = vmatpush1.msra.mxu0 0.0
        %1851 = vmatprep.subr.mxu0 0.0
        %1852 = vmatpush1.msra.mxu0 0.0
        %1853 = vmatprep.subr.mxu0 0.0
        %1854 = vmatpush1.msra.mxu0 0.0
        %1855 = vmatprep.subr.mxu0 0.0
        %1856 = vmatpush1.msra.mxu0 0.0
        %1857 = vmatprep.subr.mxu0 0.0
        %1858 = vmatpush1.msra.mxu0 0.0
        %1859 = vmatprep.subr.mxu0 0.0
        %1860 = vmatpush1.msra.mxu0 0.0
        %1861 = vmatprep.mubr.f32.mxu0 0.0
        %1862 = vmatmul.mubr.f32.gmra.mrb[0].mxu0 %v354
        %v1863 = vpop.f32.mrb[0].mxu0
        %v1864 = vadd.f32 0.0, %v1863
        %v1865 = vpop.f32.mrb[0].mxu0
        %1866 = vmatprep.mubr.f32.mxu0 0.0
        %1867 = vmatmul.mubr.f32.gmra.mrb[0].mxu0 %v356
        %v1868 = vpop.f32.mrb[0].mxu0
        %v1869 = vadd.f32 0.0, %v1868
        %v1870 = vpop.f32.mrb[0].mxu0
        %1871 = vmatprep.mubr.f32.mxu0 0.0
        %1872 = vmatmul.mubr.f32.gmra.mrb[0].mxu0 %v358
        %v1873 = vpop.f32.mrb[0].mxu0
        %v1874 = vadd.f32 0.0, %v1873
        %v1875 = vpop.f32.mrb[0].mxu0
        %1876 = vmatprep.mubr.f32.mxu0 0.0
        %1877 = vmatmul.mubr.f32.gmra.mrb[0].mxu0 %v360
        %v1878 = vpop.f32.mrb[0].mxu0
        %v1879 = vadd.f32 0.0, %v1878
        %v1880 = vpop.f32.mrb[0].mxu0
        %1881 = vmatprep.mubr.f32.mxu0 0.0
        %1882 = vmatmul.mubr.f32.gmra.mrb[0].mxu0 %v362
        %v1883 = vpop.f32.mrb[0].mxu0
        %v1884 = vadd.f32 0.0, %v1883
        %v1885 = vpop.f32.mrb[0].mxu0
        %1886 = vmatprep.mubr.f32.mxu0 0.0
        %1887 = vmatmul.mubr.f32.gmra.mrb[0].mxu0 %v364
        %v1888 = vpop.f32.mrb[0].mxu0
        %v1889 = vadd.f32 0.0, %v1888
        %v1890 = vpop.f32.mrb[0].mxu0
        %1891 = vmatprep.mubr.f32.mxu0 0.0
        %1892 = vmatmul.mubr.f32.gmra.mrb[0].mxu0 %v366
        %v1893 = vpop.f32.mrb[0].mxu0
        %v1894 = vadd.f32 0.0, %v1893
        %v1895 = vpop.f32.mrb[0].mxu0
        %1896 = vmatprep.mubr.f32.mxu0 0.0
        %1897 = vmatmul.mubr.f32.gmra.mrb[0].mxu0 %v368
        %v1898 = vpop.f32.mrb[0].mxu0
        %v1899 = vadd.f32 0.0, %v1898
        %v1900 = vpop.f32.mrb[0].mxu0
        %1901 = vmatprep.mubr.f32.mxu0 0.0
        %1902 = vmatmul.mubr.f32.gmra.mrb[0].mxu0 %v370
        %v1903 = vpop.f32.mrb[0].mxu0
        %v1904 = vadd.f32 0.0, %v1903
        %v1905 = vpop.f32.mrb[0].mxu0
        %1906 = vmatprep.mubr.f32.mxu0 0.0
        %1907 = vmatmul.mubr.f32.gmra.mrb[0].mxu0 %v372
        %v1908 = vpop.f32.mrb[0].mxu0
        %v1909 = vadd.f32 0.0, %v1908
        %v1910 = vpop.f32.mrb[0].mxu0
        %1911 = vmatprep.mubr.f32.mxu0 0.0
        %1912 = vmatmul.mubr.f32.gmra.mrb[0].mxu0 %v374
        %v1913 = vpop.f32.mrb[0].mxu0
        %v1914 = vadd.f32 0.0, %v1913
        %v1915 = vpop.f32.mrb[0].mxu0
        %1916 = vmatprep.mubr.f32.mxu0 0.0
        %1917 = vmatmul.mubr.f32.gmra.mrb[0].mxu0 %v376
        %v1918 = vpop.f32.mrb[0].mxu0
        %v1919 = vadd.f32 0.0, %v1918
        %v1920 = vpop.f32.mrb[0].mxu0
        %1921 = vmatprep.mubr.f32.mxu0 0.0
        %1922 = vmatmul.mubr.f32.gmra.mrb[0].mxu0 %v378
        %v1923 = vpop.f32.mrb[0].mxu0
        %v1924 = vadd.f32 0.0, %v1923
        %v1925 = vpop.f32.mrb[0].mxu0
        %1926 = vmatprep.mubr.f32.mxu0 0.0
        %1927 = vmatmul.mubr.f32.gmra.mrb[0].mxu0 %v380
        %v1928 = vpop.f32.mrb[0].mxu0
        %v1929 = vadd.f32 0.0, %v1928
        %v1930 = vpop.f32.mrb[0].mxu0
        %1931 = vmatprep.mubr.f32.mxu0 0.0
        %1932 = vmatmul.mubr.f32.gmra.mrb[0].mxu0 %v883
        %v1933 = vpop.f32.mrb[0].mxu0
        %v1934 = vadd.f32 0.0, %v1933
        %v1935 = vpop.f32.mrb[0].mxu0
        %1936 = vmatprep.mubr.f32.mxu0 0.0
        %1937 = vmatmul.mubr.f32.gmra.mrb[0].mxu0 %v885
        %v1938 = vpop.f32.mrb[0].mxu0
        %v1939 = vadd.f32 0.0, %v1938
        %v1940 = vpop.f32.mrb[0].mxu0
        %1941 = vdwg.mxu0
        %v1943 = vsel %vm382, %v1791, 0
        %1945 = vmatprep.subr.mxu0 0.0
        %1946 = vmatpush1.msra.mxu0 %v1943
        %1947 = vmatprep.subr.mxu0 0.0
        %1948 = vmatpush1.msra.mxu0 0.0
        %1949 = vmatprep.subr.mxu0 0.0
        %1950 = vmatpush1.msra.mxu0 0.0
        %1951 = vmatprep.subr.mxu0 0.0
        %1952 = vmatpush1.msra.mxu0 0.0
        %1953 = vmatprep.subr.mxu0 0.0
        %1954 = vmatpush1.msra.mxu0 0.0
        %1955 = vmatprep.subr.mxu0 0.0
        %1956 = vmatpush1.msra.mxu0 0.0
        %1957 = vmatprep.subr.mxu0 0.0
        %1958 = vmatpush1.msra.mxu0 0.0
        %1959 = vmatprep.subr.mxu0 0.0
        %1960 = vmatpush1.msra.mxu0 0.0
        %1961 = vmatprep.subr.mxu0 0.0
        %1962 = vmatpush1.msra.mxu0 0.0
        %1963 = vmatprep.subr.mxu0 0.0
        %1964 = vmatpush1.msra.mxu0 0.0
        %1965 = vmatprep.subr.mxu0 0.0
        %1966 = vmatpush1.msra.mxu0 0.0
        %1967 = vmatprep.subr.mxu0 0.0
        %1968 = vmatpush1.msra.mxu0 0.0
        %1969 = vmatprep.subr.mxu0 0.0
        %1970 = vmatpush1.msra.mxu0 0.0
        %1971 = vmatprep.subr.mxu0 0.0
        %1972 = vmatpush1.msra.mxu0 0.0
        %1973 = vmatprep.subr.mxu0 0.0
        %1974 = vmatpush1.msra.mxu0 0.0
        %1975 = vmatprep.subr.mxu0 0.0
        %1976 = vmatpush1.msra.mxu0 0.0
        %1977 = vmatprep.subr.mxu0 0.0
        %1978 = vmatpush1.msra.mxu0 0.0
        %1979 = vmatprep.subr.mxu0 0.0
        %1980 = vmatpush1.msra.mxu0 0.0
        %1981 = vmatprep.subr.mxu0 0.0
        %1982 = vmatpush1.msra.mxu0 0.0
        %1983 = vmatprep.subr.mxu0 0.0
        %1984 = vmatpush1.msra.mxu0 0.0
        %1985 = vmatprep.subr.mxu0 0.0
        %1986 = vmatpush1.msra.mxu0 0.0
        %1987 = vmatprep.subr.mxu0 0.0
        %1988 = vmatpush1.msra.mxu0 0.0
        %1989 = vmatprep.subr.mxu0 0.0
        %1990 = vmatpush1.msra.mxu0 0.0
        %1991 = vmatprep.subr.mxu0 0.0
        %1992 = vmatpush1.msra.mxu0 0.0
        %1993 = vmatprep.subr.mxu0 0.0
        %1994 = vmatpush1.msra.mxu0 0.0
        %1995 = vmatprep.subr.mxu0 0.0
        %1996 = vmatpush1.msra.mxu0 0.0
        %1997 = vmatprep.subr.mxu0 0.0
        %1998 = vmatpush1.msra.mxu0 0.0
        %1999 = vmatprep.subr.mxu0 0.0
        %2000 = vmatpush1.msra.mxu0 0.0
        %2001 = vmatprep.subr.mxu0 0.0
        %2002 = vmatpush1.msra.mxu0 0.0
        %2003 = vmatprep.subr.mxu0 0.0
        %2004 = vmatpush1.msra.mxu0 0.0
        %2005 = vmatprep.subr.mxu0 0.0
        %2006 = vmatpush1.msra.mxu0 0.0
        %2007 = vmatprep.subr.mxu0 0.0
        %2008 = vmatpush1.msra.mxu0 0.0
        %2009 = vmatprep.mubr.f32.mxu0 0.0
        %2010 = vmatmul.mubr.f32.gmra.mrb[0].mxu0 %v535
        %v2011 = vpop.f32.mrb[0].mxu0
        %v2012 = vadd.f32 %v1864, %v2011
        %v2013 = vpop.f32.mrb[0].mxu0
        %2014 = vmatprep.mubr.f32.mxu0 0.0
        %2015 = vmatmul.mubr.f32.gmra.mrb[0].mxu0 %v537
        %v2016 = vpop.f32.mrb[0].mxu0
        %v2017 = vadd.f32 %v1869, %v2016
        %v2018 = vpop.f32.mrb[0].mxu0
        %2019 = vmatprep.mubr.f32.mxu0 0.0
        %2020 = vmatmul.mubr.f32.gmra.mrb[0].mxu0 %v539
        %v2021 = vpop.f32.mrb[0].mxu0
        %v2022 = vadd.f32 %v1874, %v2021
        %v2023 = vpop.f32.mrb[0].mxu0
        %2024 = vmatprep.mubr.f32.mxu0 0.0
        %2025 = vmatmul.mubr.f32.gmra.mrb[0].mxu0 %v541
        %v2026 = vpop.f32.mrb[0].mxu0
        %v2027 = vadd.f32 %v1879, %v2026
        %v2028 = vpop.f32.mrb[0].mxu0
        %2029 = vmatprep.mubr.f32.mxu0 0.0
        %2030 = vmatmul.mubr.f32.gmra.mrb[0].mxu0 %v543
        %v2031 = vpop.f32.mrb[0].mxu0
        %v2032 = vadd.f32 %v1884, %v2031
        %v2033 = vpop.f32.mrb[0].mxu0
        %2034 = vmatprep.mubr.f32.mxu0 0.0
        %2035 = vmatmul.mubr.f32.gmra.mrb[0].mxu0 %v545
        %v2036 = vpop.f32.mrb[0].mxu0
        %v2037 = vadd.f32 %v1889, %v2036
        %v2038 = vpop.f32.mrb[0].mxu0
        %2039 = vmatprep.mubr.f32.mxu0 0.0
        %2040 = vmatmul.mubr.f32.gmra.mrb[0].mxu0 %v547
        %v2041 = vpop.f32.mrb[0].mxu0
        %v2042 = vadd.f32 %v1894, %v2041
        %v2043 = vpop.f32.mrb[0].mxu0
        %2044 = vmatprep.mubr.f32.mxu0 0.0
        %2045 = vmatmul.mubr.f32.gmra.mrb[0].mxu0 %v549
        %v2046 = vpop.f32.mrb[0].mxu0
        %v2047 = vadd.f32 %v1899, %v2046
        %v2048 = vpop.f32.mrb[0].mxu0
        %2049 = vmatprep.mubr.f32.mxu0 0.0
        %2050 = vmatmul.mubr.f32.gmra.mrb[0].mxu0 %v551
        %v2051 = vpop.f32.mrb[0].mxu0
        %v2052 = vadd.f32 %v1904, %v2051
        %v2053 = vpop.f32.mrb[0].mxu0
        %2054 = vmatprep.mubr.f32.mxu0 0.0
        %2055 = vmatmul.mubr.f32.gmra.mrb[0].mxu0 %v553
        %v2056 = vpop.f32.mrb[0].mxu0
        %v2057 = vadd.f32 %v1909, %v2056
        %v2058 = vpop.f32.mrb[0].mxu0
        %2059 = vmatprep.mubr.f32.mxu0 0.0
        %2060 = vmatmul.mubr.f32.gmra.mrb[0].mxu0 %v555
        %v2061 = vpop.f32.mrb[0].mxu0
        %v2062 = vadd.f32 %v1914, %v2061
        %v2063 = vpop.f32.mrb[0].mxu0
        %2064 = vmatprep.mubr.f32.mxu0 0.0
        %2065 = vmatmul.mubr.f32.gmra.mrb[0].mxu0 %v557
        %v2066 = vpop.f32.mrb[0].mxu0
        %v2067 = vadd.f32 %v1919, %v2066
        %v2068 = vpop.f32.mrb[0].mxu0
        %2069 = vmatprep.mubr.f32.mxu0 0.0
        %2070 = vmatmul.mubr.f32.gmra.mrb[0].mxu0 %v559
        %v2071 = vpop.f32.mrb[0].mxu0
        %v2072 = vadd.f32 %v1924, %v2071
        %v2073 = vpop.f32.mrb[0].mxu0
        %2074 = vmatprep.mubr.f32.mxu0 0.0
        %2075 = vmatmul.mubr.f32.gmra.mrb[0].mxu0 %v561
        %v2076 = vpop.f32.mrb[0].mxu0
        %v2077 = vadd.f32 %v1929, %v2076
        %v2078 = vpop.f32.mrb[0].mxu0
        %2079 = vmatprep.mubr.f32.mxu0 0.0
        %2080 = vmatmul.mubr.f32.gmra.mrb[0].mxu0 %v713
        %v2081 = vpop.f32.mrb[0].mxu0
        %v2082 = vadd.f32 %v1934, %v2081
        %v2083 = vpop.f32.mrb[0].mxu0
        %2084 = vmatprep.mubr.f32.mxu0 0.0
        %2085 = vmatmul.mubr.f32.gmra.mrb[0].mxu0 %v715
        %v2086 = vpop.f32.mrb[0].mxu0
        %v2087 = vadd.f32 %v1939, %v2086
        %v2088 = vpop.f32.mrb[0].mxu0
        %2089 = vdwg.mxu0
        %s2090 = scalar_lea.vmem %s0, 40
        %v2091 = vld [vmem:[%s2090] sm:$0xf]
        %v2092 = vsel %vm349, %v210, 0
        %v2094 = vsel %vm349, %v211, 0
        %v2097 = vsel %vm382, %v2091, 0
        %2099 = vmatprep.subr.mxu0 0.0
        %2100 = vmatpush1.msra.mxu0 %v2097
        %2101 = vmatprep.subr.mxu0 0.0
        %2102 = vmatpush1.msra.mxu0 0.0
        %2103 = vmatprep.subr.mxu0 0.0
        %2104 = vmatpush1.msra.mxu0 0.0
        %2105 = vmatprep.subr.mxu0 0.0
        %2106 = vmatpush1.msra.mxu0 0.0
        %2107 = vmatprep.subr.mxu0 0.0
        %2108 = vmatpush1.msra.mxu0 0.0
        %2109 = vmatprep.subr.mxu0 0.0
        %2110 = vmatpush1.msra.mxu0 0.0
        %2111 = vmatprep.subr.mxu0 0.0
        %2112 = vmatpush1.msra.mxu0 0.0
        %2113 = vmatprep.subr.mxu0 0.0
        %2114 = vmatpush1.msra.mxu0 0.0
        %2115 = vmatprep.subr.mxu0 0.0
        %2116 = vmatpush1.msra.mxu0 0.0
        %2117 = vmatprep.subr.mxu0 0.0
        %2118 = vmatpush1.msra.mxu0 0.0
        %2119 = vmatprep.subr.mxu0 0.0
        %2120 = vmatpush1.msra.mxu0 0.0
        %2121 = vmatprep.subr.mxu0 0.0
        %2122 = vmatpush1.msra.mxu0 0.0
        %2123 = vmatprep.subr.mxu0 0.0
        %2124 = vmatpush1.msra.mxu0 0.0
        %2125 = vmatprep.subr.mxu0 0.0
        %2126 = vmatpush1.msra.mxu0 0.0
        %2127 = vmatprep.subr.mxu0 0.0
        %2128 = vmatpush1.msra.mxu0 0.0
        %2129 = vmatprep.subr.mxu0 0.0
        %2130 = vmatpush1.msra.mxu0 0.0
        %2131 = vmatprep.subr.mxu0 0.0
        %2132 = vmatpush1.msra.mxu0 0.0
        %2133 = vmatprep.subr.mxu0 0.0
        %2134 = vmatpush1.msra.mxu0 0.0
        %2135 = vmatprep.subr.mxu0 0.0
        %2136 = vmatpush1.msra.mxu0 0.0
        %2137 = vmatprep.subr.mxu0 0.0
        %2138 = vmatpush1.msra.mxu0 0.0
        %2139 = vmatprep.subr.mxu0 0.0
        %2140 = vmatpush1.msra.mxu0 0.0
        %2141 = vmatprep.subr.mxu0 0.0
        %2142 = vmatpush1.msra.mxu0 0.0
        %2143 = vmatprep.subr.mxu0 0.0
        %2144 = vmatpush1.msra.mxu0 0.0
        %2145 = vmatprep.subr.mxu0 0.0
        %2146 = vmatpush1.msra.mxu0 0.0
        %2147 = vmatprep.subr.mxu0 0.0
        %2148 = vmatpush1.msra.mxu0 0.0
        %2149 = vmatprep.subr.mxu0 0.0
        %2150 = vmatpush1.msra.mxu0 0.0
        %2151 = vmatprep.subr.mxu0 0.0
        %2152 = vmatpush1.msra.mxu0 0.0
        %2153 = vmatprep.subr.mxu0 0.0
        %2154 = vmatpush1.msra.mxu0 0.0
        %2155 = vmatprep.subr.mxu0 0.0
        %2156 = vmatpush1.msra.mxu0 0.0
        %2157 = vmatprep.subr.mxu0 0.0
        %2158 = vmatpush1.msra.mxu0 0.0
        %2159 = vmatprep.subr.mxu0 0.0
        %2160 = vmatpush1.msra.mxu0 0.0
        %2161 = vmatprep.subr.mxu0 0.0
        %2162 = vmatpush1.msra.mxu0 0.0
        %2163 = vmatprep.mubr.f32.mxu0 0.0
        %2164 = vmatmul.mubr.f32.gmra.mrb[0].mxu0 %v539
        %v2165 = vpop.f32.mrb[0].mxu0
        %v2166 = vadd.f32 0.0, %v2165
        %v2167 = vpop.f32.mrb[0].mxu0
        %2168 = vmatprep.mubr.f32.mxu0 0.0
        %2169 = vmatmul.mubr.f32.gmra.mrb[0].mxu0 %v541
        %v2170 = vpop.f32.mrb[0].mxu0
        %v2171 = vadd.f32 0.0, %v2170
        %v2172 = vpop.f32.mrb[0].mxu0
        %2173 = vmatprep.mubr.f32.mxu0 0.0
        %2174 = vmatmul.mubr.f32.gmra.mrb[0].mxu0 %v543
        %v2175 = vpop.f32.mrb[0].mxu0
        %v2176 = vadd.f32 0.0, %v2175
        %v2177 = vpop.f32.mrb[0].mxu0
        %2178 = vmatprep.mubr.f32.mxu0 0.0
        %2179 = vmatmul.mubr.f32.gmra.mrb[0].mxu0 %v545
        %v2180 = vpop.f32.mrb[0].mxu0
        %v2181 = vadd.f32 0.0, %v2180
        %v2182 = vpop.f32.mrb[0].mxu0
        %2183 = vmatprep.mubr.f32.mxu0 0.0
        %2184 = vmatmul.mubr.f32.gmra.mrb[0].mxu0 %v547
        %v2185 = vpop.f32.mrb[0].mxu0
        %v2186 = vadd.f32 0.0, %v2185
        %v2187 = vpop.f32.mrb[0].mxu0
        %2188 = vmatprep.mubr.f32.mxu0 0.0
        %2189 = vmatmul.mubr.f32.gmra.mrb[0].mxu0 %v549
        %v2190 = vpop.f32.mrb[0].mxu0
        %v2191 = vadd.f32 0.0, %v2190
        %v2192 = vpop.f32.mrb[0].mxu0
        %2193 = vmatprep.mubr.f32.mxu0 0.0
        %2194 = vmatmul.mubr.f32.gmra.mrb[0].mxu0 %v551
        %v2195 = vpop.f32.mrb[0].mxu0
        %v2196 = vadd.f32 0.0, %v2195
        %v2197 = vpop.f32.mrb[0].mxu0
        %2198 = vmatprep.mubr.f32.mxu0 0.0
        %2199 = vmatmul.mubr.f32.gmra.mrb[0].mxu0 %v553
        %v2200 = vpop.f32.mrb[0].mxu0
        %v2201 = vadd.f32 0.0, %v2200
        %v2202 = vpop.f32.mrb[0].mxu0
        %2203 = vmatprep.mubr.f32.mxu0 0.0
        %2204 = vmatmul.mubr.f32.gmra.mrb[0].mxu0 %v555
        %v2205 = vpop.f32.mrb[0].mxu0
        %v2206 = vadd.f32 0.0, %v2205
        %v2207 = vpop.f32.mrb[0].mxu0
        %2208 = vmatprep.mubr.f32.mxu0 0.0
        %2209 = vmatmul.mubr.f32.gmra.mrb[0].mxu0 %v557
        %v2210 = vpop.f32.mrb[0].mxu0
        %v2211 = vadd.f32 0.0, %v2210
        %v2212 = vpop.f32.mrb[0].mxu0
        %2213 = vmatprep.mubr.f32.mxu0 0.0
        %2214 = vmatmul.mubr.f32.gmra.mrb[0].mxu0 %v559
        %v2215 = vpop.f32.mrb[0].mxu0
        %v2216 = vadd.f32 0.0, %v2215
        %v2217 = vpop.f32.mrb[0].mxu0
        %2218 = vmatprep.mubr.f32.mxu0 0.0
        %2219 = vmatmul.mubr.f32.gmra.mrb[0].mxu0 %v561
        %v2220 = vpop.f32.mrb[0].mxu0
        %v2221 = vadd.f32 0.0, %v2220
        %v2222 = vpop.f32.mrb[0].mxu0
        %2223 = vmatprep.mubr.f32.mxu0 0.0
        %2224 = vmatmul.mubr.f32.gmra.mrb[0].mxu0 %v713
        %v2225 = vpop.f32.mrb[0].mxu0
        %v2226 = vadd.f32 0.0, %v2225
        %v2227 = vpop.f32.mrb[0].mxu0
        %2228 = vmatprep.mubr.f32.mxu0 0.0
        %2229 = vmatmul.mubr.f32.gmra.mrb[0].mxu0 %v715
        %v2230 = vpop.f32.mrb[0].mxu0
        %v2231 = vadd.f32 0.0, %v2230
        %v2232 = vpop.f32.mrb[0].mxu0
        %2233 = vmatprep.mubr.f32.mxu0 0.0
        %2234 = vmatmul.mubr.f32.gmra.mrb[0].mxu0 %v2092
        %v2235 = vpop.f32.mrb[0].mxu0
        %v2236 = vadd.f32 0.0, %v2235
        %v2237 = vpop.f32.mrb[0].mxu0
        %2238 = vmatprep.mubr.f32.mxu0 0.0
        %2239 = vmatmul.mubr.f32.gmra.mrb[0].mxu0 %v2094
        %v2240 = vpop.f32.mrb[0].mxu0
        %v2241 = vadd.f32 0.0, %v2240
        %v2242 = vpop.f32.mrb[0].mxu0
        %2243 = vdwg.mxu0
        %v2244 = vadd.f32 %v2012, %v2166
        %v2245 = vadd.f32 %v2017, %v2171
        %v2246 = vadd.f32 %v2022, %v2176
        %v2247 = vadd.f32 %v2027, %v2181
        %v2248 = vadd.f32 %v2032, %v2186
        %v2249 = vadd.f32 %v2037, %v2191
        %v2250 = vadd.f32 %v2042, %v2196
        %v2251 = vadd.f32 %v2047, %v2201
        %v2252 = vadd.f32 %v2052, %v2206
        %v2253 = vadd.f32 %v2057, %v2211
        %v2254 = vadd.f32 %v2062, %v2216
        %v2255 = vadd.f32 %v2067, %v2221
        %v2256 = vadd.f32 %v2072, %v2226
        %v2257 = vadd.f32 %v2077, %v2231
        %v2258 = vadd.f32 %v2082, %v2236
        %v2259 = vadd.f32 %v2087, %v2241
        %s2260 = scalar_lea.vmem %s0, 44
        %v2261 = vld [vmem:[%s2260] sm:$0xf]
        %v2262 = vsel %vm349, %v337, 0
        %v2264 = vsel %vm349, %v339, 0
        %v2267 = vsel %vm382, %v2261, 0
        %2269 = vmatprep.subr.mxu0 0.0
        %2270 = vmatpush1.msra.mxu0 %v2267
        %2271 = vmatprep.subr.mxu0 0.0
        %2272 = vmatpush1.msra.mxu0 0.0
        %2273 = vmatprep.subr.mxu0 0.0
        %2274 = vmatpush1.msra.mxu0 0.0
        %2275 = vmatprep.subr.mxu0 0.0
        %2276 = vmatpush1.msra.mxu0 0.0
        %2277 = vmatprep.subr.mxu0 0.0
        %2278 = vmatpush1.msra.mxu0 0.0
        %2279 = vmatprep.subr.mxu0 0.0
        %2280 = vmatpush1.msra.mxu0 0.0
        %2281 = vmatprep.subr.mxu0 0.0
        %2282 = vmatpush1.msra.mxu0 0.0
        %2283 = vmatprep.subr.mxu0 0.0
        %2284 = vmatpush1.msra.mxu0 0.0
        %2285 = vmatprep.subr.mxu0 0.0
        %2286 = vmatpush1.msra.mxu0 0.0
        %2287 = vmatprep.subr.mxu0 0.0
        %2288 = vmatpush1.msra.mxu0 0.0
        %2289 = vmatprep.subr.mxu0 0.0
        %2290 = vmatpush1.msra.mxu0 0.0
        %2291 = vmatprep.subr.mxu0 0.0
        %2292 = vmatpush1.msra.mxu0 0.0
        %2293 = vmatprep.subr.mxu0 0.0
        %2294 = vmatpush1.msra.mxu0 0.0
        %2295 = vmatprep.subr.mxu0 0.0
        %2296 = vmatpush1.msra.mxu0 0.0
        %2297 = vmatprep.subr.mxu0 0.0
        %2298 = vmatpush1.msra.mxu0 0.0
        %2299 = vmatprep.subr.mxu0 0.0
        %2300 = vmatpush1.msra.mxu0 0.0
        %2301 = vmatprep.subr.mxu0 0.0
        %2302 = vmatpush1.msra.mxu0 0.0
        %2303 = vmatprep.subr.mxu0 0.0
        %2304 = vmatpush1.msra.mxu0 0.0
        %2305 = vmatprep.subr.mxu0 0.0
        %2306 = vmatpush1.msra.mxu0 0.0
        %2307 = vmatprep.subr.mxu0 0.0
        %2308 = vmatpush1.msra.mxu0 0.0
        %2309 = vmatprep.subr.mxu0 0.0
        %2310 = vmatpush1.msra.mxu0 0.0
        %2311 = vmatprep.subr.mxu0 0.0
        %2312 = vmatpush1.msra.mxu0 0.0
        %2313 = vmatprep.subr.mxu0 0.0
        %2314 = vmatpush1.msra.mxu0 0.0
        %2315 = vmatprep.subr.mxu0 0.0
        %2316 = vmatpush1.msra.mxu0 0.0
        %2317 = vmatprep.subr.mxu0 0.0
        %2318 = vmatpush1.msra.mxu0 0.0
        %2319 = vmatprep.subr.mxu0 0.0
        %2320 = vmatpush1.msra.mxu0 0.0
        %2321 = vmatprep.subr.mxu0 0.0
        %2322 = vmatpush1.msra.mxu0 0.0
        %2323 = vmatprep.subr.mxu0 0.0
        %2324 = vmatpush1.msra.mxu0 0.0
        %2325 = vmatprep.subr.mxu0 0.0
        %2326 = vmatpush1.msra.mxu0 0.0
        %2327 = vmatprep.subr.mxu0 0.0
        %2328 = vmatpush1.msra.mxu0 0.0
        %2329 = vmatprep.subr.mxu0 0.0
        %2330 = vmatpush1.msra.mxu0 0.0
        %2331 = vmatprep.subr.mxu0 0.0
        %2332 = vmatpush1.msra.mxu0 0.0
        %2333 = vmatprep.mubr.f32.mxu0 0.0
        %2334 = vmatmul.mubr.f32.gmra.mrb[0].mxu0 %v358
        %v2335 = vpop.f32.mrb[0].mxu0
        %v2336 = vadd.f32 0.0, %v2335
        %v2337 = vpop.f32.mrb[0].mxu0
        %2338 = vmatprep.mubr.f32.mxu0 0.0
        %2339 = vmatmul.mubr.f32.gmra.mrb[0].mxu0 %v360
        %v2340 = vpop.f32.mrb[0].mxu0
        %v2341 = vadd.f32 0.0, %v2340
        %v2342 = vpop.f32.mrb[0].mxu0
        %2343 = vmatprep.mubr.f32.mxu0 0.0
        %2344 = vmatmul.mubr.f32.gmra.mrb[0].mxu0 %v362
        %v2345 = vpop.f32.mrb[0].mxu0
        %v2346 = vadd.f32 0.0, %v2345
        %v2347 = vpop.f32.mrb[0].mxu0
        %2348 = vmatprep.mubr.f32.mxu0 0.0
        %2349 = vmatmul.mubr.f32.gmra.mrb[0].mxu0 %v364
        %v2350 = vpop.f32.mrb[0].mxu0
        %v2351 = vadd.f32 0.0, %v2350
        %v2352 = vpop.f32.mrb[0].mxu0
        %2353 = vmatprep.mubr.f32.mxu0 0.0
        %2354 = vmatmul.mubr.f32.gmra.mrb[0].mxu0 %v366
        %v2355 = vpop.f32.mrb[0].mxu0
        %v2356 = vadd.f32 0.0, %v2355
        %v2357 = vpop.f32.mrb[0].mxu0
        %2358 = vmatprep.mubr.f32.mxu0 0.0
        %2359 = vmatmul.mubr.f32.gmra.mrb[0].mxu0 %v368
        %v2360 = vpop.f32.mrb[0].mxu0
        %v2361 = vadd.f32 0.0, %v2360
        %v2362 = vpop.f32.mrb[0].mxu0
        %2363 = vmatprep.mubr.f32.mxu0 0.0
        %2364 = vmatmul.mubr.f32.gmra.mrb[0].mxu0 %v370
        %v2365 = vpop.f32.mrb[0].mxu0
        %v2366 = vadd.f32 0.0, %v2365
        %v2367 = vpop.f32.mrb[0].mxu0
        %2368 = vmatprep.mubr.f32.mxu0 0.0
        %2369 = vmatmul.mubr.f32.gmra.mrb[0].mxu0 %v372
        %v2370 = vpop.f32.mrb[0].mxu0
        %v2371 = vadd.f32 0.0, %v2370
        %v2372 = vpop.f32.mrb[0].mxu0
        %2373 = vmatprep.mubr.f32.mxu0 0.0
        %2374 = vmatmul.mubr.f32.gmra.mrb[0].mxu0 %v374
        %v2375 = vpop.f32.mrb[0].mxu0
        %v2376 = vadd.f32 0.0, %v2375
        %v2377 = vpop.f32.mrb[0].mxu0
        %2378 = vmatprep.mubr.f32.mxu0 0.0
        %2379 = vmatmul.mubr.f32.gmra.mrb[0].mxu0 %v376
        %v2380 = vpop.f32.mrb[0].mxu0
        %v2381 = vadd.f32 0.0, %v2380
        %v2382 = vpop.f32.mrb[0].mxu0
        %2383 = vmatprep.mubr.f32.mxu0 0.0
        %2384 = vmatmul.mubr.f32.gmra.mrb[0].mxu0 %v378
        %v2385 = vpop.f32.mrb[0].mxu0
        %v2386 = vadd.f32 0.0, %v2385
        %v2387 = vpop.f32.mrb[0].mxu0
        %2388 = vmatprep.mubr.f32.mxu0 0.0
        %2389 = vmatmul.mubr.f32.gmra.mrb[0].mxu0 %v380
        %v2390 = vpop.f32.mrb[0].mxu0
        %v2391 = vadd.f32 0.0, %v2390
        %v2392 = vpop.f32.mrb[0].mxu0
        %2393 = vmatprep.mubr.f32.mxu0 0.0
        %2394 = vmatmul.mubr.f32.gmra.mrb[0].mxu0 %v883
        %v2395 = vpop.f32.mrb[0].mxu0
        %v2396 = vadd.f32 0.0, %v2395
        %v2397 = vpop.f32.mrb[0].mxu0
        %2398 = vmatprep.mubr.f32.mxu0 0.0
        %2399 = vmatmul.mubr.f32.gmra.mrb[0].mxu0 %v885
        %v2400 = vpop.f32.mrb[0].mxu0
        %v2401 = vadd.f32 0.0, %v2400
        %v2402 = vpop.f32.mrb[0].mxu0
        %2403 = vmatprep.mubr.f32.mxu0 0.0
        %2404 = vmatmul.mubr.f32.gmra.mrb[0].mxu0 %v2262
        %v2405 = vpop.f32.mrb[0].mxu0
        %v2406 = vadd.f32 0.0, %v2405
        %v2407 = vpop.f32.mrb[0].mxu0
        %2408 = vmatprep.mubr.f32.mxu0 0.0
        %2409 = vmatmul.mubr.f32.gmra.mrb[0].mxu0 %v2264
        %v2410 = vpop.f32.mrb[0].mxu0
        %v2411 = vadd.f32 0.0, %v2410
        %v2412 = vpop.f32.mrb[0].mxu0
        %2413 = vdwg.mxu0
        %v2414 = vadd.f32 %v2244, %v2336
        %v2415 = vadd.f32 %v2245, %v2341
        %v2416 = vadd.f32 %v2246, %v2346
        %v2417 = vadd.f32 %v2247, %v2351
        %v2418 = vadd.f32 %v2248, %v2356
        %v2419 = vadd.f32 %v2249, %v2361
        %v2420 = vadd.f32 %v2250, %v2366
        %v2421 = vadd.f32 %v2251, %v2371
        %v2422 = vadd.f32 %v2252, %v2376
        %v2423 = vadd.f32 %v2253, %v2381
        %v2424 = vadd.f32 %v2254, %v2386
        %v2425 = vadd.f32 %v2255, %v2391
        %v2426 = vadd.f32 %v2256, %v2396
        %v2427 = vadd.f32 %v2257, %v2401
        %v2428 = vadd.f32 %v2258, %v2406
        %v2429 = vadd.f32 %v2259, %v2411
        %v2430 = vadd.f32 %v2414, %v1055
        %v2431 = vadd.f32 %v2415, %v1055
        %v2432 = vadd.f32 %v2416, %v1055
        %v2433 = vadd.f32 %v2417, %v1055
        %v2434 = vadd.f32 %v2418, %v1055
        %v2435 = vadd.f32 %v2419, %v1055
        %v2436 = vadd.f32 %v2420, %v1055
        %v2437 = vadd.f32 %v2421, %v1055
        %v2438 = vadd.f32 %v2422, %v1055
        %v2439 = vadd.f32 %v2423, %v1055
        %v2440 = vadd.f32 %v2424, %v1055
        %v2441 = vadd.f32 %v2425, %v1055
        %v2442 = vadd.f32 %v2426, %v1055
        %v2443 = vadd.f32 %v2427, %v1055
        %v2444 = vadd.f32 %v2428, %v1055
        %v2445 = vadd.f32 %v2429, %v1055
        %s2446 = scalar_lea.vmem %s173, 256 [#allocation2]
        %2447 = vst.msk [vmem:[%s2446] sm:$0xff] %vm349, %v2430
        %2448 = vst.msk [vmem:[%s2446 + $0x8] sm:$0xff] %vm349, %v2431
        %2449 = vst.msk [vmem:[%s2446 + $0x10] sm:$0xff] %vm349, %v2432
        %2450 = vst.msk [vmem:[%s2446 + $0x18] sm:$0xff] %vm349, %v2433
        %2451 = vst.msk [vmem:[%s2446 + $0x20] sm:$0xff] %vm349, %v2434
        %2452 = vst.msk [vmem:[%s2446 + $0x28] sm:$0xff] %vm349, %v2435
        %2453 = vst.msk [vmem:[%s2446 + $0x30] sm:$0xff] %vm349, %v2436
        %2454 = vst.msk [vmem:[%s2446 + $0x38] sm:$0xff] %vm349, %v2437
        %2455 = vst.msk [vmem:[%s2446 + $0x40] sm:$0xff] %vm349, %v2438
        %2456 = vst.msk [vmem:[%s2446 + $0x48] sm:$0xff] %vm349, %v2439
        %2457 = vst.msk [vmem:[%s2446 + $0x50] sm:$0xff] %vm349, %v2440
        %2458 = vst.msk [vmem:[%s2446 + $0x58] sm:$0xff] %vm349, %v2441
        %2459 = vst.msk [vmem:[%s2446 + $0x60] sm:$0xff] %vm349, %v2442
        %2460 = vst.msk [vmem:[%s2446 + $0x68] sm:$0xff] %vm349, %v2443
        %2461 = vst.msk [vmem:[%s2446 + $0x70] sm:$0xff] %vm349, %v2444
        %2462 = vst.msk [vmem:[%s2446 + $0x78] sm:$0xff] %vm349, %v2445
        %s2463 = scalar_lea.vmem %s0, 48
        %v2464 = vld [vmem:[%s2463] sm:$0xf]
        %s2465 = scalar_lea.vmem %s0, 52
        %v2466 = vld [vmem:[%s2465] sm:$0xf]
        %v2468 = vsel %vm382, %v2466, 0
        %2470 = vmatprep.subr.mxu0 0.0
        %2471 = vmatpush1.msra.mxu0 %v2468
        %2472 = vmatprep.subr.mxu0 0.0
        %2473 = vmatpush1.msra.mxu0 0.0
        %2474 = vmatprep.subr.mxu0 0.0
        %2475 = vmatpush1.msra.mxu0 0.0
        %2476 = vmatprep.subr.mxu0 0.0
        %2477 = vmatpush1.msra.mxu0 0.0
        %2478 = vmatprep.subr.mxu0 0.0
        %2479 = vmatpush1.msra.mxu0 0.0
        %2480 = vmatprep.subr.mxu0 0.0
        %2481 = vmatpush1.msra.mxu0 0.0
        %2482 = vmatprep.subr.mxu0 0.0
        %2483 = vmatpush1.msra.mxu0 0.0
        %2484 = vmatprep.subr.mxu0 0.0
        %2485 = vmatpush1.msra.mxu0 0.0
        %2486 = vmatprep.subr.mxu0 0.0
        %2487 = vmatpush1.msra.mxu0 0.0
        %2488 = vmatprep.subr.mxu0 0.0
        %2489 = vmatpush1.msra.mxu0 0.0
        %2490 = vmatprep.subr.mxu0 0.0
        %2491 = vmatpush1.msra.mxu0 0.0
        %2492 = vmatprep.subr.mxu0 0.0
        %2493 = vmatpush1.msra.mxu0 0.0
        %2494 = vmatprep.subr.mxu0 0.0
        %2495 = vmatpush1.msra.mxu0 0.0
        %2496 = vmatprep.subr.mxu0 0.0
        %2497 = vmatpush1.msra.mxu0 0.0
        %2498 = vmatprep.subr.mxu0 0.0
        %2499 = vmatpush1.msra.mxu0 0.0
        %2500 = vmatprep.subr.mxu0 0.0
        %2501 = vmatpush1.msra.mxu0 0.0
        %2502 = vmatprep.subr.mxu0 0.0
        %2503 = vmatpush1.msra.mxu0 0.0
        %2504 = vmatprep.subr.mxu0 0.0
        %2505 = vmatpush1.msra.mxu0 0.0
        %2506 = vmatprep.subr.mxu0 0.0
        %2507 = vmatpush1.msra.mxu0 0.0
        %2508 = vmatprep.subr.mxu0 0.0
        %2509 = vmatpush1.msra.mxu0 0.0
        %2510 = vmatprep.subr.mxu0 0.0
        %2511 = vmatpush1.msra.mxu0 0.0
        %2512 = vmatprep.subr.mxu0 0.0
        %2513 = vmatpush1.msra.mxu0 0.0
        %2514 = vmatprep.subr.mxu0 0.0
        %2515 = vmatpush1.msra.mxu0 0.0
        %2516 = vmatprep.subr.mxu0 0.0
        %2517 = vmatpush1.msra.mxu0 0.0
        %2518 = vmatprep.subr.mxu0 0.0
        %2519 = vmatpush1.msra.mxu0 0.0
        %2520 = vmatprep.subr.mxu0 0.0
        %2521 = vmatpush1.msra.mxu0 0.0
        %2522 = vmatprep.subr.mxu0 0.0
        %2523 = vmatpush1.msra.mxu0 0.0
        %2524 = vmatprep.subr.mxu0 0.0
        %2525 = vmatpush1.msra.mxu0 0.0
        %2526 = vmatprep.subr.mxu0 0.0
        %2527 = vmatpush1.msra.mxu0 0.0
        %2528 = vmatprep.subr.mxu0 0.0
        %2529 = vmatpush1.msra.mxu0 0.0
        %2530 = vmatprep.subr.mxu0 0.0
        %2531 = vmatpush1.msra.mxu0 0.0
        %2532 = vmatprep.subr.mxu0 0.0
        %2533 = vmatpush1.msra.mxu0 0.0
        %2534 = vmatprep.mubr.f32.mxu0 0.0
        %2535 = vmatmul.mubr.f32.gmra.mrb[0].mxu0 %v1097
        %v2536 = vpop.f32.mrb[0].mxu0
        %v2537 = vadd.f32 0.0, %v2536
        %v2538 = vpop.f32.mrb[0].mxu0
        %2539 = vmatprep.mubr.f32.mxu0 0.0
        %2540 = vmatmul.mubr.f32.gmra.mrb[0].mxu0 %v1099
        %v2541 = vpop.f32.mrb[0].mxu0
        %v2542 = vadd.f32 0.0, %v2541
        %v2543 = vpop.f32.mrb[0].mxu0
        %2544 = vmatprep.mubr.f32.mxu0 0.0
        %2545 = vmatmul.mubr.f32.gmra.mrb[0].mxu0 %v1101
        %v2546 = vpop.f32.mrb[0].mxu0
        %v2547 = vadd.f32 0.0, %v2546
        %v2548 = vpop.f32.mrb[0].mxu0
        %2549 = vmatprep.mubr.f32.mxu0 0.0
        %2550 = vmatmul.mubr.f32.gmra.mrb[0].mxu0 %v1103
        %v2551 = vpop.f32.mrb[0].mxu0
        %v2552 = vadd.f32 0.0, %v2551
        %v2553 = vpop.f32.mrb[0].mxu0
        %2554 = vmatprep.mubr.f32.mxu0 0.0
        %2555 = vmatmul.mubr.f32.gmra.mrb[0].mxu0 %v1105
        %v2556 = vpop.f32.mrb[0].mxu0
        %v2557 = vadd.f32 0.0, %v2556
        %v2558 = vpop.f32.mrb[0].mxu0
        %2559 = vmatprep.mubr.f32.mxu0 0.0
        %2560 = vmatmul.mubr.f32.gmra.mrb[0].mxu0 %v1107
        %v2561 = vpop.f32.mrb[0].mxu0
        %v2562 = vadd.f32 0.0, %v2561
        %v2563 = vpop.f32.mrb[0].mxu0
        %2564 = vmatprep.mubr.f32.mxu0 0.0
        %2565 = vmatmul.mubr.f32.gmra.mrb[0].mxu0 %v1109
        %v2566 = vpop.f32.mrb[0].mxu0
        %v2567 = vadd.f32 0.0, %v2566
        %v2568 = vpop.f32.mrb[0].mxu0
        %2569 = vmatprep.mubr.f32.mxu0 0.0
        %2570 = vmatmul.mubr.f32.gmra.mrb[0].mxu0 %v1111
        %v2571 = vpop.f32.mrb[0].mxu0
        %v2572 = vadd.f32 0.0, %v2571
        %v2573 = vpop.f32.mrb[0].mxu0
        %2574 = vmatprep.mubr.f32.mxu0 0.0
        %2575 = vmatmul.mubr.f32.gmra.mrb[0].mxu0 %v1113
        %v2576 = vpop.f32.mrb[0].mxu0
        %v2577 = vadd.f32 0.0, %v2576
        %v2578 = vpop.f32.mrb[0].mxu0
        %2579 = vmatprep.mubr.f32.mxu0 0.0
        %2580 = vmatmul.mubr.f32.gmra.mrb[0].mxu0 %v1115
        %v2581 = vpop.f32.mrb[0].mxu0
        %v2582 = vadd.f32 0.0, %v2581
        %v2583 = vpop.f32.mrb[0].mxu0
        %2584 = vmatprep.mubr.f32.mxu0 0.0
        %2585 = vmatmul.mubr.f32.gmra.mrb[0].mxu0 %v1117
        %v2586 = vpop.f32.mrb[0].mxu0
        %v2587 = vadd.f32 0.0, %v2586
        %v2588 = vpop.f32.mrb[0].mxu0
        %2589 = vmatprep.mubr.f32.mxu0 0.0
        %2590 = vmatmul.mubr.f32.gmra.mrb[0].mxu0 %v1119
        %v2591 = vpop.f32.mrb[0].mxu0
        %v2592 = vadd.f32 0.0, %v2591
        %v2593 = vpop.f32.mrb[0].mxu0
        %2594 = vmatprep.mubr.f32.mxu0 0.0
        %2595 = vmatmul.mubr.f32.gmra.mrb[0].mxu0 %v1121
        %v2596 = vpop.f32.mrb[0].mxu0
        %v2597 = vadd.f32 0.0, %v2596
        %v2598 = vpop.f32.mrb[0].mxu0
        %2599 = vmatprep.mubr.f32.mxu0 0.0
        %2600 = vmatmul.mubr.f32.gmra.mrb[0].mxu0 %v1123
        %v2601 = vpop.f32.mrb[0].mxu0
        %v2602 = vadd.f32 0.0, %v2601
        %v2603 = vpop.f32.mrb[0].mxu0
        %2604 = vmatprep.mubr.f32.mxu0 0.0
        %2605 = vmatmul.mubr.f32.gmra.mrb[0].mxu0 %v1589
        %v2606 = vpop.f32.mrb[0].mxu0
        %v2607 = vadd.f32 0.0, %v2606
        %v2608 = vpop.f32.mrb[0].mxu0
        %2609 = vmatprep.mubr.f32.mxu0 0.0
        %2610 = vmatmul.mubr.f32.gmra.mrb[0].mxu0 %v1591
        %v2611 = vpop.f32.mrb[0].mxu0
        %v2612 = vadd.f32 0.0, %v2611
        %v2613 = vpop.f32.mrb[0].mxu0
        %2614 = vdwg.mxu0
        %v2616 = vsel %vm382, %v2464, 0
        %2618 = vmatprep.subr.mxu0 0.0
        %2619 = vmatpush1.msra.mxu0 %v2616
        %2620 = vmatprep.subr.mxu0 0.0
        %2621 = vmatpush1.msra.mxu0 0.0
        %2622 = vmatprep.subr.mxu0 0.0
        %2623 = vmatpush1.msra.mxu0 0.0
        %2624 = vmatprep.subr.mxu0 0.0
        %2625 = vmatpush1.msra.mxu0 0.0
        %2626 = vmatprep.subr.mxu0 0.0
        %2627 = vmatpush1.msra.mxu0 0.0
        %2628 = vmatprep.subr.mxu0 0.0
        %2629 = vmatpush1.msra.mxu0 0.0
        %2630 = vmatprep.subr.mxu0 0.0
        %2631 = vmatpush1.msra.mxu0 0.0
        %2632 = vmatprep.subr.mxu0 0.0
        %2633 = vmatpush1.msra.mxu0 0.0
        %2634 = vmatprep.subr.mxu0 0.0
        %2635 = vmatpush1.msra.mxu0 0.0
        %2636 = vmatprep.subr.mxu0 0.0
        %2637 = vmatpush1.msra.mxu0 0.0
        %2638 = vmatprep.subr.mxu0 0.0
        %2639 = vmatpush1.msra.mxu0 0.0
        %2640 = vmatprep.subr.mxu0 0.0
        %2641 = vmatpush1.msra.mxu0 0.0
        %2642 = vmatprep.subr.mxu0 0.0
        %2643 = vmatpush1.msra.mxu0 0.0
        %2644 = vmatprep.subr.mxu0 0.0
        %2645 = vmatpush1.msra.mxu0 0.0
        %2646 = vmatprep.subr.mxu0 0.0
        %2647 = vmatpush1.msra.mxu0 0.0
        %2648 = vmatprep.subr.mxu0 0.0
        %2649 = vmatpush1.msra.mxu0 0.0
        %2650 = vmatprep.subr.mxu0 0.0
        %2651 = vmatpush1.msra.mxu0 0.0
        %2652 = vmatprep.subr.mxu0 0.0
        %2653 = vmatpush1.msra.mxu0 0.0
        %2654 = vmatprep.subr.mxu0 0.0
        %2655 = vmatpush1.msra.mxu0 0.0
        %2656 = vmatprep.subr.mxu0 0.0
        %2657 = vmatpush1.msra.mxu0 0.0
        %2658 = vmatprep.subr.mxu0 0.0
        %2659 = vmatpush1.msra.mxu0 0.0
        %2660 = vmatprep.subr.mxu0 0.0
        %2661 = vmatpush1.msra.mxu0 0.0
        %2662 = vmatprep.subr.mxu0 0.0
        %2663 = vmatpush1.msra.mxu0 0.0
        %2664 = vmatprep.subr.mxu0 0.0
        %2665 = vmatpush1.msra.mxu0 0.0
        %2666 = vmatprep.subr.mxu0 0.0
        %2667 = vmatpush1.msra.mxu0 0.0
        %2668 = vmatprep.subr.mxu0 0.0
        %2669 = vmatpush1.msra.mxu0 0.0
        %2670 = vmatprep.subr.mxu0 0.0
        %2671 = vmatpush1.msra.mxu0 0.0
        %2672 = vmatprep.subr.mxu0 0.0
        %2673 = vmatpush1.msra.mxu0 0.0
        %2674 = vmatprep.subr.mxu0 0.0
        %2675 = vmatpush1.msra.mxu0 0.0
        %2676 = vmatprep.subr.mxu0 0.0
        %2677 = vmatpush1.msra.mxu0 0.0
        %2678 = vmatprep.subr.mxu0 0.0
        %2679 = vmatpush1.msra.mxu0 0.0
        %2680 = vmatprep.subr.mxu0 0.0
        %2681 = vmatpush1.msra.mxu0 0.0
        %2682 = vmatprep.mubr.f32.mxu0 0.0
        %2683 = vmatmul.mubr.f32.gmra.mrb[0].mxu0 %v354
        %v2684 = vpop.f32.mrb[0].mxu0
        %v2685 = vadd.f32 %v2537, %v2684
        %v2686 = vpop.f32.mrb[0].mxu0
        %2687 = vmatprep.mubr.f32.mxu0 0.0
        %2688 = vmatmul.mubr.f32.gmra.mrb[0].mxu0 %v356
        %v2689 = vpop.f32.mrb[0].mxu0
        %v2690 = vadd.f32 %v2542, %v2689
        %v2691 = vpop.f32.mrb[0].mxu0
        %2692 = vmatprep.mubr.f32.mxu0 0.0
        %2693 = vmatmul.mubr.f32.gmra.mrb[0].mxu0 %v358
        %v2694 = vpop.f32.mrb[0].mxu0
        %v2695 = vadd.f32 %v2547, %v2694
        %v2696 = vpop.f32.mrb[0].mxu0
        %2697 = vmatprep.mubr.f32.mxu0 0.0
        %2698 = vmatmul.mubr.f32.gmra.mrb[0].mxu0 %v360
        %v2699 = vpop.f32.mrb[0].mxu0
        %v2700 = vadd.f32 %v2552, %v2699
        %v2701 = vpop.f32.mrb[0].mxu0
        %2702 = vmatprep.mubr.f32.mxu0 0.0
        %2703 = vmatmul.mubr.f32.gmra.mrb[0].mxu0 %v362
        %v2704 = vpop.f32.mrb[0].mxu0
        %v2705 = vadd.f32 %v2557, %v2704
        %v2706 = vpop.f32.mrb[0].mxu0
        %2707 = vmatprep.mubr.f32.mxu0 0.0
        %2708 = vmatmul.mubr.f32.gmra.mrb[0].mxu0 %v364
        %v2709 = vpop.f32.mrb[0].mxu0
        %v2710 = vadd.f32 %v2562, %v2709
        %v2711 = vpop.f32.mrb[0].mxu0
        %2712 = vmatprep.mubr.f32.mxu0 0.0
        %2713 = vmatmul.mubr.f32.gmra.mrb[0].mxu0 %v366
        %v2714 = vpop.f32.mrb[0].mxu0
        %v2715 = vadd.f32 %v2567, %v2714
        %v2716 = vpop.f32.mrb[0].mxu0
        %2717 = vmatprep.mubr.f32.mxu0 0.0
        %2718 = vmatmul.mubr.f32.gmra.mrb[0].mxu0 %v368
        %v2719 = vpop.f32.mrb[0].mxu0
        %v2720 = vadd.f32 %v2572, %v2719
        %v2721 = vpop.f32.mrb[0].mxu0
        %2722 = vmatprep.mubr.f32.mxu0 0.0
        %2723 = vmatmul.mubr.f32.gmra.mrb[0].mxu0 %v370
        %v2724 = vpop.f32.mrb[0].mxu0
        %v2725 = vadd.f32 %v2577, %v2724
        %v2726 = vpop.f32.mrb[0].mxu0
        %2727 = vmatprep.mubr.f32.mxu0 0.0
        %2728 = vmatmul.mubr.f32.gmra.mrb[0].mxu0 %v372
        %v2729 = vpop.f32.mrb[0].mxu0
        %v2730 = vadd.f32 %v2582, %v2729
        %v2731 = vpop.f32.mrb[0].mxu0
        %2732 = vmatprep.mubr.f32.mxu0 0.0
        %2733 = vmatmul.mubr.f32.gmra.mrb[0].mxu0 %v374
        %v2734 = vpop.f32.mrb[0].mxu0
        %v2735 = vadd.f32 %v2587, %v2734
        %v2736 = vpop.f32.mrb[0].mxu0
        %2737 = vmatprep.mubr.f32.mxu0 0.0
        %2738 = vmatmul.mubr.f32.gmra.mrb[0].mxu0 %v376
        %v2739 = vpop.f32.mrb[0].mxu0
        %v2740 = vadd.f32 %v2592, %v2739
        %v2741 = vpop.f32.mrb[0].mxu0
        %2742 = vmatprep.mubr.f32.mxu0 0.0
        %2743 = vmatmul.mubr.f32.gmra.mrb[0].mxu0 %v378
        %v2744 = vpop.f32.mrb[0].mxu0
        %v2745 = vadd.f32 %v2597, %v2744
        %v2746 = vpop.f32.mrb[0].mxu0
        %2747 = vmatprep.mubr.f32.mxu0 0.0
        %2748 = vmatmul.mubr.f32.gmra.mrb[0].mxu0 %v380
        %v2749 = vpop.f32.mrb[0].mxu0
        %v2750 = vadd.f32 %v2602, %v2749
        %v2751 = vpop.f32.mrb[0].mxu0
        %2752 = vmatprep.mubr.f32.mxu0 0.0
        %2753 = vmatmul.mubr.f32.gmra.mrb[0].mxu0 %v883
        %v2754 = vpop.f32.mrb[0].mxu0
        %v2755 = vadd.f32 %v2607, %v2754
        %v2756 = vpop.f32.mrb[0].mxu0
        %2757 = vmatprep.mubr.f32.mxu0 0.0
        %2758 = vmatmul.mubr.f32.gmra.mrb[0].mxu0 %v885
        %v2759 = vpop.f32.mrb[0].mxu0
        %v2760 = vadd.f32 %v2612, %v2759
        %v2761 = vpop.f32.mrb[0].mxu0
        %2762 = vdwg.mxu0
        %s2763 = scalar_lea.vmem %s0, 56
        %v2764 = vld [vmem:[%s2763] sm:$0xf]
        %v2766 = vsel %vm382, %v2764, 0
        %2768 = vmatprep.subr.mxu0 0.0
        %2769 = vmatpush1.msra.mxu0 %v2766
        %2770 = vmatprep.subr.mxu0 0.0
        %2771 = vmatpush1.msra.mxu0 0.0
        %2772 = vmatprep.subr.mxu0 0.0
        %2773 = vmatpush1.msra.mxu0 0.0
        %2774 = vmatprep.subr.mxu0 0.0
        %2775 = vmatpush1.msra.mxu0 0.0
        %2776 = vmatprep.subr.mxu0 0.0
        %2777 = vmatpush1.msra.mxu0 0.0
        %2778 = vmatprep.subr.mxu0 0.0
        %2779 = vmatpush1.msra.mxu0 0.0
        %2780 = vmatprep.subr.mxu0 0.0
        %2781 = vmatpush1.msra.mxu0 0.0
        %2782 = vmatprep.subr.mxu0 0.0
        %2783 = vmatpush1.msra.mxu0 0.0
        %2784 = vmatprep.subr.mxu0 0.0
        %2785 = vmatpush1.msra.mxu0 0.0
        %2786 = vmatprep.subr.mxu0 0.0
        %2787 = vmatpush1.msra.mxu0 0.0
        %2788 = vmatprep.subr.mxu0 0.0
        %2789 = vmatpush1.msra.mxu0 0.0
        %2790 = vmatprep.subr.mxu0 0.0
        %2791 = vmatpush1.msra.mxu0 0.0
        %2792 = vmatprep.subr.mxu0 0.0
        %2793 = vmatpush1.msra.mxu0 0.0
        %2794 = vmatprep.subr.mxu0 0.0
        %2795 = vmatpush1.msra.mxu0 0.0
        %2796 = vmatprep.subr.mxu0 0.0
        %2797 = vmatpush1.msra.mxu0 0.0
        %2798 = vmatprep.subr.mxu0 0.0
        %2799 = vmatpush1.msra.mxu0 0.0
        %2800 = vmatprep.subr.mxu0 0.0
        %2801 = vmatpush1.msra.mxu0 0.0
        %2802 = vmatprep.subr.mxu0 0.0
        %2803 = vmatpush1.msra.mxu0 0.0
        %2804 = vmatprep.subr.mxu0 0.0
        %2805 = vmatpush1.msra.mxu0 0.0
        %2806 = vmatprep.subr.mxu0 0.0
        %2807 = vmatpush1.msra.mxu0 0.0
        %2808 = vmatprep.subr.mxu0 0.0
        %2809 = vmatpush1.msra.mxu0 0.0
        %2810 = vmatprep.subr.mxu0 0.0
        %2811 = vmatpush1.msra.mxu0 0.0
        %2812 = vmatprep.subr.mxu0 0.0
        %2813 = vmatpush1.msra.mxu0 0.0
        %2814 = vmatprep.subr.mxu0 0.0
        %2815 = vmatpush1.msra.mxu0 0.0
        %2816 = vmatprep.subr.mxu0 0.0
        %2817 = vmatpush1.msra.mxu0 0.0
        %2818 = vmatprep.subr.mxu0 0.0
        %2819 = vmatpush1.msra.mxu0 0.0
        %2820 = vmatprep.subr.mxu0 0.0
        %2821 = vmatpush1.msra.mxu0 0.0
        %2822 = vmatprep.subr.mxu0 0.0
        %2823 = vmatpush1.msra.mxu0 0.0
        %2824 = vmatprep.subr.mxu0 0.0
        %2825 = vmatpush1.msra.mxu0 0.0
        %2826 = vmatprep.subr.mxu0 0.0
        %2827 = vmatpush1.msra.mxu0 0.0
        %2828 = vmatprep.subr.mxu0 0.0
        %2829 = vmatpush1.msra.mxu0 0.0
        %2830 = vmatprep.subr.mxu0 0.0
        %2831 = vmatpush1.msra.mxu0 0.0
        %2832 = vmatprep.mubr.f32.mxu0 0.0
        %2833 = vmatmul.mubr.f32.gmra.mrb[0].mxu0 %v358
        %v2834 = vpop.f32.mrb[0].mxu0
        %v2835 = vadd.f32 0.0, %v2834
        %v2836 = vpop.f32.mrb[0].mxu0
        %2837 = vmatprep.mubr.f32.mxu0 0.0
        %2838 = vmatmul.mubr.f32.gmra.mrb[0].mxu0 %v360
        %v2839 = vpop.f32.mrb[0].mxu0
        %v2840 = vadd.f32 0.0, %v2839
        %v2841 = vpop.f32.mrb[0].mxu0
        %2842 = vmatprep.mubr.f32.mxu0 0.0
        %2843 = vmatmul.mubr.f32.gmra.mrb[0].mxu0 %v362
        %v2844 = vpop.f32.mrb[0].mxu0
        %v2845 = vadd.f32 0.0, %v2844
        %v2846 = vpop.f32.mrb[0].mxu0
        %2847 = vmatprep.mubr.f32.mxu0 0.0
        %2848 = vmatmul.mubr.f32.gmra.mrb[0].mxu0 %v364
        %v2849 = vpop.f32.mrb[0].mxu0
        %v2850 = vadd.f32 0.0, %v2849
        %v2851 = vpop.f32.mrb[0].mxu0
        %2852 = vmatprep.mubr.f32.mxu0 0.0
        %2853 = vmatmul.mubr.f32.gmra.mrb[0].mxu0 %v366
        %v2854 = vpop.f32.mrb[0].mxu0
        %v2855 = vadd.f32 0.0, %v2854
        %v2856 = vpop.f32.mrb[0].mxu0
        %2857 = vmatprep.mubr.f32.mxu0 0.0
        %2858 = vmatmul.mubr.f32.gmra.mrb[0].mxu0 %v368
        %v2859 = vpop.f32.mrb[0].mxu0
        %v2860 = vadd.f32 0.0, %v2859
        %v2861 = vpop.f32.mrb[0].mxu0
        %2862 = vmatprep.mubr.f32.mxu0 0.0
        %2863 = vmatmul.mubr.f32.gmra.mrb[0].mxu0 %v370
        %v2864 = vpop.f32.mrb[0].mxu0
        %v2865 = vadd.f32 0.0, %v2864
        %v2866 = vpop.f32.mrb[0].mxu0
        %2867 = vmatprep.mubr.f32.mxu0 0.0
        %2868 = vmatmul.mubr.f32.gmra.mrb[0].mxu0 %v372
        %v2869 = vpop.f32.mrb[0].mxu0
        %v2870 = vadd.f32 0.0, %v2869
        %v2871 = vpop.f32.mrb[0].mxu0
        %2872 = vmatprep.mubr.f32.mxu0 0.0
        %2873 = vmatmul.mubr.f32.gmra.mrb[0].mxu0 %v374
        %v2874 = vpop.f32.mrb[0].mxu0
        %v2875 = vadd.f32 0.0, %v2874
        %v2876 = vpop.f32.mrb[0].mxu0
        %2877 = vmatprep.mubr.f32.mxu0 0.0
        %2878 = vmatmul.mubr.f32.gmra.mrb[0].mxu0 %v376
        %v2879 = vpop.f32.mrb[0].mxu0
        %v2880 = vadd.f32 0.0, %v2879
        %v2881 = vpop.f32.mrb[0].mxu0
        %2882 = vmatprep.mubr.f32.mxu0 0.0
        %2883 = vmatmul.mubr.f32.gmra.mrb[0].mxu0 %v378
        %v2884 = vpop.f32.mrb[0].mxu0
        %v2885 = vadd.f32 0.0, %v2884
        %v2886 = vpop.f32.mrb[0].mxu0
        %2887 = vmatprep.mubr.f32.mxu0 0.0
        %2888 = vmatmul.mubr.f32.gmra.mrb[0].mxu0 %v380
        %v2889 = vpop.f32.mrb[0].mxu0
        %v2890 = vadd.f32 0.0, %v2889
        %v2891 = vpop.f32.mrb[0].mxu0
        %2892 = vmatprep.mubr.f32.mxu0 0.0
        %2893 = vmatmul.mubr.f32.gmra.mrb[0].mxu0 %v883
        %v2894 = vpop.f32.mrb[0].mxu0
        %v2895 = vadd.f32 0.0, %v2894
        %v2896 = vpop.f32.mrb[0].mxu0
        %2897 = vmatprep.mubr.f32.mxu0 0.0
        %2898 = vmatmul.mubr.f32.gmra.mrb[0].mxu0 %v885
        %v2899 = vpop.f32.mrb[0].mxu0
        %v2900 = vadd.f32 0.0, %v2899
        %v2901 = vpop.f32.mrb[0].mxu0
        %2902 = vmatprep.mubr.f32.mxu0 0.0
        %2903 = vmatmul.mubr.f32.gmra.mrb[0].mxu0 %v2262
        %v2904 = vpop.f32.mrb[0].mxu0
        %v2905 = vadd.f32 0.0, %v2904
        %v2906 = vpop.f32.mrb[0].mxu0
        %2907 = vmatprep.mubr.f32.mxu0 0.0
        %2908 = vmatmul.mubr.f32.gmra.mrb[0].mxu0 %v2264
        %v2909 = vpop.f32.mrb[0].mxu0
        %v2910 = vadd.f32 0.0, %v2909
        %v2911 = vpop.f32.mrb[0].mxu0
        %2912 = vdwg.mxu0
        %v2913 = vadd.f32 %v2685, %v2835
        %v2914 = vadd.f32 %v2690, %v2840
        %v2915 = vadd.f32 %v2695, %v2845
        %v2916 = vadd.f32 %v2700, %v2850
        %v2917 = vadd.f32 %v2705, %v2855
        %v2918 = vadd.f32 %v2710, %v2860
        %v2919 = vadd.f32 %v2715, %v2865
        %v2920 = vadd.f32 %v2720, %v2870
        %v2921 = vadd.f32 %v2725, %v2875
        %v2922 = vadd.f32 %v2730, %v2880
        %v2923 = vadd.f32 %v2735, %v2885
        %v2924 = vadd.f32 %v2740, %v2890
        %v2925 = vadd.f32 %v2745, %v2895
        %v2926 = vadd.f32 %v2750, %v2900
        %v2927 = vadd.f32 %v2755, %v2905
        %v2928 = vadd.f32 %v2760, %v2910
        %s2929 = scalar_lea.vmem %s0, 60
        %v2930 = vld [vmem:[%s2929] sm:$0xf]
        %v2931 = vsel %vm349, %v342, 0
        %v2933 = vsel %vm349, %v344, 0
        %v2936 = vsel %vm382, %v2930, 0
        %2938 = vmatprep.subr.mxu0 0.0
        %2939 = vmatpush1.msra.mxu0 %v2936
        %2940 = vmatprep.subr.mxu0 0.0
        %2941 = vmatpush1.msra.mxu0 0.0
        %2942 = vmatprep.subr.mxu0 0.0
        %2943 = vmatpush1.msra.mxu0 0.0
        %2944 = vmatprep.subr.mxu0 0.0
        %2945 = vmatpush1.msra.mxu0 0.0
        %2946 = vmatprep.subr.mxu0 0.0
        %2947 = vmatpush1.msra.mxu0 0.0
        %2948 = vmatprep.subr.mxu0 0.0
        %2949 = vmatpush1.msra.mxu0 0.0
        %2950 = vmatprep.subr.mxu0 0.0
        %2951 = vmatpush1.msra.mxu0 0.0
        %2952 = vmatprep.subr.mxu0 0.0
        %2953 = vmatpush1.msra.mxu0 0.0
        %2954 = vmatprep.subr.mxu0 0.0
        %2955 = vmatpush1.msra.mxu0 0.0
        %2956 = vmatprep.subr.mxu0 0.0
        %2957 = vmatpush1.msra.mxu0 0.0
        %2958 = vmatprep.subr.mxu0 0.0
        %2959 = vmatpush1.msra.mxu0 0.0
        %2960 = vmatprep.subr.mxu0 0.0
        %2961 = vmatpush1.msra.mxu0 0.0
        %2962 = vmatprep.subr.mxu0 0.0
        %2963 = vmatpush1.msra.mxu0 0.0
        %2964 = vmatprep.subr.mxu0 0.0
        %2965 = vmatpush1.msra.mxu0 0.0
        %2966 = vmatprep.subr.mxu0 0.0
        %2967 = vmatpush1.msra.mxu0 0.0
        %2968 = vmatprep.subr.mxu0 0.0
        %2969 = vmatpush1.msra.mxu0 0.0
        %2970 = vmatprep.subr.mxu0 0.0
        %2971 = vmatpush1.msra.mxu0 0.0
        %2972 = vmatprep.subr.mxu0 0.0
        %2973 = vmatpush1.msra.mxu0 0.0
        %2974 = vmatprep.subr.mxu0 0.0
        %2975 = vmatpush1.msra.mxu0 0.0
        %2976 = vmatprep.subr.mxu0 0.0
        %2977 = vmatpush1.msra.mxu0 0.0
        %2978 = vmatprep.subr.mxu0 0.0
        %2979 = vmatpush1.msra.mxu0 0.0
        %2980 = vmatprep.subr.mxu0 0.0
        %2981 = vmatpush1.msra.mxu0 0.0
        %2982 = vmatprep.subr.mxu0 0.0
        %2983 = vmatpush1.msra.mxu0 0.0
        %2984 = vmatprep.subr.mxu0 0.0
        %2985 = vmatpush1.msra.mxu0 0.0
        %2986 = vmatprep.subr.mxu0 0.0
        %2987 = vmatpush1.msra.mxu0 0.0
        %2988 = vmatprep.subr.mxu0 0.0
        %2989 = vmatpush1.msra.mxu0 0.0
        %2990 = vmatprep.subr.mxu0 0.0
        %2991 = vmatpush1.msra.mxu0 0.0
        %2992 = vmatprep.subr.mxu0 0.0
        %2993 = vmatpush1.msra.mxu0 0.0
        %2994 = vmatprep.subr.mxu0 0.0
        %2995 = vmatpush1.msra.mxu0 0.0
        %2996 = vmatprep.subr.mxu0 0.0
        %2997 = vmatpush1.msra.mxu0 0.0
        %2998 = vmatprep.subr.mxu0 0.0
        %2999 = vmatpush1.msra.mxu0 0.0
        %3000 = vmatprep.subr.mxu0 0.0
        %3001 = vmatpush1.msra.mxu0 0.0
        %3002 = vmatprep.mubr.f32.mxu0 0.0
        %3003 = vmatmul.mubr.f32.gmra.mrb[0].mxu0 %v1101
        %v3004 = vpop.f32.mrb[0].mxu0
        %v3005 = vadd.f32 0.0, %v3004
        %v3006 = vpop.f32.mrb[0].mxu0
        %3007 = vmatprep.mubr.f32.mxu0 0.0
        %3008 = vmatmul.mubr.f32.gmra.mrb[0].mxu0 %v1103
        %v3009 = vpop.f32.mrb[0].mxu0
        %v3010 = vadd.f32 0.0, %v3009
        %v3011 = vpop.f32.mrb[0].mxu0
        %3012 = vmatprep.mubr.f32.mxu0 0.0
        %3013 = vmatmul.mubr.f32.gmra.mrb[0].mxu0 %v1105
        %v3014 = vpop.f32.mrb[0].mxu0
        %v3015 = vadd.f32 0.0, %v3014
        %v3016 = vpop.f32.mrb[0].mxu0
        %3017 = vmatprep.mubr.f32.mxu0 0.0
        %3018 = vmatmul.mubr.f32.gmra.mrb[0].mxu0 %v1107
        %v3019 = vpop.f32.mrb[0].mxu0
        %v3020 = vadd.f32 0.0, %v3019
        %v3021 = vpop.f32.mrb[0].mxu0
        %3022 = vmatprep.mubr.f32.mxu0 0.0
        %3023 = vmatmul.mubr.f32.gmra.mrb[0].mxu0 %v1109
        %v3024 = vpop.f32.mrb[0].mxu0
        %v3025 = vadd.f32 0.0, %v3024
        %v3026 = vpop.f32.mrb[0].mxu0
        %3027 = vmatprep.mubr.f32.mxu0 0.0
        %3028 = vmatmul.mubr.f32.gmra.mrb[0].mxu0 %v1111
        %v3029 = vpop.f32.mrb[0].mxu0
        %v3030 = vadd.f32 0.0, %v3029
        %v3031 = vpop.f32.mrb[0].mxu0
        %3032 = vmatprep.mubr.f32.mxu0 0.0
        %3033 = vmatmul.mubr.f32.gmra.mrb[0].mxu0 %v1113
        %v3034 = vpop.f32.mrb[0].mxu0
        %v3035 = vadd.f32 0.0, %v3034
        %v3036 = vpop.f32.mrb[0].mxu0
        %3037 = vmatprep.mubr.f32.mxu0 0.0
        %3038 = vmatmul.mubr.f32.gmra.mrb[0].mxu0 %v1115
        %v3039 = vpop.f32.mrb[0].mxu0
        %v3040 = vadd.f32 0.0, %v3039
        %v3041 = vpop.f32.mrb[0].mxu0
        %3042 = vmatprep.mubr.f32.mxu0 0.0
        %3043 = vmatmul.mubr.f32.gmra.mrb[0].mxu0 %v1117
        %v3044 = vpop.f32.mrb[0].mxu0
        %v3045 = vadd.f32 0.0, %v3044
        %v3046 = vpop.f32.mrb[0].mxu0
        %3047 = vmatprep.mubr.f32.mxu0 0.0
        %3048 = vmatmul.mubr.f32.gmra.mrb[0].mxu0 %v1119
        %v3049 = vpop.f32.mrb[0].mxu0
        %v3050 = vadd.f32 0.0, %v3049
        %v3051 = vpop.f32.mrb[0].mxu0
        %3052 = vmatprep.mubr.f32.mxu0 0.0
        %3053 = vmatmul.mubr.f32.gmra.mrb[0].mxu0 %v1121
        %v3054 = vpop.f32.mrb[0].mxu0
        %v3055 = vadd.f32 0.0, %v3054
        %v3056 = vpop.f32.mrb[0].mxu0
        %3057 = vmatprep.mubr.f32.mxu0 0.0
        %3058 = vmatmul.mubr.f32.gmra.mrb[0].mxu0 %v1123
        %v3059 = vpop.f32.mrb[0].mxu0
        %v3060 = vadd.f32 0.0, %v3059
        %v3061 = vpop.f32.mrb[0].mxu0
        %3062 = vmatprep.mubr.f32.mxu0 0.0
        %3063 = vmatmul.mubr.f32.gmra.mrb[0].mxu0 %v1589
        %v3064 = vpop.f32.mrb[0].mxu0
        %v3065 = vadd.f32 0.0, %v3064
        %v3066 = vpop.f32.mrb[0].mxu0
        %3067 = vmatprep.mubr.f32.mxu0 0.0
        %3068 = vmatmul.mubr.f32.gmra.mrb[0].mxu0 %v1591
        %v3069 = vpop.f32.mrb[0].mxu0
        %v3070 = vadd.f32 0.0, %v3069
        %v3071 = vpop.f32.mrb[0].mxu0
        %3072 = vmatprep.mubr.f32.mxu0 0.0
        %3073 = vmatmul.mubr.f32.gmra.mrb[0].mxu0 %v2931
        %v3074 = vpop.f32.mrb[0].mxu0
        %v3075 = vadd.f32 0.0, %v3074
        %v3076 = vpop.f32.mrb[0].mxu0
        %3077 = vmatprep.mubr.f32.mxu0 0.0
        %3078 = vmatmul.mubr.f32.gmra.mrb[0].mxu0 %v2933
        %v3079 = vpop.f32.mrb[0].mxu0
        %v3080 = vadd.f32 0.0, %v3079
        %v3081 = vpop.f32.mrb[0].mxu0
        %3082 = vdwg.mxu0
        %v3083 = vadd.f32 %v2913, %v3005
        %v3084 = vadd.f32 %v2914, %v3010
        %v3085 = vadd.f32 %v2915, %v3015
        %v3086 = vadd.f32 %v2916, %v3020
        %v3087 = vadd.f32 %v2917, %v3025
        %v3088 = vadd.f32 %v2918, %v3030
        %v3089 = vadd.f32 %v2919, %v3035
        %v3090 = vadd.f32 %v2920, %v3040
        %v3091 = vadd.f32 %v2921, %v3045
        %v3092 = vadd.f32 %v2922, %v3050
        %v3093 = vadd.f32 %v2923, %v3055
        %v3094 = vadd.f32 %v2924, %v3060
        %v3095 = vadd.f32 %v2925, %v3065
        %v3096 = vadd.f32 %v2926, %v3070
        %v3097 = vadd.f32 %v2927, %v3075
        %v3098 = vadd.f32 %v2928, %v3080
        %v3099 = vadd.f32 %v3083, %v1055
        %v3100 = vadd.f32 %v3084, %v1055
        %v3101 = vadd.f32 %v3085, %v1055
        %v3102 = vadd.f32 %v3086, %v1055
        %v3103 = vadd.f32 %v3087, %v1055
        %v3104 = vadd.f32 %v3088, %v1055
        %v3105 = vadd.f32 %v3089, %v1055
        %v3106 = vadd.f32 %v3090, %v1055
        %v3107 = vadd.f32 %v3091, %v1055
        %v3108 = vadd.f32 %v3092, %v1055
        %v3109 = vadd.f32 %v3093, %v1055
        %v3110 = vadd.f32 %v3094, %v1055
        %v3111 = vadd.f32 %v3095, %v1055
        %v3112 = vadd.f32 %v3096, %v1055
        %v3113 = vadd.f32 %v3097, %v1055
        %v3114 = vadd.f32 %v3098, %v1055
        %s3115 = scalar_lea.vmem %s173, 384 [#allocation2]
        %3116 = vst.msk [vmem:[%s3115] sm:$0xff] %vm349, %v3099
        %3117 = vst.msk [vmem:[%s3115 + $0x8] sm:$0xff] %vm349, %v3100
        %3118 = vst.msk [vmem:[%s3115 + $0x10] sm:$0xff] %vm349, %v3101
        %3119 = vst.msk [vmem:[%s3115 + $0x18] sm:$0xff] %vm349, %v3102
        %3120 = vst.msk [vmem:[%s3115 + $0x20] sm:$0xff] %vm349, %v3103
        %3121 = vst.msk [vmem:[%s3115 + $0x28] sm:$0xff] %vm349, %v3104
        %3122 = vst.msk [vmem:[%s3115 + $0x30] sm:$0xff] %vm349, %v3105
        %3123 = vst.msk [vmem:[%s3115 + $0x38] sm:$0xff] %vm349, %v3106
        %3124 = vst.msk [vmem:[%s3115 + $0x40] sm:$0xff] %vm349, %v3107
        %3125 = vst.msk [vmem:[%s3115 + $0x48] sm:$0xff] %vm349, %v3108
        %3126 = vst.msk [vmem:[%s3115 + $0x50] sm:$0xff] %vm349, %v3109
        %3127 = vst.msk [vmem:[%s3115 + $0x58] sm:$0xff] %vm349, %v3110
        %3128 = vst.msk [vmem:[%s3115 + $0x60] sm:$0xff] %vm349, %v3111
        %3129 = vst.msk [vmem:[%s3115 + $0x68] sm:$0xff] %vm349, %v3112
        %3130 = vst.msk [vmem:[%s3115 + $0x70] sm:$0xff] %vm349, %v3113
        %3131 = vst.msk [vmem:[%s3115 + $0x78] sm:$0xff] %vm349, %v3114
        %s3132 = sand.u32 %s104, 1
        %s3133 = sand.u32 %s104, 1
        %s3134 = smul.addr %s3133, 512
        %s3135 = scalar_lea.vmem [#allocation2], %s3134
        // Predicated region
        $region33: #{tpu_custom_call.1} parent=31 // pred_check
          %p3136 = pneg %p114
        $region34: #{tpu_custom_call.1} parent=31 // pred_check_branch
          %3138 = sbr.rel (%p3136) target = $region36
        $region35: #{tpu_custom_call.1} parent=31 // pred_region
          %s3139 = smul.u32 8, %s19
          %s3140 = smul.addr %s3139, 2
          %s3141 = smul.addr %s18, 128
          %s3142 = sadd.s32 %s3140, %s3141
          %s3143 = smul.addr %s3142, 8
          %s3144 = scalar_lea.vmem %s3, %s3143
          // Predicated region
          $region37: #{tpu_custom_call.1} parent=35 // pred_check
            _
          $region38: #{tpu_custom_call.1} parent=35 // pred_check_branch
            %3146 = sbr.rel (0) target = $region40
          $region39: #{tpu_custom_call.1} parent=35 // pred_region
            // Predicated region
            $region41: #{tpu_custom_call.1} parent=39 // pred_check
              _
            $region42: #{tpu_custom_call.1} parent=39 // pred_check_branch
              %3148 = sbr.rel (0) target = $region44
            $region43: #{tpu_custom_call.1} parent=39 // pred_region
              // Predicated region
              $region56: #{tpu_custom_call.1} parent=43 // pred_check
                _
              $region57: #{tpu_custom_call.1} parent=43 // pred_check_branch
                %3289 = sbr.rel (0) target = $region59
              $region58: #{tpu_custom_call.1} parent=43 // pred_region
                loop: start=0, step=1, limit=1
                $region60: #{tpu_custom_call.1} parent=58 // loop_pre_header
                  _
                $region61: #{tpu_custom_call.1} parent=58 // loop_header
                  %s3291 = sphi 0, %s3295
                  %p3292 = scmp.ge.s32.totalorder %s3291, 1
                  %s3296 = sphi %s3135, %s3135
                  %s3297 = sphi %s3144, %s3144
                $region62: #{tpu_custom_call.1} parent=58 // loop_header_branch
                  %3294 = sbr.rel (%p3292) target = $region66
                $region63: #{tpu_custom_call.1} parent=58 // loop_body
                  %v3298 = vld [vmem:[%s3296] sm:$0xff]
                  %3299 = vst [vmem:[%s3297] sm:$0xff] %v3298
                  %v3300 = vld [vmem:[%s3296 + $0x8] sm:$0xff]
                  %3301 = vst [vmem:[%s3297 + $0x8] sm:$0xff] %v3300
                  %v3302 = vld [vmem:[%s3296 + $0x10] sm:$0xff]
                  %3303 = vst [vmem:[%s3297 + $0x10] sm:$0xff] %v3302
                  %v3304 = vld [vmem:[%s3296 + $0x18] sm:$0xff]
                  %3305 = vst [vmem:[%s3297 + $0x18] sm:$0xff] %v3304
                  %v3306 = vld [vmem:[%s3296 + $0x20] sm:$0xff]
                  %3307 = vst [vmem:[%s3297 + $0x20] sm:$0xff] %v3306
                  %v3308 = vld [vmem:[%s3296 + $0x28] sm:$0xff]
                  %3309 = vst [vmem:[%s3297 + $0x28] sm:$0xff] %v3308
                  %v3310 = vld [vmem:[%s3296 + $0x30] sm:$0xff]
                  %3311 = vst [vmem:[%s3297 + $0x30] sm:$0xff] %v3310
                  %v3312 = vld [vmem:[%s3296 + $0x38] sm:$0xff]
                  %3313 = vst [vmem:[%s3297 + $0x38] sm:$0xff] %v3312
                  %v3314 = vld [vmem:[%s3296 + $0x40] sm:$0xff]
                  %3315 = vst [vmem:[%s3297 + $0x40] sm:$0xff] %v3314
                  %v3316 = vld [vmem:[%s3296 + $0x48] sm:$0xff]
                  %3317 = vst [vmem:[%s3297 + $0x48] sm:$0xff] %v3316
                  %v3318 = vld [vmem:[%s3296 + $0x50] sm:$0xff]
                  %3319 = vst [vmem:[%s3297 + $0x50] sm:$0xff] %v3318
                  %v3320 = vld [vmem:[%s3296 + $0x58] sm:$0xff]
                  %3321 = vst [vmem:[%s3297 + $0x58] sm:$0xff] %v3320
                  %v3322 = vld [vmem:[%s3296 + $0x60] sm:$0xff]
                  %3323 = vst [vmem:[%s3297 + $0x60] sm:$0xff] %v3322
                  %v3324 = vld [vmem:[%s3296 + $0x68] sm:$0xff]
                  %3325 = vst [vmem:[%s3297 + $0x68] sm:$0xff] %v3324
                  %v3326 = vld [vmem:[%s3296 + $0x70] sm:$0xff]
                  %3327 = vst [vmem:[%s3297 + $0x70] sm:$0xff] %v3326
                  %v3328 = vld [vmem:[%s3296 + $0x78] sm:$0xff]
                  %3329 = vst [vmem:[%s3297 + $0x78] sm:$0xff] %v3328
                  %v3330 = vld [vmem:[%s3296 + $0x80] sm:$0xff]
                  %3331 = vst [vmem:[%s3297 + $0x100] sm:$0xff] %v3330
                  %v3332 = vld [vmem:[%s3296 + $0x88] sm:$0xff]
                  %3333 = vst [vmem:[%s3297 + $0x108] sm:$0xff] %v3332
                  %v3334 = vld [vmem:[%s3296 + $0x90] sm:$0xff]
                  %3335 = vst [vmem:[%s3297 + $0x110] sm:$0xff] %v3334
                  %v3336 = vld [vmem:[%s3296 + $0x98] sm:$0xff]
                  %3337 = vst [vmem:[%s3297 + $0x118] sm:$0xff] %v3336
                  %v3338 = vld [vmem:[%s3296 + $0xa0] sm:$0xff]
                  %3339 = vst [vmem:[%s3297 + $0x120] sm:$0xff] %v3338
                  %v3340 = vld [vmem:[%s3296 + $0xa8] sm:$0xff]
                  %3341 = vst [vmem:[%s3297 + $0x128] sm:$0xff] %v3340
                  %v3342 = vld [vmem:[%s3296 + $0xb0] sm:$0xff]
                  %3343 = vst [vmem:[%s3297 + $0x130] sm:$0xff] %v3342
                  %v3344 = vld [vmem:[%s3296 + $0xb8] sm:$0xff]
                  %3345 = vst [vmem:[%s3297 + $0x138] sm:$0xff] %v3344
                  %v3346 = vld [vmem:[%s3296 + $0xc0] sm:$0xff]
                  %3347 = vst [vmem:[%s3297 + $0x140] sm:$0xff] %v3346
                  %v3348 = vld [vmem:[%s3296 + $0xc8] sm:$0xff]
                  %3349 = vst [vmem:[%s3297 + $0x148] sm:$0xff] %v3348
                  %v3350 = vld [vmem:[%s3296 + $0xd0] sm:$0xff]
                  %3351 = vst [vmem:[%s3297 + $0x150] sm:$0xff] %v3350
                  %v3352 = vld [vmem:[%s3296 + $0xd8] sm:$0xff]
                  %3353 = vst [vmem:[%s3297 + $0x158] sm:$0xff] %v3352
                  %v3354 = vld [vmem:[%s3296 + $0xe0] sm:$0xff]
                  %3355 = vst [vmem:[%s3297 + $0x160] sm:$0xff] %v3354
                  %v3356 = vld [vmem:[%s3296 + $0xe8] sm:$0xff]
                  %3357 = vst [vmem:[%s3297 + $0x168] sm:$0xff] %v3356
                  %v3358 = vld [vmem:[%s3296 + $0xf0] sm:$0xff]
                  %3359 = vst [vmem:[%s3297 + $0x170] sm:$0xff] %v3358
                  %v3360 = vld [vmem:[%s3296 + $0xf8] sm:$0xff]
                  %3361 = vst [vmem:[%s3297 + $0x178] sm:$0xff] %v3360
                  %v3362 = vld [vmem:[%s3296 + $0x100] sm:$0xff]
                  %3363 = vst [vmem:[%s3297 + $0x200] sm:$0xff] %v3362
                  %v3364 = vld [vmem:[%s3296 + $0x108] sm:$0xff]
                  %3365 = vst [vmem:[%s3297 + $0x208] sm:$0xff] %v3364
                  %v3366 = vld [vmem:[%s3296 + $0x110] sm:$0xff]
                  %3367 = vst [vmem:[%s3297 + $0x210] sm:$0xff] %v3366
                  %v3368 = vld [vmem:[%s3296 + $0x118] sm:$0xff]
                  %3369 = vst [vmem:[%s3297 + $0x218] sm:$0xff] %v3368
                  %v3370 = vld [vmem:[%s3296 + $0x120] sm:$0xff]
                  %3371 = vst [vmem:[%s3297 + $0x220] sm:$0xff] %v3370
                  %v3372 = vld [vmem:[%s3296 + $0x128] sm:$0xff]
                  %3373 = vst [vmem:[%s3297 + $0x228] sm:$0xff] %v3372
                  %v3374 = vld [vmem:[%s3296 + $0x130] sm:$0xff]
                  %3375 = vst [vmem:[%s3297 + $0x230] sm:$0xff] %v3374
                  %v3376 = vld [vmem:[%s3296 + $0x138] sm:$0xff]
                  %3377 = vst [vmem:[%s3297 + $0x238] sm:$0xff] %v3376
                  %v3378 = vld [vmem:[%s3296 + $0x140] sm:$0xff]
                  %3379 = vst [vmem:[%s3297 + $0x240] sm:$0xff] %v3378
                  %v3380 = vld [vmem:[%s3296 + $0x148] sm:$0xff]
                  %3381 = vst [vmem:[%s3297 + $0x248] sm:$0xff] %v3380
                  %v3382 = vld [vmem:[%s3296 + $0x150] sm:$0xff]
                  %3383 = vst [vmem:[%s3297 + $0x250] sm:$0xff] %v3382
                  %v3384 = vld [vmem:[%s3296 + $0x158] sm:$0xff]
                  %3385 = vst [vmem:[%s3297 + $0x258] sm:$0xff] %v3384
                  %v3386 = vld [vmem:[%s3296 + $0x160] sm:$0xff]
                  %3387 = vst [vmem:[%s3297 + $0x260] sm:$0xff] %v3386
                  %v3388 = vld [vmem:[%s3296 + $0x168] sm:$0xff]
                  %3389 = vst [vmem:[%s3297 + $0x268] sm:$0xff] %v3388
                  %v3390 = vld [vmem:[%s3296 + $0x170] sm:$0xff]
                  %3391 = vst [vmem:[%s3297 + $0x270] sm:$0xff] %v3390
                  %v3392 = vld [vmem:[%s3296 + $0x178] sm:$0xff]
                  %3393 = vst [vmem:[%s3297 + $0x278] sm:$0xff] %v3392
                  %v3394 = vld [vmem:[%s3296 + $0x180] sm:$0xff]
                  %3395 = vst [vmem:[%s3297 + $0x300] sm:$0xff] %v3394
                  %v3396 = vld [vmem:[%s3296 + $0x188] sm:$0xff]
                  %3397 = vst [vmem:[%s3297 + $0x308] sm:$0xff] %v3396
                  %v3398 = vld [vmem:[%s3296 + $0x190] sm:$0xff]
                  %3399 = vst [vmem:[%s3297 + $0x310] sm:$0xff] %v3398
                  %v3400 = vld [vmem:[%s3296 + $0x198] sm:$0xff]
                  %3401 = vst [vmem:[%s3297 + $0x318] sm:$0xff] %v3400
                  %v3402 = vld [vmem:[%s3296 + $0x1a0] sm:$0xff]
                  %3403 = vst [vmem:[%s3297 + $0x320] sm:$0xff] %v3402
                  %v3404 = vld [vmem:[%s3296 + $0x1a8] sm:$0xff]
                  %3405 = vst [vmem:[%s3297 + $0x328] sm:$0xff] %v3404
                  %v3406 = vld [vmem:[%s3296 + $0x1b0] sm:$0xff]
                  %3407 = vst [vmem:[%s3297 + $0x330] sm:$0xff] %v3406
                  %v3408 = vld [vmem:[%s3296 + $0x1b8] sm:$0xff]
                  %3409 = vst [vmem:[%s3297 + $0x338] sm:$0xff] %v3408
                  %v3410 = vld [vmem:[%s3296 + $0x1c0] sm:$0xff]
                  %3411 = vst [vmem:[%s3297 + $0x340] sm:$0xff] %v3410
                  %v3412 = vld [vmem:[%s3296 + $0x1c8] sm:$0xff]
                  %3413 = vst [vmem:[%s3297 + $0x348] sm:$0xff] %v3412
                  %v3414 = vld [vmem:[%s3296 + $0x1d0] sm:$0xff]
                  %3415 = vst [vmem:[%s3297 + $0x350] sm:$0xff] %v3414
                  %v3416 = vld [vmem:[%s3296 + $0x1d8] sm:$0xff]
                  %3417 = vst [vmem:[%s3297 + $0x358] sm:$0xff] %v3416
                  %v3418 = vld [vmem:[%s3296 + $0x1e0] sm:$0xff]
                  %3419 = vst [vmem:[%s3297 + $0x360] sm:$0xff] %v3418
                  %v3420 = vld [vmem:[%s3296 + $0x1e8] sm:$0xff]
                  %3421 = vst [vmem:[%s3297 + $0x368] sm:$0xff] %v3420
                  %v3422 = vld [vmem:[%s3296 + $0x1f0] sm:$0xff]
                  %3423 = vst [vmem:[%s3297 + $0x370] sm:$0xff] %v3422
                  %v3424 = vld [vmem:[%s3296 + $0x1f8] sm:$0xff]
                  %3425 = vst [vmem:[%s3297 + $0x378] sm:$0xff] %v3424
                $region64: #{tpu_custom_call.1} parent=58 // loop_footer
                  %s3295 = sadd.s32 1, %s3291
                $region65: #{tpu_custom_call.1} parent=58 // loop_footer_branch
                  %3290 = sbr.rel target = $region61
                $region66: #{tpu_custom_call.1} parent=58 // loop_exit
                  _
              $region59: #{tpu_custom_call.1} parent=43 // pred_fallthru
                _
              // Predicated region
              $region67: #{tpu_custom_call.1} parent=43 // pred_check
                _
              $region68: #{tpu_custom_call.1} parent=43 // pred_check_branch
                %3427 = sbr.rel target = $region70
              $region69: #{tpu_custom_call.1} parent=43 // pred_region
                _
              $region70: #{tpu_custom_call.1} parent=43 // pred_fallthru
                _
            $region44: #{tpu_custom_call.1} parent=39 // pred_fallthru
              _
            // Predicated region
            $region45: #{tpu_custom_call.1} parent=39 // pred_check
              _
            $region46: #{tpu_custom_call.1} parent=39 // pred_check_branch
              %3150 = sbr.rel target = $region48
            $region47: #{tpu_custom_call.1} parent=39 // pred_region
              loop: start=0, step=1, limit=1
              $region49: #{tpu_custom_call.1} parent=47 // loop_pre_header
                _
              $region50: #{tpu_custom_call.1} parent=47 // loop_header
                %s3153 = sphi 0, %s3157
                %p3154 = scmp.ge.s32.totalorder %s3153, 1
                %s3158 = sphi %s3135, %s3135
                %s3159 = sphi %s3144, %s3144
              $region51: #{tpu_custom_call.1} parent=47 // loop_header_branch
                %3156 = sbr.rel (%p3154) target = $region55
              $region52: #{tpu_custom_call.1} parent=47 // loop_body
                %v3160 = vld [vmem:[%s3158] sm:$0xff]
                %3161 = vst [vmem:[%s3159] sm:$0xff] %v3160
                %v3162 = vld [vmem:[%s3158 + $0x8] sm:$0xff]
                %3163 = vst [vmem:[%s3159 + $0x8] sm:$0xff] %v3162
                %v3164 = vld [vmem:[%s3158 + $0x10] sm:$0xff]
                %3165 = vst [vmem:[%s3159 + $0x10] sm:$0xff] %v3164
                %v3166 = vld [vmem:[%s3158 + $0x18] sm:$0xff]
                %3167 = vst [vmem:[%s3159 + $0x18] sm:$0xff] %v3166
                %v3168 = vld [vmem:[%s3158 + $0x20] sm:$0xff]
                %3169 = vst [vmem:[%s3159 + $0x20] sm:$0xff] %v3168
                %v3170 = vld [vmem:[%s3158 + $0x28] sm:$0xff]
                %3171 = vst [vmem:[%s3159 + $0x28] sm:$0xff] %v3170
                %v3172 = vld [vmem:[%s3158 + $0x30] sm:$0xff]
                %3173 = vst [vmem:[%s3159 + $0x30] sm:$0xff] %v3172
                %v3174 = vld [vmem:[%s3158 + $0x38] sm:$0xff]
                %3175 = vst [vmem:[%s3159 + $0x38] sm:$0xff] %v3174
                %v3176 = vld [vmem:[%s3158 + $0x40] sm:$0xff]
                %3177 = vst [vmem:[%s3159 + $0x40] sm:$0xff] %v3176
                %v3178 = vld [vmem:[%s3158 + $0x48] sm:$0xff]
                %3179 = vst [vmem:[%s3159 + $0x48] sm:$0xff] %v3178
                %v3180 = vld [vmem:[%s3158 + $0x50] sm:$0xff]
                %3181 = vst [vmem:[%s3159 + $0x50] sm:$0xff] %v3180
                %v3182 = vld [vmem:[%s3158 + $0x58] sm:$0xff]
                %3183 = vst [vmem:[%s3159 + $0x58] sm:$0xff] %v3182
                %v3184 = vld [vmem:[%s3158 + $0x60] sm:$0xff]
                %3185 = vst [vmem:[%s3159 + $0x60] sm:$0xff] %v3184
                %v3186 = vld [vmem:[%s3158 + $0x68] sm:$0xff]
                %3187 = vst [vmem:[%s3159 + $0x68] sm:$0xff] %v3186
                %v3188 = vld [vmem:[%s3158 + $0x70] sm:$0xff]
                %3189 = vst [vmem:[%s3159 + $0x70] sm:$0xff] %v3188
                %v3190 = vld [vmem:[%s3158 + $0x78] sm:$0xff]
                %3191 = vst [vmem:[%s3159 + $0x78] sm:$0xff] %v3190
                %v3192 = vld [vmem:[%s3158 + $0x80] sm:$0xff]
                %3193 = vst [vmem:[%s3159 + $0x100] sm:$0xff] %v3192
                %v3194 = vld [vmem:[%s3158 + $0x88] sm:$0xff]
                %3195 = vst [vmem:[%s3159 + $0x108] sm:$0xff] %v3194
                %v3196 = vld [vmem:[%s3158 + $0x90] sm:$0xff]
                %3197 = vst [vmem:[%s3159 + $0x110] sm:$0xff] %v3196
                %v3198 = vld [vmem:[%s3158 + $0x98] sm:$0xff]
                %3199 = vst [vmem:[%s3159 + $0x118] sm:$0xff] %v3198
                %v3200 = vld [vmem:[%s3158 + $0xa0] sm:$0xff]
                %3201 = vst [vmem:[%s3159 + $0x120] sm:$0xff] %v3200
                %v3202 = vld [vmem:[%s3158 + $0xa8] sm:$0xff]
                %3203 = vst [vmem:[%s3159 + $0x128] sm:$0xff] %v3202
                %v3204 = vld [vmem:[%s3158 + $0xb0] sm:$0xff]
                %3205 = vst [vmem:[%s3159 + $0x130] sm:$0xff] %v3204
                %v3206 = vld [vmem:[%s3158 + $0xb8] sm:$0xff]
                %3207 = vst [vmem:[%s3159 + $0x138] sm:$0xff] %v3206
                %v3208 = vld [vmem:[%s3158 + $0xc0] sm:$0xff]
                %3209 = vst [vmem:[%s3159 + $0x140] sm:$0xff] %v3208
                %v3210 = vld [vmem:[%s3158 + $0xc8] sm:$0xff]
                %3211 = vst [vmem:[%s3159 + $0x148] sm:$0xff] %v3210
                %v3212 = vld [vmem:[%s3158 + $0xd0] sm:$0xff]
                %3213 = vst [vmem:[%s3159 + $0x150] sm:$0xff] %v3212
                %v3214 = vld [vmem:[%s3158 + $0xd8] sm:$0xff]
                %3215 = vst [vmem:[%s3159 + $0x158] sm:$0xff] %v3214
                %v3216 = vld [vmem:[%s3158 + $0xe0] sm:$0xff]
                %3217 = vst [vmem:[%s3159 + $0x160] sm:$0xff] %v3216
                %v3218 = vld [vmem:[%s3158 + $0xe8] sm:$0xff]
                %3219 = vst [vmem:[%s3159 + $0x168] sm:$0xff] %v3218
                %v3220 = vld [vmem:[%s3158 + $0xf0] sm:$0xff]
                %3221 = vst [vmem:[%s3159 + $0x170] sm:$0xff] %v3220
                %v3222 = vld [vmem:[%s3158 + $0xf8] sm:$0xff]
                %3223 = vst [vmem:[%s3159 + $0x178] sm:$0xff] %v3222
                %v3224 = vld [vmem:[%s3158 + $0x100] sm:$0xff]
                %3225 = vst [vmem:[%s3159 + $0x200] sm:$0xff] %v3224
                %v3226 = vld [vmem:[%s3158 + $0x108] sm:$0xff]
                %3227 = vst [vmem:[%s3159 + $0x208] sm:$0xff] %v3226
                %v3228 = vld [vmem:[%s3158 + $0x110] sm:$0xff]
                %3229 = vst [vmem:[%s3159 + $0x210] sm:$0xff] %v3228
                %v3230 = vld [vmem:[%s3158 + $0x118] sm:$0xff]
                %3231 = vst [vmem:[%s3159 + $0x218] sm:$0xff] %v3230
                %v3232 = vld [vmem:[%s3158 + $0x120] sm:$0xff]
                %3233 = vst [vmem:[%s3159 + $0x220] sm:$0xff] %v3232
                %v3234 = vld [vmem:[%s3158 + $0x128] sm:$0xff]
                %3235 = vst [vmem:[%s3159 + $0x228] sm:$0xff] %v3234
                %v3236 = vld [vmem:[%s3158 + $0x130] sm:$0xff]
                %3237 = vst [vmem:[%s3159 + $0x230] sm:$0xff] %v3236
                %v3238 = vld [vmem:[%s3158 + $0x138] sm:$0xff]
                %3239 = vst [vmem:[%s3159 + $0x238] sm:$0xff] %v3238
                %v3240 = vld [vmem:[%s3158 + $0x140] sm:$0xff]
                %3241 = vst [vmem:[%s3159 + $0x240] sm:$0xff] %v3240
                %v3242 = vld [vmem:[%s3158 + $0x148] sm:$0xff]
                %3243 = vst [vmem:[%s3159 + $0x248] sm:$0xff] %v3242
                %v3244 = vld [vmem:[%s3158 + $0x150] sm:$0xff]
                %3245 = vst [vmem:[%s3159 + $0x250] sm:$0xff] %v3244
                %v3246 = vld [vmem:[%s3158 + $0x158] sm:$0xff]
                %3247 = vst [vmem:[%s3159 + $0x258] sm:$0xff] %v3246
                %v3248 = vld [vmem:[%s3158 + $0x160] sm:$0xff]
                %3249 = vst [vmem:[%s3159 + $0x260] sm:$0xff] %v3248
                %v3250 = vld [vmem:[%s3158 + $0x168] sm:$0xff]
                %3251 = vst [vmem:[%s3159 + $0x268] sm:$0xff] %v3250
                %v3252 = vld [vmem:[%s3158 + $0x170] sm:$0xff]
                %3253 = vst [vmem:[%s3159 + $0x270] sm:$0xff] %v3252
                %v3254 = vld [vmem:[%s3158 + $0x178] sm:$0xff]
                %3255 = vst [vmem:[%s3159 + $0x278] sm:$0xff] %v3254
                %v3256 = vld [vmem:[%s3158 + $0x180] sm:$0xff]
                %3257 = vst [vmem:[%s3159 + $0x300] sm:$0xff] %v3256
                %v3258 = vld [vmem:[%s3158 + $0x188] sm:$0xff]
                %3259 = vst [vmem:[%s3159 + $0x308] sm:$0xff] %v3258
                %v3260 = vld [vmem:[%s3158 + $0x190] sm:$0xff]
                %3261 = vst [vmem:[%s3159 + $0x310] sm:$0xff] %v3260
                %v3262 = vld [vmem:[%s3158 + $0x198] sm:$0xff]
                %3263 = vst [vmem:[%s3159 + $0x318] sm:$0xff] %v3262
                %v3264 = vld [vmem:[%s3158 + $0x1a0] sm:$0xff]
                %3265 = vst [vmem:[%s3159 + $0x320] sm:$0xff] %v3264
                %v3266 = vld [vmem:[%s3158 + $0x1a8] sm:$0xff]
                %3267 = vst [vmem:[%s3159 + $0x328] sm:$0xff] %v3266
                %v3268 = vld [vmem:[%s3158 + $0x1b0] sm:$0xff]
                %3269 = vst [vmem:[%s3159 + $0x330] sm:$0xff] %v3268
                %v3270 = vld [vmem:[%s3158 + $0x1b8] sm:$0xff]
                %3271 = vst [vmem:[%s3159 + $0x338] sm:$0xff] %v3270
                %v3272 = vld [vmem:[%s3158 + $0x1c0] sm:$0xff]
                %3273 = vst [vmem:[%s3159 + $0x340] sm:$0xff] %v3272
                %v3274 = vld [vmem:[%s3158 + $0x1c8] sm:$0xff]
                %3275 = vst [vmem:[%s3159 + $0x348] sm:$0xff] %v3274
                %v3276 = vld [vmem:[%s3158 + $0x1d0] sm:$0xff]
                %3277 = vst [vmem:[%s3159 + $0x350] sm:$0xff] %v3276
                %v3278 = vld [vmem:[%s3158 + $0x1d8] sm:$0xff]
                %3279 = vst [vmem:[%s3159 + $0x358] sm:$0xff] %v3278
                %v3280 = vld [vmem:[%s3158 + $0x1e0] sm:$0xff]
                %3281 = vst [vmem:[%s3159 + $0x360] sm:$0xff] %v3280
                %v3282 = vld [vmem:[%s3158 + $0x1e8] sm:$0xff]
                %3283 = vst [vmem:[%s3159 + $0x368] sm:$0xff] %v3282
                %v3284 = vld [vmem:[%s3158 + $0x1f0] sm:$0xff]
                %3285 = vst [vmem:[%s3159 + $0x370] sm:$0xff] %v3284
                %v3286 = vld [vmem:[%s3158 + $0x1f8] sm:$0xff]
                %3287 = vst [vmem:[%s3159 + $0x378] sm:$0xff] %v3286
              $region53: #{tpu_custom_call.1} parent=47 // loop_footer
                %s3157 = sadd.s32 1, %s3153
              $region54: #{tpu_custom_call.1} parent=47 // loop_footer_branch
                %3152 = sbr.rel target = $region50
              $region55: #{tpu_custom_call.1} parent=47 // loop_exit
                _
            $region48: #{tpu_custom_call.1} parent=39 // pred_fallthru
              _
          $region40: #{tpu_custom_call.1} parent=35 // pred_fallthru
            _
          %3428 = vnop
        $region36: #{tpu_custom_call.1} parent=31 // pred_fallthru
          _
      $region32: #{tpu_custom_call.1} parent=5 // pred_fallthru
        _
      %p3429 = scmp.le.s32.totalorder 2, %s9
      // Predicated region
      $region71: #{tpu_custom_call.1} parent=5 // pred_check
        %p3430 = pneg %p3429
      $region72: #{tpu_custom_call.1} parent=5 // pred_check_branch
        %3432 = sbr.rel (%p3430) target = $region74
      $region73: #{tpu_custom_call.1} parent=5 // pred_region
        %s3433 = ssub.s32 %s9, 2
        // Predicated region
        $region75: #{tpu_custom_call.1} parent=73 // pred_check
          %p3434 = pneg %p120
        $region76: #{tpu_custom_call.1} parent=73 // pred_check_branch
          %3436 = sbr.rel (%p3434) target = $region78
        $region77: #{tpu_custom_call.1} parent=73 // pred_region
          %s3437 = sand.u32 %s105, 1
          %s3438 = sand.u32 %s105, 1
          %s3439 = smul.addr %s3438, 512
          %s3440 = scalar_lea.vmem [#allocation2], %s3439
        $region78: #{tpu_custom_call.1} parent=73 // pred_fallthru
          _
      $region74: #{tpu_custom_call.1} parent=5 // pred_fallthru
        _
    $region6: #{tpu_custom_call.1} parent=1 // loop_footer
      %s13 = sadd.s32 1, %s9
    $region7: #{tpu_custom_call.1} parent=1 // loop_footer_branch
      %8 = sbr.rel target = $region3
    $region8: #{tpu_custom_call.1} parent=1 // loop_exit
      _

</llo_original>
